<compile_context>
chip_gen: v7x
topology: tpu7x:2x2x1
jax: 0.10.0
libtpu: 0.0.40
codegen_flags: <defaults>
</compile_context>

<pallas_src>
import jax
import jax.numpy as jnp
from jax.experimental import pallas as pl
from jax.experimental.pallas import tpu as pltpu

# ---- small, module-consistent dimensions ------------------------------------
BS = 2          # batch
C = 4           # image channels
IMG = 16        # image spatial size
PATCH = 8       # patch size -> P = (16/8)^2 = 4 "pixels"
P = (IMG // PATCH) ** 2
F = C * PATCH * PATCH          # flattened patch dim = 256
E = 64          # img_encoder_dim (2048 in the real model)
D = 32          # embedding_dim   (512 in the real model)
H = 32          # hidden_dim      (512 in the real model)
A = 32          # attention dim
V = 128         # vocab_size
T = 8           # max_len (poem length)
ENC_W = 128     # lane-padded encoder output width (E + A = 96 -> 128)


# =============================================================================
# Single fused kernel:
#   encoder (patch proj + att-image proj) -> (h0, c0) -> T-step attention-LSTM
#   recurrence (fully unrolled, state in registers) -> one vocab projection.
# =============================================================================
def img2poem_kernel(patches_ref, w_enc_ref, b_enc_ref, pool_ref, bexp_ref,
                    w_init_ref, b_init_ref, emb_ref, w_emb_g_ref,
                    w_ah_ref, v_a_ref, w_ctx_g_ref, w_hh_g_ref, b_g_ref,
                    w_out_ref, b_out_ref, pred_ref):
    f32 = jnp.float32
    bf16 = jnp.bfloat16

    bs = pool_ref.shape[0]
    n_pix = bexp_ref.shape[0] // bs
    e_dim = w_ctx_g_ref.shape[0]
    a_dim = w_ah_ref.shape[1]
    h_dim = w_hh_g_ref.shape[0]
    n_steps = emb_ref.shape[0] // bs
    one_col = e_dim + a_dim          # column holding the constant 1.0

    pool = pool_ref[...]             # (bs, bs*P)   sum-within-batch
    bexp = bexp_ref[...]             # (bs*P, bs)   broadcast batch -> pixel rows

    # ---- encoder: one fused affine, lane-padded to 128 wide --------------------
    # columns: [ rep (E) | att_img (A) | 1.0 | zeros ]
    repatt = (jnp.dot(patches_ref[...].astype(bf16), w_enc_ref[...],
                      preferred_element_type=f32) + b_enc_ref[...])   # (bs*P, 128)
    rep = repatt[:, :e_dim]                                           # (bs*P, E)
    att_img = repatt[:, e_dim:e_dim + a_dim]                          # (bs*P, A)

    # ---- init hidden/cell state: mean-pool over pixels + fused init_h|init_c ---
    mean_rep = jnp.dot(pool, rep, preferred_element_type=f32) * (1.0 / n_pix)
    hc0 = (jnp.dot(mean_rep.astype(bf16), w_init_ref[...],
                   preferred_element_type=f32) + b_init_ref[...])     # (bs, 2H)
    h = hc0[:, :h_dim]
    c = hc0[:, h_dim:]

    # ---- hoisted embedding->gate contribution for ALL steps (+ gate bias) ------
    emb_gates = (jnp.dot(emb_ref[...].astype(bf16), w_emb_g_ref[...],
                         preferred_element_type=f32) + b_g_ref[...])  # (T*bs, 4H)

    w_ah = w_ah_ref[...]            # (H, A)
    v_a = v_a_ref[...]              # (1, A)
    w_ctx_g = w_ctx_g_ref[...]      # (E, 4H) bf16
    w_hh_g = w_hh_g_ref[...]        # (H, 4H) bf16

    hs = []
    for t in range(n_steps):        # static, fully unrolled (T = 8)
        # --- additive attention over image pixels (all-2D, no reshapes) ---
        att_h = jnp.dot(h, w_ah, preferred_element_type=f32)              # (bs, A)
        att_full = jnp.tanh(att_img + jnp.dot(bexp, att_h,
                                              preferred_element_type=f32))
        scores = jnp.sum(att_full * v_a, axis=-1, keepdims=True)          # (bs*P, 1)
        # scores are tanh-bounded (|s| <= sum|v_att|): skip max-subtraction.
        ex = jnp.exp(scores)
        # one matmul yields both numerator (rep columns) and denominator
        # (the constant-1 column) of the attention-weighted context.
        numden = jnp.dot(pool, ex * repatt, preferred_element_type=f32)   # (bs, 128)
        context = (numden[:, :e_dim] *
                   pl.reciprocal(numden[:, one_col:one_col + 1], approx=True))

        # --- fused-gate LSTM cell, gate columns ordered [i | f | o | g] ---
        gates = (emb_gates[t * bs:(t + 1) * bs, :]
                 + jnp.dot(context.astype(bf16), w_ctx_g,
                           preferred_element_type=f32)
                 + jnp.dot(h.astype(bf16), w_hh_g,
                           preferred_element_type=f32))                   # (bs, 4H)
        sig = jax.nn.sigmoid(gates[:, :3 * h_dim])    # i, f, o in one EUP pass
        g_g = jnp.tanh(gates[:, 3 * h_dim:])          # g in one EUP pass
        i_g = sig[:, :h_dim]
        f_g = sig[:, h_dim:2 * h_dim]
        o_g = sig[:, 2 * h_dim:3 * h_dim]
        c = f_g * c + i_g * g_g
        h = o_g * jnp.tanh(c)
        hs.append(h)

    # ---- single lane/sublane-dense vocab projection over all steps -------------
    h_all = jnp.concatenate(hs, axis=0)                                   # (T*bs, H)
    pred_ref[...] = (jnp.dot(h_all.astype(bf16), w_out_ref[...],
                             preferred_element_type=f32) + b_out_ref[...])


def img2poem_fused(patches, w_enc, b_enc, pool, bexp, w_init, b_init,
                   emb_all, w_emb_g, w_ah, v_a, w_ctx_g, w_hh_g, b_g,
                   w_out, b_out):
    args = (patches, w_enc, b_enc, pool, bexp, w_init, b_init, emb_all,
            w_emb_g, w_ah, v_a, w_ctx_g, w_hh_g, b_g, w_out, b_out)
    tb = emb_all.shape[0]
    vocab = w_out.shape[1]

    def spec2d(a):
        return pl.BlockSpec(a.shape, lambda i: (0, 0))

    return pl.pallas_call(
        img2poem_kernel,
        out_shape=jax.ShapeDtypeStruct((tb, vocab), jnp.float32),
        grid=(1,),
        in_specs=[spec2d(a) for a in args],
        out_specs=pl.BlockSpec((tb, vocab), lambda i: (0, 0)),
        compiler_params=pltpu.CompilerParams(
            dimension_semantics=("arbitrary",)),
    )(*args)


# =============================================================================
# Full forward (using_kws=False):  img -> fused encoder/decoder kernel
# =============================================================================
def img2poem_forward(img, poem, params):
    bs = img.shape[0]
    max_len = poem.shape[1]
    bf16 = jnp.bfloat16

    # --- glue: patchify NCHW image -> (bs*P, F) ---
    patches = img.reshape(bs, C, IMG // PATCH, PATCH, IMG // PATCH, PATCH)
    patches = patches.transpose(0, 2, 4, 1, 3, 5).reshape(bs * P, F)

    # --- exact affine fusions; lane-pad encoder output to 128 columns.
    #     column layout: [rep (E) | att_img (A) | 1.0 | zeros]
    pad = ENC_W - (E + A)
    w_enc = jnp.concatenate(
        [params['w_proj'],
         params['w_proj'] @ params['w_att_img'],
         jnp.zeros((F, pad), jnp.float32)], axis=1).astype(bf16)
    b_pad = jnp.zeros((1, pad), jnp.float32).at[0, 0].set(1.0)
    b_enc = jnp.concatenate(
        [params['b_proj'],
         params['b_proj'] @ params['w_att_img'],
         b_pad], axis=1)

    # batch grouping constants (sum-within-batch / broadcast-to-pixel-rows)
    pool = jnp.kron(jnp.eye(bs, dtype=jnp.float32),
                    jnp.ones((1, P), jnp.float32))        # (bs, bs*P)
    bexp = jnp.kron(jnp.eye(bs, dtype=jnp.float32),
                    jnp.ones((P, 1), jnp.float32))        # (bs*P, bs)

    w_init = jnp.concatenate([params['w_init_h'], params['w_init_c']],
                             axis=1).astype(bf16)
    b_init = jnp.concatenate([params['b_init_h'], params['b_init_c']], axis=1)

    # gate column reorder: stored (PyTorch-style) order (i, f, g, o) -> (i, f, o, g)
    def reorder(w):
        return jnp.concatenate(
            [w[:, 0 * H:2 * H], w[:, 3 * H:4 * H], w[:, 2 * H:3 * H]], axis=1)

    w_emb_g = reorder(params['w_ih_emb']).astype(bf16)
    w_ctx_g = reorder(params['w_ih_ctx']).astype(bf16)
    w_hh_g = reorder(params['w_hh']).astype(bf16)
    b_g = reorder(params['b_lstm'])

    # --- glue: embedding gather (nn.Embedding), flattened to (T*bs, D) so the
    #     gate contribution is ONE matmul inside the kernel ---
    emb = params['embedding'][poem]                       # (bs, T, D)
    emb_all = jnp.transpose(emb, (1, 0, 2)).reshape(max_len * bs, D)
    # note: nn.Dropout(0.3) is unused on the using_kws=False forward path.

    w_out = params['w_out'].astype(bf16)

    preds = img2poem_fused(patches, w_enc, b_enc, pool, bexp, w_init, b_init,
                           emb_all, w_emb_g,
                           params['w_att_h'], params['v_att'],
                           w_ctx_g, w_hh_g, b_g, w_out, params['b_out'])
    vocab = params['w_out'].shape[1]
    return preds.reshape(max_len, bs, vocab).transpose(1, 0, 2)   # (bs, T, V)


def init_params(key):
    ks = jax.random.split(key, 16)
    n = lambda k, shape, s=0.05: (s * jax.random.normal(k, shape)).astype(jnp.float32)
    return {
        'w_proj':    n(ks[0], (F, E)),
        'b_proj':    jnp.zeros((1, E), jnp.float32),
        'w_att_img': n(ks[1], (E, A)),
        'w_att_h':   n(ks[2], (H, A)),
        'v_att':     n(ks[3], (1, A)),
        'w_init_h':  n(ks[4], (E, H)),
        'b_init_h':  jnp.zeros((1, H), jnp.float32),
        'w_init_c':  n(ks[5], (E, H)),
        'b_init_c':  jnp.zeros((1, H), jnp.float32),
        'w_ih_emb':  n(ks[6], (D, 4 * H)),     # gate columns stored i, f, g, o
        'w_ih_ctx':  n(ks[7], (E, 4 * H)),
        'w_hh':      n(ks[8], (H, 4 * H)),
        'b_lstm':    jnp.zeros((1, 4 * H), jnp.float32),
        'w_out':     n(ks[9], (H, V)),
        'b_out':     jnp.zeros((1, V), jnp.float32),
        'embedding': n(ks[10], (V, D), 0.1),
    }


if __name__ == "__main__":
    key = jax.random.PRNGKey(0)
    k_img, k_poem, k_par = jax.random.split(key, 3)
    img = jax.random.normal(k_img, (BS, C, IMG, IMG), jnp.float32)
    poem = jax.random.randint(k_poem, (BS, T), 0, V, jnp.int32)
    params = init_params(k_par)

    out = jax.jit(img2poem_forward)(img, poem, params)
    out = jax.block_until_ready(out)
    assert out.shape == (BS, T, V), out.shape
    assert bool(jnp.all(jnp.isfinite(out)))
    print("KERNEL_OK")
</pallas_src>

<mosaic_0001>
module attributes {stable_mosaic.version = 11 : i64} {
  func.func @img2poem_kernel(%arg0: i32, %arg1: memref<8x256xf32, #tpu.memory_space<vmem>>, %arg2: memref<256x128xbf16, #tpu.memory_space<vmem>>, %arg3: memref<1x128xf32, #tpu.memory_space<vmem>>, %arg4: memref<2x8xf32, #tpu.memory_space<vmem>>, %arg5: memref<8x2xf32, #tpu.memory_space<vmem>>, %arg6: memref<64x64xbf16, #tpu.memory_space<vmem>>, %arg7: memref<1x64xf32, #tpu.memory_space<vmem>>, %arg8: memref<16x32xf32, #tpu.memory_space<vmem>>, %arg9: memref<32x128xbf16, #tpu.memory_space<vmem>>, %arg10: memref<32x32xf32, #tpu.memory_space<vmem>>, %arg11: memref<1x32xf32, #tpu.memory_space<vmem>>, %arg12: memref<64x128xbf16, #tpu.memory_space<vmem>>, %arg13: memref<32x128xbf16, #tpu.memory_space<vmem>>, %arg14: memref<1x128xf32, #tpu.memory_space<vmem>>, %arg15: memref<32x128xbf16, #tpu.memory_space<vmem>>, %arg16: memref<1x128xf32, #tpu.memory_space<vmem>>, %arg17: memref<16x128xf32, #tpu.memory_space<vmem>>) attributes {dimension_semantics = [#tpu.dimension_semantics<arbitrary>], iteration_bounds = array<i64: 1>, scalar_prefetch = 0 : i64, scratch_operands = 0 : i64, tpu.core_type = #tpu.core_type<tc>, window_params = [{pipeline_mode = #tpu.pipeline_mode<synchronous>, transform_indices = @transform_0, window_bounds = array<i64: 8, 256>}, {pipeline_mode = #tpu.pipeline_mode<synchronous>, transform_indices = @transform_1, window_bounds = array<i64: 256, 128>}, {pipeline_mode = #tpu.pipeline_mode<synchronous>, transform_indices = @transform_2, window_bounds = array<i64: 1, 128>}, {pipeline_mode = #tpu.pipeline_mode<synchronous>, transform_indices = @transform_3, window_bounds = array<i64: 2, 8>}, {pipeline_mode = #tpu.pipeline_mode<synchronous>, transform_indices = @transform_4, window_bounds = array<i64: 8, 2>}, {pipeline_mode = #tpu.pipeline_mode<synchronous>, transform_indices = @transform_5, window_bounds = array<i64: 64, 64>}, {pipeline_mode = #tpu.pipeline_mode<synchronous>, transform_indices = @transform_6, window_bounds = array<i64: 1, 64>}, {pipeline_mode = #tpu.pipeline_mode<synchronous>, transform_indices = @transform_7, window_bounds = array<i64: 16, 32>}, {pipeline_mode = #tpu.pipeline_mode<synchronous>, transform_indices = @transform_8, window_bounds = array<i64: 32, 128>}, {pipeline_mode = #tpu.pipeline_mode<synchronous>, transform_indices = @transform_9, window_bounds = array<i64: 32, 32>}, {pipeline_mode = #tpu.pipeline_mode<synchronous>, transform_indices = @transform_10, window_bounds = array<i64: 1, 32>}, {pipeline_mode = #tpu.pipeline_mode<synchronous>, transform_indices = @transform_11, window_bounds = array<i64: 64, 128>}, {pipeline_mode = #tpu.pipeline_mode<synchronous>, transform_indices = @transform_12, window_bounds = array<i64: 32, 128>}, {pipeline_mode = #tpu.pipeline_mode<synchronous>, transform_indices = @transform_13, window_bounds = array<i64: 1, 128>}, {pipeline_mode = #tpu.pipeline_mode<synchronous>, transform_indices = @transform_14, window_bounds = array<i64: 32, 128>}, {pipeline_mode = #tpu.pipeline_mode<synchronous>, transform_indices = @transform_15, window_bounds = array<i64: 1, 128>}, {pipeline_mode = #tpu.pipeline_mode<synchronous>, transform_indices = @transform_16, window_bounds = array<i64: 16, 128>}]} {
    %c0 = arith.constant 0 : index
    %c0_0 = arith.constant 0 : index
    %0 = vector.load %arg4[%c0, %c0_0] : memref<2x8xf32, #tpu.memory_space<vmem>>, vector<2x8xf32>
    %c0_1 = arith.constant 0 : index
    %c0_2 = arith.constant 0 : index
    %1 = vector.load %arg5[%c0_1, %c0_2] : memref<8x2xf32, #tpu.memory_space<vmem>>, vector<8x2xf32>
    %c0_3 = arith.constant 0 : index
    %c0_4 = arith.constant 0 : index
    %2 = vector.load %arg1[%c0_3, %c0_4] : memref<8x256xf32, #tpu.memory_space<vmem>>, vector<8x256xf32>
    %3 = arith.truncf %2 : vector<8x256xf32> to vector<8x256xbf16>
    %c0_5 = arith.constant 0 : index
    %c0_6 = arith.constant 0 : index
    %4 = vector.load %arg2[%c0_5, %c0_6] : memref<256x128xbf16, #tpu.memory_space<vmem>>, vector<256x128xbf16>
    %cst = arith.constant dense<0.000000e+00> : vector<8x128xf32>
    %5 = tpu.matmul %3, %4, %cst {dimension_numbers = #tpu.dot_dimension_numbers<[1], [0], [0], [1], [0, 0, 1, 1], [], []>} : vector<8x256xbf16>, vector<256x128xbf16>, vector<8x128xf32> -> vector<8x128xf32>
    %c0_7 = arith.constant 0 : index
    %c0_8 = arith.constant 0 : index
    %6 = vector.load %arg3[%c0_7, %c0_8] : memref<1x128xf32, #tpu.memory_space<vmem>>, vector<1x128xf32>
    %7 = vector.broadcast %6 : vector<1x128xf32> to vector<8x128xf32>
    %8 = arith.addf %5, %7 : vector<8x128xf32>
    %9 = vector.extract_strided_slice %8 {offsets = [0, 0], sizes = [8, 64], strides = [1, 1]} : vector<8x128xf32> to vector<8x64xf32>
    %10 = vector.extract_strided_slice %8 {offsets = [0, 64], sizes = [8, 32], strides = [1, 1]} : vector<8x128xf32> to vector<8x32xf32>
    %cst_9 = arith.constant dense<0.000000e+00> : vector<2x64xf32>
    %11 = tpu.matmul %0, %9, %cst_9 {dimension_numbers = #tpu.dot_dimension_numbers<[1], [0], [0], [1], [0, 0, 1, 1], [], []>} : vector<2x8xf32>, vector<8x64xf32>, vector<2x64xf32> -> vector<2x64xf32>
    %cst_10 = arith.constant 2.500000e-01 : f32
    %12 = vector.broadcast %cst_10 : f32 to vector<2x64xf32>
    %13 = arith.mulf %11, %12 : vector<2x64xf32>
    %14 = arith.truncf %13 : vector<2x64xf32> to vector<2x64xbf16>
    %c0_11 = arith.constant 0 : index
    %c0_12 = arith.constant 0 : index
    %15 = vector.load %arg6[%c0_11, %c0_12] : memref<64x64xbf16, #tpu.memory_space<vmem>>, vector<64x64xbf16>
    %cst_13 = arith.constant dense<0.000000e+00> : vector<2x64xf32>
    %16 = tpu.matmul %14, %15, %cst_13 {dimension_numbers = #tpu.dot_dimension_numbers<[1], [0], [0], [1], [0, 0, 1, 1], [], []>} : vector<2x64xbf16>, vector<64x64xbf16>, vector<2x64xf32> -> vector<2x64xf32>
    %c0_14 = arith.constant 0 : index
    %c0_15 = arith.constant 0 : index
    %17 = vector.load %arg7[%c0_14, %c0_15] : memref<1x64xf32, #tpu.memory_space<vmem>>, vector<1x64xf32>
    %18 = vector.broadcast %17 : vector<1x64xf32> to vector<2x64xf32>
    %19 = arith.addf %16, %18 : vector<2x64xf32>
    %20 = vector.extract_strided_slice %19 {offsets = [0, 0], sizes = [2, 32], strides = [1, 1]} : vector<2x64xf32> to vector<2x32xf32>
    %21 = vector.extract_strided_slice %19 {offsets = [0, 32], sizes = [2, 32], strides = [1, 1]} : vector<2x64xf32> to vector<2x32xf32>
    %c0_16 = arith.constant 0 : index
    %c0_17 = arith.constant 0 : index
    %22 = vector.load %arg8[%c0_16, %c0_17] : memref<16x32xf32, #tpu.memory_space<vmem>>, vector<16x32xf32>
    %23 = arith.truncf %22 : vector<16x32xf32> to vector<16x32xbf16>
    %c0_18 = arith.constant 0 : index
    %c0_19 = arith.constant 0 : index
    %24 = vector.load %arg9[%c0_18, %c0_19] : memref<32x128xbf16, #tpu.memory_space<vmem>>, vector<32x128xbf16>
    %cst_20 = arith.constant dense<0.000000e+00> : vector<16x128xf32>
    %25 = tpu.matmul %23, %24, %cst_20 {dimension_numbers = #tpu.dot_dimension_numbers<[1], [0], [0], [1], [0, 0, 1, 1], [], []>} : vector<16x32xbf16>, vector<32x128xbf16>, vector<16x128xf32> -> vector<16x128xf32>
    %c0_21 = arith.constant 0 : index
    %c0_22 = arith.constant 0 : index
    %26 = vector.load %arg14[%c0_21, %c0_22] : memref<1x128xf32, #tpu.memory_space<vmem>>, vector<1x128xf32>
    %27 = vector.broadcast %26 : vector<1x128xf32> to vector<16x128xf32>
    %28 = arith.addf %25, %27 : vector<16x128xf32>
    %c0_23 = arith.constant 0 : index
    %c0_24 = arith.constant 0 : index
    %29 = vector.load %arg10[%c0_23, %c0_24] : memref<32x32xf32, #tpu.memory_space<vmem>>, vector<32x32xf32>
    %c0_25 = arith.constant 0 : index
    %c0_26 = arith.constant 0 : index
    %30 = vector.load %arg11[%c0_25, %c0_26] : memref<1x32xf32, #tpu.memory_space<vmem>>, vector<1x32xf32>
    %c0_27 = arith.constant 0 : index
    %c0_28 = arith.constant 0 : index
    %31 = vector.load %arg12[%c0_27, %c0_28] : memref<64x128xbf16, #tpu.memory_space<vmem>>, vector<64x128xbf16>
    %c0_29 = arith.constant 0 : index
    %c0_30 = arith.constant 0 : index
    %32 = vector.load %arg13[%c0_29, %c0_30] : memref<32x128xbf16, #tpu.memory_space<vmem>>, vector<32x128xbf16>
    %cst_31 = arith.constant dense<0.000000e+00> : vector<2x32xf32>
    %33 = tpu.matmul %20, %29, %cst_31 {dimension_numbers = #tpu.dot_dimension_numbers<[1], [0], [0], [1], [0, 0, 1, 1], [], []>} : vector<2x32xf32>, vector<32x32xf32>, vector<2x32xf32> -> vector<2x32xf32>
    %cst_32 = arith.constant dense<0.000000e+00> : vector<8x32xf32>
    %34 = tpu.matmul %1, %33, %cst_32 {dimension_numbers = #tpu.dot_dimension_numbers<[1], [0], [0], [1], [0, 0, 1, 1], [], []>} : vector<8x2xf32>, vector<2x32xf32>, vector<8x32xf32> -> vector<8x32xf32>
    %35 = arith.addf %10, %34 : vector<8x32xf32>
    %36 = math.tanh %35 : vector<8x32xf32>
    %37 = vector.broadcast %30 : vector<1x32xf32> to vector<8x32xf32>
    %38 = arith.mulf %36, %37 : vector<8x32xf32>
    %cst_33 = arith.constant dense<0.000000e+00> : vector<8xf32>
    %39 = vector.multi_reduction <add>, %38, %cst_33 [1] : vector<8x32xf32> to vector<8xf32>
    %40 = vector.shape_cast %39 : vector<8xf32> to vector<8x1xf32>
    %41 = math.exp %40 : vector<8x1xf32>
    %42 = vector.broadcast %41 : vector<8x1xf32> to vector<8x128xf32>
    %43 = arith.mulf %42, %8 : vector<8x128xf32>
    %cst_34 = arith.constant dense<0.000000e+00> : vector<2x128xf32>
    %44 = tpu.matmul %0, %43, %cst_34 {dimension_numbers = #tpu.dot_dimension_numbers<[1], [0], [0], [1], [0, 0, 1, 1], [], []>} : vector<2x8xf32>, vector<8x128xf32>, vector<2x128xf32> -> vector<2x128xf32>
    %45 = vector.extract_strided_slice %44 {offsets = [0, 0], sizes = [2, 64], strides = [1, 1]} : vector<2x128xf32> to vector<2x64xf32>
    %46 = vector.extract_strided_slice %44 {offsets = [0, 96], sizes = [2, 1], strides = [1, 1]} : vector<2x128xf32> to vector<2x1xf32>
    %47 = tpu.reciprocal %46 {approx = true} : vector<2x1xf32> -> vector<2x1xf32>
    %48 = vector.broadcast %47 : vector<2x1xf32> to vector<2x64xf32>
    %49 = arith.mulf %45, %48 : vector<2x64xf32>
    %50 = vector.extract_strided_slice %28 {offsets = [0, 0], sizes = [2, 128], strides = [1, 1]} : vector<16x128xf32> to vector<2x128xf32>
    %51 = arith.truncf %49 : vector<2x64xf32> to vector<2x64xbf16>
    %cst_35 = arith.constant dense<0.000000e+00> : vector<2x128xf32>
    %52 = tpu.matmul %51, %31, %cst_35 {dimension_numbers = #tpu.dot_dimension_numbers<[1], [0], [0], [1], [0, 0, 1, 1], [], []>} : vector<2x64xbf16>, vector<64x128xbf16>, vector<2x128xf32> -> vector<2x128xf32>
    %53 = arith.addf %50, %52 : vector<2x128xf32>
    %54 = arith.truncf %20 : vector<2x32xf32> to vector<2x32xbf16>
    %cst_36 = arith.constant dense<0.000000e+00> : vector<2x128xf32>
    %55 = tpu.matmul %54, %32, %cst_36 {dimension_numbers = #tpu.dot_dimension_numbers<[1], [0], [0], [1], [0, 0, 1, 1], [], []>} : vector<2x32xbf16>, vector<32x128xbf16>, vector<2x128xf32> -> vector<2x128xf32>
    %56 = arith.addf %53, %55 : vector<2x128xf32>
    %57 = vector.extract_strided_slice %56 {offsets = [0, 0], sizes = [2, 96], strides = [1, 1]} : vector<2x128xf32> to vector<2x96xf32>
    %58 = arith.negf %57 : vector<2x96xf32>
    %59 = math.exp %58 : vector<2x96xf32>
    %cst_37 = arith.constant 1.000000e+00 : f32
    %60 = vector.broadcast %cst_37 : f32 to vector<2x96xf32>
    %61 = arith.addf %60, %59 : vector<2x96xf32>
    %62 = arith.divf %60, %61 : vector<2x96xf32>
    %63 = vector.extract_strided_slice %56 {offsets = [0, 96], sizes = [2, 32], strides = [1, 1]} : vector<2x128xf32> to vector<2x32xf32>
    %64 = math.tanh %63 : vector<2x32xf32>
    %65 = vector.extract_strided_slice %62 {offsets = [0, 0], sizes = [2, 32], strides = [1, 1]} : vector<2x96xf32> to vector<2x32xf32>
    %66 = vector.extract_strided_slice %62 {offsets = [0, 32], sizes = [2, 32], strides = [1, 1]} : vector<2x96xf32> to vector<2x32xf32>
    %67 = vector.extract_strided_slice %62 {offsets = [0, 64], sizes = [2, 32], strides = [1, 1]} : vector<2x96xf32> to vector<2x32xf32>
    %68 = arith.mulf %66, %21 : vector<2x32xf32>
    %69 = arith.mulf %65, %64 : vector<2x32xf32>
    %70 = arith.addf %68, %69 : vector<2x32xf32>
    %71 = math.tanh %70 : vector<2x32xf32>
    %72 = arith.mulf %67, %71 : vector<2x32xf32>
    %cst_38 = arith.constant dense<0.000000e+00> : vector<2x32xf32>
    %73 = tpu.matmul %72, %29, %cst_38 {dimension_numbers = #tpu.dot_dimension_numbers<[1], [0], [0], [1], [0, 0, 1, 1], [], []>} : vector<2x32xf32>, vector<32x32xf32>, vector<2x32xf32> -> vector<2x32xf32>
    %cst_39 = arith.constant dense<0.000000e+00> : vector<8x32xf32>
    %74 = tpu.matmul %1, %73, %cst_39 {dimension_numbers = #tpu.dot_dimension_numbers<[1], [0], [0], [1], [0, 0, 1, 1], [], []>} : vector<8x2xf32>, vector<2x32xf32>, vector<8x32xf32> -> vector<8x32xf32>
    %75 = arith.addf %10, %74 : vector<8x32xf32>
    %76 = math.tanh %75 : vector<8x32xf32>
    %77 = vector.broadcast %30 : vector<1x32xf32> to vector<8x32xf32>
    %78 = arith.mulf %76, %77 : vector<8x32xf32>
    %cst_40 = arith.constant dense<0.000000e+00> : vector<8xf32>
    %79 = vector.multi_reduction <add>, %78, %cst_40 [1] : vector<8x32xf32> to vector<8xf32>
    %80 = vector.shape_cast %79 : vector<8xf32> to vector<8x1xf32>
    %81 = math.exp %80 : vector<8x1xf32>
    %82 = vector.broadcast %81 : vector<8x1xf32> to vector<8x128xf32>
    %83 = arith.mulf %82, %8 : vector<8x128xf32>
    %cst_41 = arith.constant dense<0.000000e+00> : vector<2x128xf32>
    %84 = tpu.matmul %0, %83, %cst_41 {dimension_numbers = #tpu.dot_dimension_numbers<[1], [0], [0], [1], [0, 0, 1, 1], [], []>} : vector<2x8xf32>, vector<8x128xf32>, vector<2x128xf32> -> vector<2x128xf32>
    %85 = vector.extract_strided_slice %84 {offsets = [0, 0], sizes = [2, 64], strides = [1, 1]} : vector<2x128xf32> to vector<2x64xf32>
    %86 = vector.extract_strided_slice %84 {offsets = [0, 96], sizes = [2, 1], strides = [1, 1]} : vector<2x128xf32> to vector<2x1xf32>
    %87 = tpu.reciprocal %86 {approx = true} : vector<2x1xf32> -> vector<2x1xf32>
    %88 = vector.broadcast %87 : vector<2x1xf32> to vector<2x64xf32>
    %89 = arith.mulf %85, %88 : vector<2x64xf32>
    %90 = vector.extract_strided_slice %28 {offsets = [2, 0], sizes = [2, 128], strides = [1, 1]} : vector<16x128xf32> to vector<2x128xf32>
    %91 = arith.truncf %89 : vector<2x64xf32> to vector<2x64xbf16>
    %cst_42 = arith.constant dense<0.000000e+00> : vector<2x128xf32>
    %92 = tpu.matmul %91, %31, %cst_42 {dimension_numbers = #tpu.dot_dimension_numbers<[1], [0], [0], [1], [0, 0, 1, 1], [], []>} : vector<2x64xbf16>, vector<64x128xbf16>, vector<2x128xf32> -> vector<2x128xf32>
    %93 = arith.addf %90, %92 : vector<2x128xf32>
    %94 = arith.truncf %72 : vector<2x32xf32> to vector<2x32xbf16>
    %cst_43 = arith.constant dense<0.000000e+00> : vector<2x128xf32>
    %95 = tpu.matmul %94, %32, %cst_43 {dimension_numbers = #tpu.dot_dimension_numbers<[1], [0], [0], [1], [0, 0, 1, 1], [], []>} : vector<2x32xbf16>, vector<32x128xbf16>, vector<2x128xf32> -> vector<2x128xf32>
    %96 = arith.addf %93, %95 : vector<2x128xf32>
    %97 = vector.extract_strided_slice %96 {offsets = [0, 0], sizes = [2, 96], strides = [1, 1]} : vector<2x128xf32> to vector<2x96xf32>
    %98 = arith.negf %97 : vector<2x96xf32>
    %99 = math.exp %98 : vector<2x96xf32>
    %cst_44 = arith.constant 1.000000e+00 : f32
    %100 = vector.broadcast %cst_44 : f32 to vector<2x96xf32>
    %101 = arith.addf %100, %99 : vector<2x96xf32>
    %102 = arith.divf %100, %101 : vector<2x96xf32>
    %103 = vector.extract_strided_slice %96 {offsets = [0, 96], sizes = [2, 32], strides = [1, 1]} : vector<2x128xf32> to vector<2x32xf32>
    %104 = math.tanh %103 : vector<2x32xf32>
    %105 = vector.extract_strided_slice %102 {offsets = [0, 0], sizes = [2, 32], strides = [1, 1]} : vector<2x96xf32> to vector<2x32xf32>
    %106 = vector.extract_strided_slice %102 {offsets = [0, 32], sizes = [2, 32], strides = [1, 1]} : vector<2x96xf32> to vector<2x32xf32>
    %107 = vector.extract_strided_slice %102 {offsets = [0, 64], sizes = [2, 32], strides = [1, 1]} : vector<2x96xf32> to vector<2x32xf32>
    %108 = arith.mulf %106, %70 : vector<2x32xf32>
    %109 = arith.mulf %105, %104 : vector<2x32xf32>
    %110 = arith.addf %108, %109 : vector<2x32xf32>
    %111 = math.tanh %110 : vector<2x32xf32>
    %112 = arith.mulf %107, %111 : vector<2x32xf32>
    %cst_45 = arith.constant dense<0.000000e+00> : vector<2x32xf32>
    %113 = tpu.matmul %112, %29, %cst_45 {dimension_numbers = #tpu.dot_dimension_numbers<[1], [0], [0], [1], [0, 0, 1, 1], [], []>} : vector<2x32xf32>, vector<32x32xf32>, vector<2x32xf32> -> vector<2x32xf32>
    %cst_46 = arith.constant dense<0.000000e+00> : vector<8x32xf32>
    %114 = tpu.matmul %1, %113, %cst_46 {dimension_numbers = #tpu.dot_dimension_numbers<[1], [0], [0], [1], [0, 0, 1, 1], [], []>} : vector<8x2xf32>, vector<2x32xf32>, vector<8x32xf32> -> vector<8x32xf32>
    %115 = arith.addf %10, %114 : vector<8x32xf32>
    %116 = math.tanh %115 : vector<8x32xf32>
    %117 = vector.broadcast %30 : vector<1x32xf32> to vector<8x32xf32>
    %118 = arith.mulf %116, %117 : vector<8x32xf32>
    %cst_47 = arith.constant dense<0.000000e+00> : vector<8xf32>
    %119 = vector.multi_reduction <add>, %118, %cst_47 [1] : vector<8x32xf32> to vector<8xf32>
    %120 = vector.shape_cast %119 : vector<8xf32> to vector<8x1xf32>
    %121 = math.exp %120 : vector<8x1xf32>
    %122 = vector.broadcast %121 : vector<8x1xf32> to vector<8x128xf32>
    %123 = arith.mulf %122, %8 : vector<8x128xf32>
    %cst_48 = arith.constant dense<0.000000e+00> : vector<2x128xf32>
    %124 = tpu.matmul %0, %123, %cst_48 {dimension_numbers = #tpu.dot_dimension_numbers<[1], [0], [0], [1], [0, 0, 1, 1], [], []>} : vector<2x8xf32>, vector<8x128xf32>, vector<2x128xf32> -> vector<2x128xf32>
    %125 = vector.extract_strided_slice %124 {offsets = [0, 0], sizes = [2, 64], strides = [1, 1]} : vector<2x128xf32> to vector<2x64xf32>
    %126 = vector.extract_strided_slice %124 {offsets = [0, 96], sizes = [2, 1], strides = [1, 1]} : vector<2x128xf32> to vector<2x1xf32>
    %127 = tpu.reciprocal %126 {approx = true} : vector<2x1xf32> -> vector<2x1xf32>
    %128 = vector.broadcast %127 : vector<2x1xf32> to vector<2x64xf32>
    %129 = arith.mulf %125, %128 : vector<2x64xf32>
    %130 = vector.extract_strided_slice %28 {offsets = [4, 0], sizes = [2, 128], strides = [1, 1]} : vector<16x128xf32> to vector<2x128xf32>
    %131 = arith.truncf %129 : vector<2x64xf32> to vector<2x64xbf16>
    %cst_49 = arith.constant dense<0.000000e+00> : vector<2x128xf32>
    %132 = tpu.matmul %131, %31, %cst_49 {dimension_numbers = #tpu.dot_dimension_numbers<[1], [0], [0], [1], [0, 0, 1, 1], [], []>} : vector<2x64xbf16>, vector<64x128xbf16>, vector<2x128xf32> -> vector<2x128xf32>
    %133 = arith.addf %130, %132 : vector<2x128xf32>
    %134 = arith.truncf %112 : vector<2x32xf32> to vector<2x32xbf16>
    %cst_50 = arith.constant dense<0.000000e+00> : vector<2x128xf32>
    %135 = tpu.matmul %134, %32, %cst_50 {dimension_numbers = #tpu.dot_dimension_numbers<[1], [0], [0], [1], [0, 0, 1, 1], [], []>} : vector<2x32xbf16>, vector<32x128xbf16>, vector<2x128xf32> -> vector<2x128xf32>
    %136 = arith.addf %133, %135 : vector<2x128xf32>
    %137 = vector.extract_strided_slice %136 {offsets = [0, 0], sizes = [2, 96], strides = [1, 1]} : vector<2x128xf32> to vector<2x96xf32>
    %138 = arith.negf %137 : vector<2x96xf32>
    %139 = math.exp %138 : vector<2x96xf32>
    %cst_51 = arith.constant 1.000000e+00 : f32
    %140 = vector.broadcast %cst_51 : f32 to vector<2x96xf32>
    %141 = arith.addf %140, %139 : vector<2x96xf32>
    %142 = arith.divf %140, %141 : vector<2x96xf32>
    %143 = vector.extract_strided_slice %136 {offsets = [0, 96], sizes = [2, 32], strides = [1, 1]} : vector<2x128xf32> to vector<2x32xf32>
    %144 = math.tanh %143 : vector<2x32xf32>
    %145 = vector.extract_strided_slice %142 {offsets = [0, 0], sizes = [2, 32], strides = [1, 1]} : vector<2x96xf32> to vector<2x32xf32>
    %146 = vector.extract_strided_slice %142 {offsets = [0, 32], sizes = [2, 32], strides = [1, 1]} : vector<2x96xf32> to vector<2x32xf32>
    %147 = vector.extract_strided_slice %142 {offsets = [0, 64], sizes = [2, 32], strides = [1, 1]} : vector<2x96xf32> to vector<2x32xf32>
    %148 = arith.mulf %146, %110 : vector<2x32xf32>
    %149 = arith.mulf %145, %144 : vector<2x32xf32>
    %150 = arith.addf %148, %149 : vector<2x32xf32>
    %151 = math.tanh %150 : vector<2x32xf32>
    %152 = arith.mulf %147, %151 : vector<2x32xf32>
    %cst_52 = arith.constant dense<0.000000e+00> : vector<2x32xf32>
    %153 = tpu.matmul %152, %29, %cst_52 {dimension_numbers = #tpu.dot_dimension_numbers<[1], [0], [0], [1], [0, 0, 1, 1], [], []>} : vector<2x32xf32>, vector<32x32xf32>, vector<2x32xf32> -> vector<2x32xf32>
    %cst_53 = arith.constant dense<0.000000e+00> : vector<8x32xf32>
    %154 = tpu.matmul %1, %153, %cst_53 {dimension_numbers = #tpu.dot_dimension_numbers<[1], [0], [0], [1], [0, 0, 1, 1], [], []>} : vector<8x2xf32>, vector<2x32xf32>, vector<8x32xf32> -> vector<8x32xf32>
    %155 = arith.addf %10, %154 : vector<8x32xf32>
    %156 = math.tanh %155 : vector<8x32xf32>
    %157 = vector.broadcast %30 : vector<1x32xf32> to vector<8x32xf32>
    %158 = arith.mulf %156, %157 : vector<8x32xf32>
    %cst_54 = arith.constant dense<0.000000e+00> : vector<8xf32>
    %159 = vector.multi_reduction <add>, %158, %cst_54 [1] : vector<8x32xf32> to vector<8xf32>
    %160 = vector.shape_cast %159 : vector<8xf32> to vector<8x1xf32>
    %161 = math.exp %160 : vector<8x1xf32>
    %162 = vector.broadcast %161 : vector<8x1xf32> to vector<8x128xf32>
    %163 = arith.mulf %162, %8 : vector<8x128xf32>
    %cst_55 = arith.constant dense<0.000000e+00> : vector<2x128xf32>
    %164 = tpu.matmul %0, %163, %cst_55 {dimension_numbers = #tpu.dot_dimension_numbers<[1], [0], [0], [1], [0, 0, 1, 1], [], []>} : vector<2x8xf32>, vector<8x128xf32>, vector<2x128xf32> -> vector<2x128xf32>
    %165 = vector.extract_strided_slice %164 {offsets = [0, 0], sizes = [2, 64], strides = [1, 1]} : vector<2x128xf32> to vector<2x64xf32>
    %166 = vector.extract_strided_slice %164 {offsets = [0, 96], sizes = [2, 1], strides = [1, 1]} : vector<2x128xf32> to vector<2x1xf32>
    %167 = tpu.reciprocal %166 {approx = true} : vector<2x1xf32> -> vector<2x1xf32>
    %168 = vector.broadcast %167 : vector<2x1xf32> to vector<2x64xf32>
    %169 = arith.mulf %165, %168 : vector<2x64xf32>
    %170 = vector.extract_strided_slice %28 {offsets = [6, 0], sizes = [2, 128], strides = [1, 1]} : vector<16x128xf32> to vector<2x128xf32>
    %171 = arith.truncf %169 : vector<2x64xf32> to vector<2x64xbf16>
    %cst_56 = arith.constant dense<0.000000e+00> : vector<2x128xf32>
    %172 = tpu.matmul %171, %31, %cst_56 {dimension_numbers = #tpu.dot_dimension_numbers<[1], [0], [0], [1], [0, 0, 1, 1], [], []>} : vector<2x64xbf16>, vector<64x128xbf16>, vector<2x128xf32> -> vector<2x128xf32>
    %173 = arith.addf %170, %172 : vector<2x128xf32>
    %174 = arith.truncf %152 : vector<2x32xf32> to vector<2x32xbf16>
    %cst_57 = arith.constant dense<0.000000e+00> : vector<2x128xf32>
    %175 = tpu.matmul %174, %32, %cst_57 {dimension_numbers = #tpu.dot_dimension_numbers<[1], [0], [0], [1], [0, 0, 1, 1], [], []>} : vector<2x32xbf16>, vector<32x128xbf16>, vector<2x128xf32> -> vector<2x128xf32>
    %176 = arith.addf %173, %175 : vector<2x128xf32>
    %177 = vector.extract_strided_slice %176 {offsets = [0, 0], sizes = [2, 96], strides = [1, 1]} : vector<2x128xf32> to vector<2x96xf32>
    %178 = arith.negf %177 : vector<2x96xf32>
    %179 = math.exp %178 : vector<2x96xf32>
    %cst_58 = arith.constant 1.000000e+00 : f32
    %180 = vector.broadcast %cst_58 : f32 to vector<2x96xf32>
    %181 = arith.addf %180, %179 : vector<2x96xf32>
    %182 = arith.divf %180, %181 : vector<2x96xf32>
    %183 = vector.extract_strided_slice %176 {offsets = [0, 96], sizes = [2, 32], strides = [1, 1]} : vector<2x128xf32> to vector<2x32xf32>
    %184 = math.tanh %183 : vector<2x32xf32>
    %185 = vector.extract_strided_slice %182 {offsets = [0, 0], sizes = [2, 32], strides = [1, 1]} : vector<2x96xf32> to vector<2x32xf32>
    %186 = vector.extract_strided_slice %182 {offsets = [0, 32], sizes = [2, 32], strides = [1, 1]} : vector<2x96xf32> to vector<2x32xf32>
    %187 = vector.extract_strided_slice %182 {offsets = [0, 64], sizes = [2, 32], strides = [1, 1]} : vector<2x96xf32> to vector<2x32xf32>
    %188 = arith.mulf %186, %150 : vector<2x32xf32>
    %189 = arith.mulf %185, %184 : vector<2x32xf32>
    %190 = arith.addf %188, %189 : vector<2x32xf32>
    %191 = math.tanh %190 : vector<2x32xf32>
    %192 = arith.mulf %187, %191 : vector<2x32xf32>
    %cst_59 = arith.constant dense<0.000000e+00> : vector<2x32xf32>
    %193 = tpu.matmul %192, %29, %cst_59 {dimension_numbers = #tpu.dot_dimension_numbers<[1], [0], [0], [1], [0, 0, 1, 1], [], []>} : vector<2x32xf32>, vector<32x32xf32>, vector<2x32xf32> -> vector<2x32xf32>
    %cst_60 = arith.constant dense<0.000000e+00> : vector<8x32xf32>
    %194 = tpu.matmul %1, %193, %cst_60 {dimension_numbers = #tpu.dot_dimension_numbers<[1], [0], [0], [1], [0, 0, 1, 1], [], []>} : vector<8x2xf32>, vector<2x32xf32>, vector<8x32xf32> -> vector<8x32xf32>
    %195 = arith.addf %10, %194 : vector<8x32xf32>
    %196 = math.tanh %195 : vector<8x32xf32>
    %197 = vector.broadcast %30 : vector<1x32xf32> to vector<8x32xf32>
    %198 = arith.mulf %196, %197 : vector<8x32xf32>
    %cst_61 = arith.constant dense<0.000000e+00> : vector<8xf32>
    %199 = vector.multi_reduction <add>, %198, %cst_61 [1] : vector<8x32xf32> to vector<8xf32>
    %200 = vector.shape_cast %199 : vector<8xf32> to vector<8x1xf32>
    %201 = math.exp %200 : vector<8x1xf32>
    %202 = vector.broadcast %201 : vector<8x1xf32> to vector<8x128xf32>
    %203 = arith.mulf %202, %8 : vector<8x128xf32>
    %cst_62 = arith.constant dense<0.000000e+00> : vector<2x128xf32>
    %204 = tpu.matmul %0, %203, %cst_62 {dimension_numbers = #tpu.dot_dimension_numbers<[1], [0], [0], [1], [0, 0, 1, 1], [], []>} : vector<2x8xf32>, vector<8x128xf32>, vector<2x128xf32> -> vector<2x128xf32>
    %205 = vector.extract_strided_slice %204 {offsets = [0, 0], sizes = [2, 64], strides = [1, 1]} : vector<2x128xf32> to vector<2x64xf32>
    %206 = vector.extract_strided_slice %204 {offsets = [0, 96], sizes = [2, 1], strides = [1, 1]} : vector<2x128xf32> to vector<2x1xf32>
    %207 = tpu.reciprocal %206 {approx = true} : vector<2x1xf32> -> vector<2x1xf32>
    %208 = vector.broadcast %207 : vector<2x1xf32> to vector<2x64xf32>
    %209 = arith.mulf %205, %208 : vector<2x64xf32>
    %210 = vector.extract_strided_slice %28 {offsets = [8, 0], sizes = [2, 128], strides = [1, 1]} : vector<16x128xf32> to vector<2x128xf32>
    %211 = arith.truncf %209 : vector<2x64xf32> to vector<2x64xbf16>
    %cst_63 = arith.constant dense<0.000000e+00> : vector<2x128xf32>
    %212 = tpu.matmul %211, %31, %cst_63 {dimension_numbers = #tpu.dot_dimension_numbers<[1], [0], [0], [1], [0, 0, 1, 1], [], []>} : vector<2x64xbf16>, vector<64x128xbf16>, vector<2x128xf32> -> vector<2x128xf32>
    %213 = arith.addf %210, %212 : vector<2x128xf32>
    %214 = arith.truncf %192 : vector<2x32xf32> to vector<2x32xbf16>
    %cst_64 = arith.constant dense<0.000000e+00> : vector<2x128xf32>
    %215 = tpu.matmul %214, %32, %cst_64 {dimension_numbers = #tpu.dot_dimension_numbers<[1], [0], [0], [1], [0, 0, 1, 1], [], []>} : vector<2x32xbf16>, vector<32x128xbf16>, vector<2x128xf32> -> vector<2x128xf32>
    %216 = arith.addf %213, %215 : vector<2x128xf32>
    %217 = vector.extract_strided_slice %216 {offsets = [0, 0], sizes = [2, 96], strides = [1, 1]} : vector<2x128xf32> to vector<2x96xf32>
    %218 = arith.negf %217 : vector<2x96xf32>
    %219 = math.exp %218 : vector<2x96xf32>
    %cst_65 = arith.constant 1.000000e+00 : f32
    %220 = vector.broadcast %cst_65 : f32 to vector<2x96xf32>
    %221 = arith.addf %220, %219 : vector<2x96xf32>
    %222 = arith.divf %220, %221 : vector<2x96xf32>
    %223 = vector.extract_strided_slice %216 {offsets = [0, 96], sizes = [2, 32], strides = [1, 1]} : vector<2x128xf32> to vector<2x32xf32>
    %224 = math.tanh %223 : vector<2x32xf32>
    %225 = vector.extract_strided_slice %222 {offsets = [0, 0], sizes = [2, 32], strides = [1, 1]} : vector<2x96xf32> to vector<2x32xf32>
    %226 = vector.extract_strided_slice %222 {offsets = [0, 32], sizes = [2, 32], strides = [1, 1]} : vector<2x96xf32> to vector<2x32xf32>
    %227 = vector.extract_strided_slice %222 {offsets = [0, 64], sizes = [2, 32], strides = [1, 1]} : vector<2x96xf32> to vector<2x32xf32>
    %228 = arith.mulf %226, %190 : vector<2x32xf32>
    %229 = arith.mulf %225, %224 : vector<2x32xf32>
    %230 = arith.addf %228, %229 : vector<2x32xf32>
    %231 = math.tanh %230 : vector<2x32xf32>
    %232 = arith.mulf %227, %231 : vector<2x32xf32>
    %cst_66 = arith.constant dense<0.000000e+00> : vector<2x32xf32>
    %233 = tpu.matmul %232, %29, %cst_66 {dimension_numbers = #tpu.dot_dimension_numbers<[1], [0], [0], [1], [0, 0, 1, 1], [], []>} : vector<2x32xf32>, vector<32x32xf32>, vector<2x32xf32> -> vector<2x32xf32>
    %cst_67 = arith.constant dense<0.000000e+00> : vector<8x32xf32>
    %234 = tpu.matmul %1, %233, %cst_67 {dimension_numbers = #tpu.dot_dimension_numbers<[1], [0], [0], [1], [0, 0, 1, 1], [], []>} : vector<8x2xf32>, vector<2x32xf32>, vector<8x32xf32> -> vector<8x32xf32>
    %235 = arith.addf %10, %234 : vector<8x32xf32>
    %236 = math.tanh %235 : vector<8x32xf32>
    %237 = vector.broadcast %30 : vector<1x32xf32> to vector<8x32xf32>
    %238 = arith.mulf %236, %237 : vector<8x32xf32>
    %cst_68 = arith.constant dense<0.000000e+00> : vector<8xf32>
    %239 = vector.multi_reduction <add>, %238, %cst_68 [1] : vector<8x32xf32> to vector<8xf32>
    %240 = vector.shape_cast %239 : vector<8xf32> to vector<8x1xf32>
    %241 = math.exp %240 : vector<8x1xf32>
    %242 = vector.broadcast %241 : vector<8x1xf32> to vector<8x128xf32>
    %243 = arith.mulf %242, %8 : vector<8x128xf32>
    %cst_69 = arith.constant dense<0.000000e+00> : vector<2x128xf32>
    %244 = tpu.matmul %0, %243, %cst_69 {dimension_numbers = #tpu.dot_dimension_numbers<[1], [0], [0], [1], [0, 0, 1, 1], [], []>} : vector<2x8xf32>, vector<8x128xf32>, vector<2x128xf32> -> vector<2x128xf32>
    %245 = vector.extract_strided_slice %244 {offsets = [0, 0], sizes = [2, 64], strides = [1, 1]} : vector<2x128xf32> to vector<2x64xf32>
    %246 = vector.extract_strided_slice %244 {offsets = [0, 96], sizes = [2, 1], strides = [1, 1]} : vector<2x128xf32> to vector<2x1xf32>
    %247 = tpu.reciprocal %246 {approx = true} : vector<2x1xf32> -> vector<2x1xf32>
    %248 = vector.broadcast %247 : vector<2x1xf32> to vector<2x64xf32>
    %249 = arith.mulf %245, %248 : vector<2x64xf32>
    %250 = vector.extract_strided_slice %28 {offsets = [10, 0], sizes = [2, 128], strides = [1, 1]} : vector<16x128xf32> to vector<2x128xf32>
    %251 = arith.truncf %249 : vector<2x64xf32> to vector<2x64xbf16>
    %cst_70 = arith.constant dense<0.000000e+00> : vector<2x128xf32>
    %252 = tpu.matmul %251, %31, %cst_70 {dimension_numbers = #tpu.dot_dimension_numbers<[1], [0], [0], [1], [0, 0, 1, 1], [], []>} : vector<2x64xbf16>, vector<64x128xbf16>, vector<2x128xf32> -> vector<2x128xf32>
    %253 = arith.addf %250, %252 : vector<2x128xf32>
    %254 = arith.truncf %232 : vector<2x32xf32> to vector<2x32xbf16>
    %cst_71 = arith.constant dense<0.000000e+00> : vector<2x128xf32>
    %255 = tpu.matmul %254, %32, %cst_71 {dimension_numbers = #tpu.dot_dimension_numbers<[1], [0], [0], [1], [0, 0, 1, 1], [], []>} : vector<2x32xbf16>, vector<32x128xbf16>, vector<2x128xf32> -> vector<2x128xf32>
    %256 = arith.addf %253, %255 : vector<2x128xf32>
    %257 = vector.extract_strided_slice %256 {offsets = [0, 0], sizes = [2, 96], strides = [1, 1]} : vector<2x128xf32> to vector<2x96xf32>
    %258 = arith.negf %257 : vector<2x96xf32>
    %259 = math.exp %258 : vector<2x96xf32>
    %cst_72 = arith.constant 1.000000e+00 : f32
    %260 = vector.broadcast %cst_72 : f32 to vector<2x96xf32>
    %261 = arith.addf %260, %259 : vector<2x96xf32>
    %262 = arith.divf %260, %261 : vector<2x96xf32>
    %263 = vector.extract_strided_slice %256 {offsets = [0, 96], sizes = [2, 32], strides = [1, 1]} : vector<2x128xf32> to vector<2x32xf32>
    %264 = math.tanh %263 : vector<2x32xf32>
    %265 = vector.extract_strided_slice %262 {offsets = [0, 0], sizes = [2, 32], strides = [1, 1]} : vector<2x96xf32> to vector<2x32xf32>
    %266 = vector.extract_strided_slice %262 {offsets = [0, 32], sizes = [2, 32], strides = [1, 1]} : vector<2x96xf32> to vector<2x32xf32>
    %267 = vector.extract_strided_slice %262 {offsets = [0, 64], sizes = [2, 32], strides = [1, 1]} : vector<2x96xf32> to vector<2x32xf32>
    %268 = arith.mulf %266, %230 : vector<2x32xf32>
    %269 = arith.mulf %265, %264 : vector<2x32xf32>
    %270 = arith.addf %268, %269 : vector<2x32xf32>
    %271 = math.tanh %270 : vector<2x32xf32>
    %272 = arith.mulf %267, %271 : vector<2x32xf32>
    %cst_73 = arith.constant dense<0.000000e+00> : vector<2x32xf32>
    %273 = tpu.matmul %272, %29, %cst_73 {dimension_numbers = #tpu.dot_dimension_numbers<[1], [0], [0], [1], [0, 0, 1, 1], [], []>} : vector<2x32xf32>, vector<32x32xf32>, vector<2x32xf32> -> vector<2x32xf32>
    %cst_74 = arith.constant dense<0.000000e+00> : vector<8x32xf32>
    %274 = tpu.matmul %1, %273, %cst_74 {dimension_numbers = #tpu.dot_dimension_numbers<[1], [0], [0], [1], [0, 0, 1, 1], [], []>} : vector<8x2xf32>, vector<2x32xf32>, vector<8x32xf32> -> vector<8x32xf32>
    %275 = arith.addf %10, %274 : vector<8x32xf32>
    %276 = math.tanh %275 : vector<8x32xf32>
    %277 = vector.broadcast %30 : vector<1x32xf32> to vector<8x32xf32>
    %278 = arith.mulf %276, %277 : vector<8x32xf32>
    %cst_75 = arith.constant dense<0.000000e+00> : vector<8xf32>
    %279 = vector.multi_reduction <add>, %278, %cst_75 [1] : vector<8x32xf32> to vector<8xf32>
    %280 = vector.shape_cast %279 : vector<8xf32> to vector<8x1xf32>
    %281 = math.exp %280 : vector<8x1xf32>
    %282 = vector.broadcast %281 : vector<8x1xf32> to vector<8x128xf32>
    %283 = arith.mulf %282, %8 : vector<8x128xf32>
    %cst_76 = arith.constant dense<0.000000e+00> : vector<2x128xf32>
    %284 = tpu.matmul %0, %283, %cst_76 {dimension_numbers = #tpu.dot_dimension_numbers<[1], [0], [0], [1], [0, 0, 1, 1], [], []>} : vector<2x8xf32>, vector<8x128xf32>, vector<2x128xf32> -> vector<2x128xf32>
    %285 = vector.extract_strided_slice %284 {offsets = [0, 0], sizes = [2, 64], strides = [1, 1]} : vector<2x128xf32> to vector<2x64xf32>
    %286 = vector.extract_strided_slice %284 {offsets = [0, 96], sizes = [2, 1], strides = [1, 1]} : vector<2x128xf32> to vector<2x1xf32>
    %287 = tpu.reciprocal %286 {approx = true} : vector<2x1xf32> -> vector<2x1xf32>
    %288 = vector.broadcast %287 : vector<2x1xf32> to vector<2x64xf32>
    %289 = arith.mulf %285, %288 : vector<2x64xf32>
    %290 = vector.extract_strided_slice %28 {offsets = [12, 0], sizes = [2, 128], strides = [1, 1]} : vector<16x128xf32> to vector<2x128xf32>
    %291 = arith.truncf %289 : vector<2x64xf32> to vector<2x64xbf16>
    %cst_77 = arith.constant dense<0.000000e+00> : vector<2x128xf32>
    %292 = tpu.matmul %291, %31, %cst_77 {dimension_numbers = #tpu.dot_dimension_numbers<[1], [0], [0], [1], [0, 0, 1, 1], [], []>} : vector<2x64xbf16>, vector<64x128xbf16>, vector<2x128xf32> -> vector<2x128xf32>
    %293 = arith.addf %290, %292 : vector<2x128xf32>
    %294 = arith.truncf %272 : vector<2x32xf32> to vector<2x32xbf16>
    %cst_78 = arith.constant dense<0.000000e+00> : vector<2x128xf32>
    %295 = tpu.matmul %294, %32, %cst_78 {dimension_numbers = #tpu.dot_dimension_numbers<[1], [0], [0], [1], [0, 0, 1, 1], [], []>} : vector<2x32xbf16>, vector<32x128xbf16>, vector<2x128xf32> -> vector<2x128xf32>
    %296 = arith.addf %293, %295 : vector<2x128xf32>
    %297 = vector.extract_strided_slice %296 {offsets = [0, 0], sizes = [2, 96], strides = [1, 1]} : vector<2x128xf32> to vector<2x96xf32>
    %298 = arith.negf %297 : vector<2x96xf32>
    %299 = math.exp %298 : vector<2x96xf32>
    %cst_79 = arith.constant 1.000000e+00 : f32
    %300 = vector.broadcast %cst_79 : f32 to vector<2x96xf32>
    %301 = arith.addf %300, %299 : vector<2x96xf32>
    %302 = arith.divf %300, %301 : vector<2x96xf32>
    %303 = vector.extract_strided_slice %296 {offsets = [0, 96], sizes = [2, 32], strides = [1, 1]} : vector<2x128xf32> to vector<2x32xf32>
    %304 = math.tanh %303 : vector<2x32xf32>
    %305 = vector.extract_strided_slice %302 {offsets = [0, 0], sizes = [2, 32], strides = [1, 1]} : vector<2x96xf32> to vector<2x32xf32>
    %306 = vector.extract_strided_slice %302 {offsets = [0, 32], sizes = [2, 32], strides = [1, 1]} : vector<2x96xf32> to vector<2x32xf32>
    %307 = vector.extract_strided_slice %302 {offsets = [0, 64], sizes = [2, 32], strides = [1, 1]} : vector<2x96xf32> to vector<2x32xf32>
    %308 = arith.mulf %306, %270 : vector<2x32xf32>
    %309 = arith.mulf %305, %304 : vector<2x32xf32>
    %310 = arith.addf %308, %309 : vector<2x32xf32>
    %311 = math.tanh %310 : vector<2x32xf32>
    %312 = arith.mulf %307, %311 : vector<2x32xf32>
    %cst_80 = arith.constant dense<0.000000e+00> : vector<2x32xf32>
    %313 = tpu.matmul %312, %29, %cst_80 {dimension_numbers = #tpu.dot_dimension_numbers<[1], [0], [0], [1], [0, 0, 1, 1], [], []>} : vector<2x32xf32>, vector<32x32xf32>, vector<2x32xf32> -> vector<2x32xf32>
    %cst_81 = arith.constant dense<0.000000e+00> : vector<8x32xf32>
    %314 = tpu.matmul %1, %313, %cst_81 {dimension_numbers = #tpu.dot_dimension_numbers<[1], [0], [0], [1], [0, 0, 1, 1], [], []>} : vector<8x2xf32>, vector<2x32xf32>, vector<8x32xf32> -> vector<8x32xf32>
    %315 = arith.addf %10, %314 : vector<8x32xf32>
    %316 = math.tanh %315 : vector<8x32xf32>
    %317 = vector.broadcast %30 : vector<1x32xf32> to vector<8x32xf32>
    %318 = arith.mulf %316, %317 : vector<8x32xf32>
    %cst_82 = arith.constant dense<0.000000e+00> : vector<8xf32>
    %319 = vector.multi_reduction <add>, %318, %cst_82 [1] : vector<8x32xf32> to vector<8xf32>
    %320 = vector.shape_cast %319 : vector<8xf32> to vector<8x1xf32>
    %321 = math.exp %320 : vector<8x1xf32>
    %322 = vector.broadcast %321 : vector<8x1xf32> to vector<8x128xf32>
    %323 = arith.mulf %322, %8 : vector<8x128xf32>
    %cst_83 = arith.constant dense<0.000000e+00> : vector<2x128xf32>
    %324 = tpu.matmul %0, %323, %cst_83 {dimension_numbers = #tpu.dot_dimension_numbers<[1], [0], [0], [1], [0, 0, 1, 1], [], []>} : vector<2x8xf32>, vector<8x128xf32>, vector<2x128xf32> -> vector<2x128xf32>
    %325 = vector.extract_strided_slice %324 {offsets = [0, 0], sizes = [2, 64], strides = [1, 1]} : vector<2x128xf32> to vector<2x64xf32>
    %326 = vector.extract_strided_slice %324 {offsets = [0, 96], sizes = [2, 1], strides = [1, 1]} : vector<2x128xf32> to vector<2x1xf32>
    %327 = tpu.reciprocal %326 {approx = true} : vector<2x1xf32> -> vector<2x1xf32>
    %328 = vector.broadcast %327 : vector<2x1xf32> to vector<2x64xf32>
    %329 = arith.mulf %325, %328 : vector<2x64xf32>
    %330 = vector.extract_strided_slice %28 {offsets = [14, 0], sizes = [2, 128], strides = [1, 1]} : vector<16x128xf32> to vector<2x128xf32>
    %331 = arith.truncf %329 : vector<2x64xf32> to vector<2x64xbf16>
    %cst_84 = arith.constant dense<0.000000e+00> : vector<2x128xf32>
    %332 = tpu.matmul %331, %31, %cst_84 {dimension_numbers = #tpu.dot_dimension_numbers<[1], [0], [0], [1], [0, 0, 1, 1], [], []>} : vector<2x64xbf16>, vector<64x128xbf16>, vector<2x128xf32> -> vector<2x128xf32>
    %333 = arith.addf %330, %332 : vector<2x128xf32>
    %334 = arith.truncf %312 : vector<2x32xf32> to vector<2x32xbf16>
    %cst_85 = arith.constant dense<0.000000e+00> : vector<2x128xf32>
    %335 = tpu.matmul %334, %32, %cst_85 {dimension_numbers = #tpu.dot_dimension_numbers<[1], [0], [0], [1], [0, 0, 1, 1], [], []>} : vector<2x32xbf16>, vector<32x128xbf16>, vector<2x128xf32> -> vector<2x128xf32>
    %336 = arith.addf %333, %335 : vector<2x128xf32>
    %337 = vector.extract_strided_slice %336 {offsets = [0, 0], sizes = [2, 96], strides = [1, 1]} : vector<2x128xf32> to vector<2x96xf32>
    %338 = arith.negf %337 : vector<2x96xf32>
    %339 = math.exp %338 : vector<2x96xf32>
    %cst_86 = arith.constant 1.000000e+00 : f32
    %340 = vector.broadcast %cst_86 : f32 to vector<2x96xf32>
    %341 = arith.addf %340, %339 : vector<2x96xf32>
    %342 = arith.divf %340, %341 : vector<2x96xf32>
    %343 = vector.extract_strided_slice %336 {offsets = [0, 96], sizes = [2, 32], strides = [1, 1]} : vector<2x128xf32> to vector<2x32xf32>
    %344 = math.tanh %343 : vector<2x32xf32>
    %345 = vector.extract_strided_slice %342 {offsets = [0, 0], sizes = [2, 32], strides = [1, 1]} : vector<2x96xf32> to vector<2x32xf32>
    %346 = vector.extract_strided_slice %342 {offsets = [0, 32], sizes = [2, 32], strides = [1, 1]} : vector<2x96xf32> to vector<2x32xf32>
    %347 = vector.extract_strided_slice %342 {offsets = [0, 64], sizes = [2, 32], strides = [1, 1]} : vector<2x96xf32> to vector<2x32xf32>
    %348 = arith.mulf %346, %310 : vector<2x32xf32>
    %349 = arith.mulf %345, %344 : vector<2x32xf32>
    %350 = arith.addf %348, %349 : vector<2x32xf32>
    %351 = math.tanh %350 : vector<2x32xf32>
    %352 = arith.mulf %347, %351 : vector<2x32xf32>
    %353 = tpu.concatenate %72, %112, %152, %192, %232, %272, %312, %352 in 0 : vector<2x32xf32>, vector<2x32xf32>, vector<2x32xf32>, vector<2x32xf32>, vector<2x32xf32>, vector<2x32xf32>, vector<2x32xf32>, vector<2x32xf32> -> vector<16x32xf32>
    %354 = arith.truncf %353 : vector<16x32xf32> to vector<16x32xbf16>
    %c0_87 = arith.constant 0 : index
    %c0_88 = arith.constant 0 : index
    %355 = vector.load %arg15[%c0_87, %c0_88] : memref<32x128xbf16, #tpu.memory_space<vmem>>, vector<32x128xbf16>
    %cst_89 = arith.constant dense<0.000000e+00> : vector<16x128xf32>
    %356 = tpu.matmul %354, %355, %cst_89 {dimension_numbers = #tpu.dot_dimension_numbers<[1], [0], [0], [1], [0, 0, 1, 1], [], []>} : vector<16x32xbf16>, vector<32x128xbf16>, vector<16x128xf32> -> vector<16x128xf32>
    %c0_90 = arith.constant 0 : index
    %c0_91 = arith.constant 0 : index
    %357 = vector.load %arg16[%c0_90, %c0_91] : memref<1x128xf32, #tpu.memory_space<vmem>>, vector<1x128xf32>
    %358 = vector.broadcast %357 : vector<1x128xf32> to vector<16x128xf32>
    %359 = arith.addf %356, %358 : vector<16x128xf32>
    %c0_92 = arith.constant 0 : index
    %c0_93 = arith.constant 0 : index
    %360 = vector.load %arg17[%c0_92, %c0_93] : memref<16x128xf32, #tpu.memory_space<vmem>>, vector<16x128xf32>
    tpu.vector_store %arg17[%c0_92, %c0_93], %359 {strides = array<i32>} : memref<16x128xf32, #tpu.memory_space<vmem>>, vector<16x128xf32>,
    return
  }
  func.func @transform_0(%arg0: i32) -> (i32, i32) {
    %c0_i32 = arith.constant 0 : i32
    %c0_i32_0 = arith.constant 0 : i32
    %c0_i32_1 = arith.constant 0 : i32
    return %c0_i32, %c0_i32_0 : i32, i32
  }
  func.func @transform_1(%arg0: i32) -> (i32, i32) {
    %c0_i32 = arith.constant 0 : i32
    %c0_i32_0 = arith.constant 0 : i32
    %c0_i32_1 = arith.constant 0 : i32
    return %c0_i32, %c0_i32_0 : i32, i32
  }
  func.func @transform_2(%arg0: i32) -> (i32, i32) {
    %c0_i32 = arith.constant 0 : i32
    %c0_i32_0 = arith.constant 0 : i32
    %c0_i32_1 = arith.constant 0 : i32
    return %c0_i32, %c0_i32_0 : i32, i32
  }
  func.func @transform_3(%arg0: i32) -> (i32, i32) {
    %c0_i32 = arith.constant 0 : i32
    %c0_i32_0 = arith.constant 0 : i32
    %c0_i32_1 = arith.constant 0 : i32
    return %c0_i32, %c0_i32_0 : i32, i32
  }
  func.func @transform_4(%arg0: i32) -> (i32, i32) {
    %c0_i32 = arith.constant 0 : i32
    %c0_i32_0 = arith.constant 0 : i32
    %c0_i32_1 = arith.constant 0 : i32
    return %c0_i32, %c0_i32_0 : i32, i32
  }
  func.func @transform_5(%arg0: i32) -> (i32, i32) {
    %c0_i32 = arith.constant 0 : i32
    %c0_i32_0 = arith.constant 0 : i32
    %c0_i32_1 = arith.constant 0 : i32
    return %c0_i32, %c0_i32_0 : i32, i32
  }
  func.func @transform_6(%arg0: i32) -> (i32, i32) {
    %c0_i32 = arith.constant 0 : i32
    %c0_i32_0 = arith.constant 0 : i32
    %c0_i32_1 = arith.constant 0 : i32
    return %c0_i32, %c0_i32_0 : i32, i32
  }
  func.func @transform_7(%arg0: i32) -> (i32, i32) {
    %c0_i32 = arith.constant 0 : i32
    %c0_i32_0 = arith.constant 0 : i32
    %c0_i32_1 = arith.constant 0 : i32
    return %c0_i32, %c0_i32_0 : i32, i32
  }
  func.func @transform_8(%arg0: i32) -> (i32, i32) {
    %c0_i32 = arith.constant 0 : i32
    %c0_i32_0 = arith.constant 0 : i32
    %c0_i32_1 = arith.constant 0 : i32
    return %c0_i32, %c0_i32_0 : i32, i32
  }
  func.func @transform_9(%arg0: i32) -> (i32, i32) {
    %c0_i32 = arith.constant 0 : i32
    %c0_i32_0 = arith.constant 0 : i32
    %c0_i32_1 = arith.constant 0 : i32
    return %c0_i32, %c0_i32_0 : i32, i32
  }
  func.func @transform_10(%arg0: i32) -> (i32, i32) {
    %c0_i32 = arith.constant 0 : i32
    %c0_i32_0 = arith.constant 0 : i32
    %c0_i32_1 = arith.constant 0 : i32
    return %c0_i32, %c0_i32_0 : i32, i32
  }
  func.func @transform_11(%arg0: i32) -> (i32, i32) {
    %c0_i32 = arith.constant 0 : i32
    %c0_i32_0 = arith.constant 0 : i32
    %c0_i32_1 = arith.constant 0 : i32
    return %c0_i32, %c0_i32_0 : i32, i32
  }
  func.func @transform_12(%arg0: i32) -> (i32, i32) {
    %c0_i32 = arith.constant 0 : i32
    %c0_i32_0 = arith.constant 0 : i32
    %c0_i32_1 = arith.constant 0 : i32
    return %c0_i32, %c0_i32_0 : i32, i32
  }
  func.func @transform_13(%arg0: i32) -> (i32, i32) {
    %c0_i32 = arith.constant 0 : i32
    %c0_i32_0 = arith.constant 0 : i32
    %c0_i32_1 = arith.constant 0 : i32
    return %c0_i32, %c0_i32_0 : i32, i32
  }
  func.func @transform_14(%arg0: i32) -> (i32, i32) {
    %c0_i32 = arith.constant 0 : i32
    %c0_i32_0 = arith.constant 0 : i32
    %c0_i32_1 = arith.constant 0 : i32
    return %c0_i32, %c0_i32_0 : i32, i32
  }
  func.func @transform_15(%arg0: i32) -> (i32, i32) {
    %c0_i32 = arith.constant 0 : i32
    %c0_i32_0 = arith.constant 0 : i32
    %c0_i32_1 = arith.constant 0 : i32
    return %c0_i32, %c0_i32_0 : i32, i32
  }
  func.func @transform_16(%arg0: i32) -> (i32, i32) {
    %c0_i32 = arith.constant 0 : i32
    %c0_i32_0 = arith.constant 0 : i32
    %c0_i32_1 = arith.constant 0 : i32
    return %c0_i32, %c0_i32_0 : i32, i32
  }
}

</mosaic_0001>

<llo_original>
// kernel: img2poem_forward.1
$region0: #{img2poem_forward.1}
  #allocation0 [shape = 'u32[]', space=smem, size = 0x4, offset = 0x4, fixed_abs, tag = 'smem constant byte address 0x4 - core index']
  #allocation1 [shape = 'u32[144,128]{1,0:T(1,128)}', space=vmem, size = 0x12000, scoped, tag = 'internal scratch']
  %s0 = inlined_call_operand.vmem [shape: f32[8,256], index: 0, kind: input, shape index: {}]
  %s1 = inlined_call_operand.vmem [shape: bf16[256,128], index: 1, kind: input, shape index: {}]
  %s2 = inlined_call_operand.vmem [shape: f32[1,128], index: 2, kind: input, shape index: {}]
  %s3 = inlined_call_operand.vmem [shape: f32[2,8], index: 3, kind: input, shape index: {}]
  %s4 = inlined_call_operand.vmem [shape: f32[8,2], index: 4, kind: input, shape index: {}]
  %s5 = inlined_call_operand.vmem [shape: bf16[64,64], index: 5, kind: input, shape index: {}]
  %s6 = inlined_call_operand.vmem [shape: f32[1,64], index: 6, kind: input, shape index: {}]
  %s7 = inlined_call_operand.vmem [shape: f32[16,32], index: 7, kind: input, shape index: {}]
  %s8 = inlined_call_operand.vmem [shape: bf16[32,128], index: 8, kind: input, shape index: {}]
  %s9 = inlined_call_operand.vmem [shape: f32[32,32], index: 9, kind: input, shape index: {}]
  %s10 = inlined_call_operand.vmem [shape: f32[1,32], index: 10, kind: input, shape index: {}]
  %s11 = inlined_call_operand.vmem [shape: bf16[64,128], index: 11, kind: input, shape index: {}]
  %s12 = inlined_call_operand.vmem [shape: bf16[32,128], index: 12, kind: input, shape index: {}]
  %s13 = inlined_call_operand.vmem [shape: f32[1,128], index: 13, kind: input, shape index: {}]
  %s14 = inlined_call_operand.vmem [shape: bf16[32,128], index: 14, kind: input, shape index: {}]
  %s15 = inlined_call_operand.vmem [shape: f32[1,128], index: 15, kind: input, shape index: {}]
  %s16 = inlined_call_operand.vmem [shape: f32[16,128], index: 16, kind: output, shape index: {}]
  %s17 = sld [smem:[#allocation0]]
  $region74: #{img2poem_forward.1} parent=0
    _
  %s19 = ssub.s32 1, %s17
  %s20 = scalar_select 0, %s19, %s17
  // Predicated region
  $region2: #{img2poem_forward.1} parent=0 // pred_check
    _
  $region3: #{img2poem_forward.1} parent=0 // pred_check_branch
    %22 = sbr.rel (0) target = $region5
  $region4: #{img2poem_forward.1} parent=0 // pred_region
    _
  $region5: #{img2poem_forward.1} parent=0 // pred_fallthru
    _
  // Predicated region
  $region6: #{img2poem_forward.1} parent=0 // pred_check
    _
  $region7: #{img2poem_forward.1} parent=0 // pred_check_branch
    %24 = sbr.rel (0) target = $region9
  $region8: #{img2poem_forward.1} parent=0 // pred_region
    _
  $region9: #{img2poem_forward.1} parent=0 // pred_fallthru
    _
  // Predicated region
  $region10: #{img2poem_forward.1} parent=0 // pred_check
    _
  $region11: #{img2poem_forward.1} parent=0 // pred_check_branch
    %26 = sbr.rel (0) target = $region13
  $region12: #{img2poem_forward.1} parent=0 // pred_region
    _
  $region13: #{img2poem_forward.1} parent=0 // pred_fallthru
    _
  // Predicated region
  $region14: #{img2poem_forward.1} parent=0 // pred_check
    _
  $region15: #{img2poem_forward.1} parent=0 // pred_check_branch
    %28 = sbr.rel (0) target = $region17
  $region16: #{img2poem_forward.1} parent=0 // pred_region
    _
  $region17: #{img2poem_forward.1} parent=0 // pred_fallthru
    _
  // Predicated region
  $region18: #{img2poem_forward.1} parent=0 // pred_check
    _
  $region19: #{img2poem_forward.1} parent=0 // pred_check_branch
    %30 = sbr.rel (0) target = $region21
  $region20: #{img2poem_forward.1} parent=0 // pred_region
    _
  $region21: #{img2poem_forward.1} parent=0 // pred_fallthru
    _
  // Predicated region
  $region22: #{img2poem_forward.1} parent=0 // pred_check
    _
  $region23: #{img2poem_forward.1} parent=0 // pred_check_branch
    %32 = sbr.rel (0) target = $region25
  $region24: #{img2poem_forward.1} parent=0 // pred_region
    _
  $region25: #{img2poem_forward.1} parent=0 // pred_fallthru
    _
  // Predicated region
  $region26: #{img2poem_forward.1} parent=0 // pred_check
    _
  $region27: #{img2poem_forward.1} parent=0 // pred_check_branch
    %34 = sbr.rel (0) target = $region29
  $region28: #{img2poem_forward.1} parent=0 // pred_region
    _
  $region29: #{img2poem_forward.1} parent=0 // pred_fallthru
    _
  // Predicated region
  $region30: #{img2poem_forward.1} parent=0 // pred_check
    _
  $region31: #{img2poem_forward.1} parent=0 // pred_check_branch
    %36 = sbr.rel (0) target = $region33
  $region32: #{img2poem_forward.1} parent=0 // pred_region
    _
  $region33: #{img2poem_forward.1} parent=0 // pred_fallthru
    _
  // Predicated region
  $region34: #{img2poem_forward.1} parent=0 // pred_check
    _
  $region35: #{img2poem_forward.1} parent=0 // pred_check_branch
    %38 = sbr.rel (0) target = $region37
  $region36: #{img2poem_forward.1} parent=0 // pred_region
    _
  $region37: #{img2poem_forward.1} parent=0 // pred_fallthru
    _
  // Predicated region
  $region38: #{img2poem_forward.1} parent=0 // pred_check
    _
  $region39: #{img2poem_forward.1} parent=0 // pred_check_branch
    %40 = sbr.rel (0) target = $region41
  $region40: #{img2poem_forward.1} parent=0 // pred_region
    _
  $region41: #{img2poem_forward.1} parent=0 // pred_fallthru
    _
  // Predicated region
  $region42: #{img2poem_forward.1} parent=0 // pred_check
    _
  $region43: #{img2poem_forward.1} parent=0 // pred_check_branch
    %42 = sbr.rel (0) target = $region45
  $region44: #{img2poem_forward.1} parent=0 // pred_region
    _
  $region45: #{img2poem_forward.1} parent=0 // pred_fallthru
    _
  // Predicated region
  $region46: #{img2poem_forward.1} parent=0 // pred_check
    _
  $region47: #{img2poem_forward.1} parent=0 // pred_check_branch
    %44 = sbr.rel (0) target = $region49
  $region48: #{img2poem_forward.1} parent=0 // pred_region
    _
  $region49: #{img2poem_forward.1} parent=0 // pred_fallthru
    _
  // Predicated region
  $region50: #{img2poem_forward.1} parent=0 // pred_check
    _
  $region51: #{img2poem_forward.1} parent=0 // pred_check_branch
    %46 = sbr.rel (0) target = $region53
  $region52: #{img2poem_forward.1} parent=0 // pred_region
    _
  $region53: #{img2poem_forward.1} parent=0 // pred_fallthru
    _
  // Predicated region
  $region54: #{img2poem_forward.1} parent=0 // pred_check
    _
  $region55: #{img2poem_forward.1} parent=0 // pred_check_branch
    %48 = sbr.rel (0) target = $region57
  $region56: #{img2poem_forward.1} parent=0 // pred_region
    _
  $region57: #{img2poem_forward.1} parent=0 // pred_fallthru
    _
  // Predicated region
  $region58: #{img2poem_forward.1} parent=0 // pred_check
    _
  $region59: #{img2poem_forward.1} parent=0 // pred_check_branch
    %50 = sbr.rel (0) target = $region61
  $region60: #{img2poem_forward.1} parent=0 // pred_region
    _
  $region61: #{img2poem_forward.1} parent=0 // pred_fallthru
    _
  // Predicated region
  $region62: #{img2poem_forward.1} parent=0 // pred_check
    _
  $region63: #{img2poem_forward.1} parent=0 // pred_check_branch
    %52 = sbr.rel (0) target = $region65
  $region64: #{img2poem_forward.1} parent=0 // pred_region
    _
  $region65: #{img2poem_forward.1} parent=0 // pred_fallthru
    _
  %v54 = vld [vmem:[%s3] sm:$0x3]
  %v55 = vld [vmem:[%s4] sm:$0xff]
  %v56 = vld [vmem:[%s0] sm:$0xff]
  %v57 = vld [vmem:[%s0 + $0x8] sm:$0xff]
  %v58 = vpack.c.bf16 %v56, %v56
  %v59 = vpack.c.bf16 %v57, %v57
  %v60 = vld [vmem:[%s1] sm:$0xf]
  %v61 = vld [vmem:[%s1 + $0x4] sm:$0xf]
  %v62 = vld [vmem:[%s1 + $0x8] sm:$0xf]
  %v63 = vld [vmem:[%s1 + $0xc] sm:$0xf]
  %v64 = vld [vmem:[%s1 + $0x10] sm:$0xf]
  %v65 = vld [vmem:[%s1 + $0x14] sm:$0xf]
  %v66 = vld [vmem:[%s1 + $0x18] sm:$0xf]
  %v67 = vld [vmem:[%s1 + $0x1c] sm:$0xf]
  %v68 = vld [vmem:[%s1 + $0x20] sm:$0xf]
  %v69 = vld [vmem:[%s1 + $0x24] sm:$0xf]
  %v70 = vld [vmem:[%s1 + $0x28] sm:$0xf]
  %v71 = vld [vmem:[%s1 + $0x2c] sm:$0xf]
  %v72 = vld [vmem:[%s1 + $0x30] sm:$0xf]
  %v73 = vld [vmem:[%s1 + $0x34] sm:$0xf]
  %v74 = vld [vmem:[%s1 + $0x38] sm:$0xf]
  %v75 = vld [vmem:[%s1 + $0x3c] sm:$0xf]
  %v76 = vld [vmem:[%s1 + $0x40] sm:$0xf]
  %v77 = vld [vmem:[%s1 + $0x44] sm:$0xf]
  %v78 = vld [vmem:[%s1 + $0x48] sm:$0xf]
  %v79 = vld [vmem:[%s1 + $0x4c] sm:$0xf]
  %v80 = vld [vmem:[%s1 + $0x50] sm:$0xf]
  %v81 = vld [vmem:[%s1 + $0x54] sm:$0xf]
  %v82 = vld [vmem:[%s1 + $0x58] sm:$0xf]
  %v83 = vld [vmem:[%s1 + $0x5c] sm:$0xf]
  %v84 = vld [vmem:[%s1 + $0x60] sm:$0xf]
  %v85 = vld [vmem:[%s1 + $0x64] sm:$0xf]
  %v86 = vld [vmem:[%s1 + $0x68] sm:$0xf]
  %v87 = vld [vmem:[%s1 + $0x6c] sm:$0xf]
  %v88 = vld [vmem:[%s1 + $0x70] sm:$0xf]
  %v89 = vld [vmem:[%s1 + $0x74] sm:$0xf]
  %v90 = vld [vmem:[%s1 + $0x78] sm:$0xf]
  %v91 = vld [vmem:[%s1 + $0x7c] sm:$0xf]
  %v92 = vld [vmem:[%s2] sm:$0x1]
  %v94 = vlaneseq
  %v95 = vshrl.u32 %v94, 7
  %v96 = vsub.s32 0, %v95
  %v97 = vrot.slane %v92, %v96
  %v131 = vunpack.c.l.b16 %v60
  %v132 = vunpack.c.l.b16 %v61
  %v133 = vunpack.c.l.b16 %v62
  %v134 = vunpack.c.l.b16 %v63
  %v135 = vunpack.c.l.b16 %v64
  %v136 = vunpack.c.l.b16 %v65
  %v137 = vunpack.c.l.b16 %v66
  %v138 = vunpack.c.l.b16 %v67
  %v139 = vunpack.c.l.b16 %v68
  %v140 = vunpack.c.l.b16 %v69
  %v141 = vunpack.c.l.b16 %v70
  %v142 = vunpack.c.l.b16 %v71
  %v143 = vunpack.c.l.b16 %v72
  %v144 = vunpack.c.l.b16 %v73
  %v145 = vunpack.c.l.b16 %v74
  %v146 = vunpack.c.l.b16 %v75
  %v147 = vunpack.c.l.b16 %v76
  %v148 = vunpack.c.l.b16 %v77
  %v149 = vunpack.c.l.b16 %v78
  %v150 = vunpack.c.l.b16 %v79
  %v151 = vunpack.c.l.b16 %v80
  %v152 = vunpack.c.l.b16 %v81
  %v153 = vunpack.c.l.b16 %v82
  %v154 = vunpack.c.l.b16 %v83
  %v155 = vunpack.c.l.b16 %v84
  %v156 = vunpack.c.l.b16 %v85
  %v157 = vunpack.c.l.b16 %v86
  %v158 = vunpack.c.l.b16 %v87
  %v159 = vunpack.c.l.b16 %v88
  %v160 = vunpack.c.l.b16 %v89
  %v161 = vunpack.c.l.b16 %v90
  %v162 = vunpack.c.l.b16 %v91
  %v163 = vpack.c.b16 %v132, %v131
  %v164 = vpack.c.b16 %v134, %v133
  %v165 = vpack.c.b16 %v136, %v135
  %v166 = vpack.c.b16 %v138, %v137
  %v167 = vpack.c.b16 %v140, %v139
  %v168 = vpack.c.b16 %v142, %v141
  %v169 = vpack.c.b16 %v144, %v143
  %v170 = vpack.c.b16 %v146, %v145
  %v171 = vpack.c.b16 %v148, %v147
  %v172 = vpack.c.b16 %v150, %v149
  %v173 = vpack.c.b16 %v152, %v151
  %v174 = vpack.c.b16 %v154, %v153
  %v175 = vpack.c.b16 %v156, %v155
  %v176 = vpack.c.b16 %v158, %v157
  %v177 = vpack.c.b16 %v160, %v159
  %v178 = vpack.c.b16 %v162, %v161
  %195 = vmatprep.subr.bf16.mxu0 0
  %196 = vmatpush1.bf16.msra.mxu0 %v163
  %197 = vmatprep.subr.bf16.mxu0 0
  %198 = vmatpush1.bf16.msra.mxu0 %v164
  %199 = vmatprep.subr.bf16.mxu0 0
  %200 = vmatpush1.bf16.msra.mxu0 %v165
  %201 = vmatprep.subr.bf16.mxu0 0
  %202 = vmatpush1.bf16.msra.mxu0 %v166
  %203 = vmatprep.subr.bf16.mxu0 0
  %204 = vmatpush1.bf16.msra.mxu0 %v167
  %205 = vmatprep.subr.bf16.mxu0 0
  %206 = vmatpush1.bf16.msra.mxu0 %v168
  %207 = vmatprep.subr.bf16.mxu0 0
  %208 = vmatpush1.bf16.msra.mxu0 %v169
  %209 = vmatprep.subr.bf16.mxu0 0
  %210 = vmatpush1.bf16.msra.mxu0 %v170
  %211 = vmatprep.subr.bf16.mxu0 0
  %212 = vmatpush1.bf16.msra.mxu0 %v171
  %213 = vmatprep.subr.bf16.mxu0 0
  %214 = vmatpush1.bf16.msra.mxu0 %v172
  %215 = vmatprep.subr.bf16.mxu0 0
  %216 = vmatpush1.bf16.msra.mxu0 %v173
  %217 = vmatprep.subr.bf16.mxu0 0
  %218 = vmatpush1.bf16.msra.mxu0 %v174
  %219 = vmatprep.subr.bf16.mxu0 0
  %220 = vmatpush1.bf16.msra.mxu0 %v175
  %221 = vmatprep.subr.bf16.mxu0 0
  %222 = vmatpush1.bf16.msra.mxu0 %v176
  %223 = vmatprep.subr.bf16.mxu0 0
  %224 = vmatpush1.bf16.msra.mxu0 %v177
  %225 = vmatprep.subr.bf16.mxu0 0
  %226 = vmatpush1.bf16.msra.mxu0 %v178
  %227 = vmatprep.mubr.bf16.mxu0 %v59
  %228 = vmatmul.mubr.bf16.gmra.mrb[0].mxu0 %v58
  %v229 = vpop.f32.mrb[0].mxu0
  %v230 = vadd.f32 %v97, %v229
  %v231 = vpop.f32.mrb[0].mxu0
  %v232 = vpop.f32.mrb[0].mxu0
  %v233 = vpop.f32.mrb[0].mxu0
  %234 = vdwg.mxu0
  %vm235 = vcmask 64512
  %v237 = vsel %vm235, %v54, 0
  %239 = vmatprep.subr.mxu0 0.0
  %240 = vmatpush1.msra.mxu0 %v230
  %241 = vmatprep.subr.mxu0 0.0
  %242 = vmatpush1.msra.mxu0 0.0
  %243 = vmatprep.subr.mxu0 0.0
  %244 = vmatpush1.msra.mxu0 0.0
  %245 = vmatprep.subr.mxu0 0.0
  %246 = vmatpush1.msra.mxu0 0.0
  %247 = vmatprep.subr.mxu0 0.0
  %248 = vmatpush1.msra.mxu0 0.0
  %249 = vmatprep.subr.mxu0 0.0
  %250 = vmatpush1.msra.mxu0 0.0
  %251 = vmatprep.subr.mxu0 0.0
  %252 = vmatpush1.msra.mxu0 0.0
  %253 = vmatprep.subr.mxu0 0.0
  %254 = vmatpush1.msra.mxu0 0.0
  %255 = vmatprep.subr.mxu0 0.0
  %256 = vmatpush1.msra.mxu0 0.0
  %257 = vmatprep.subr.mxu0 0.0
  %258 = vmatpush1.msra.mxu0 0.0
  %259 = vmatprep.subr.mxu0 0.0
  %260 = vmatpush1.msra.mxu0 0.0
  %261 = vmatprep.subr.mxu0 0.0
  %262 = vmatpush1.msra.mxu0 0.0
  %263 = vmatprep.subr.mxu0 0.0
  %264 = vmatpush1.msra.mxu0 0.0
  %265 = vmatprep.subr.mxu0 0.0
  %266 = vmatpush1.msra.mxu0 0.0
  %267 = vmatprep.subr.mxu0 0.0
  %268 = vmatpush1.msra.mxu0 0.0
  %269 = vmatprep.subr.mxu0 0.0
  %270 = vmatpush1.msra.mxu0 0.0
  %271 = vmatprep.subr.mxu0 0.0
  %272 = vmatpush1.msra.mxu0 0.0
  %273 = vmatprep.subr.mxu0 0.0
  %274 = vmatpush1.msra.mxu0 0.0
  %275 = vmatprep.subr.mxu0 0.0
  %276 = vmatpush1.msra.mxu0 0.0
  %277 = vmatprep.subr.mxu0 0.0
  %278 = vmatpush1.msra.mxu0 0.0
  %279 = vmatprep.subr.mxu0 0.0
  %280 = vmatpush1.msra.mxu0 0.0
  %281 = vmatprep.subr.mxu0 0.0
  %282 = vmatpush1.msra.mxu0 0.0
  %283 = vmatprep.subr.mxu0 0.0
  %284 = vmatpush1.msra.mxu0 0.0
  %285 = vmatprep.subr.mxu0 0.0
  %286 = vmatpush1.msra.mxu0 0.0
  %287 = vmatprep.subr.mxu0 0.0
  %288 = vmatpush1.msra.mxu0 0.0
  %289 = vmatprep.subr.mxu0 0.0
  %290 = vmatpush1.msra.mxu0 0.0
  %291 = vmatprep.subr.mxu0 0.0
  %292 = vmatpush1.msra.mxu0 0.0
  %293 = vmatprep.subr.mxu0 0.0
  %294 = vmatpush1.msra.mxu0 0.0
  %295 = vmatprep.subr.mxu0 0.0
  %296 = vmatpush1.msra.mxu0 0.0
  %297 = vmatprep.subr.mxu0 0.0
  %298 = vmatpush1.msra.mxu0 0.0
  %299 = vmatprep.subr.mxu0 0.0
  %300 = vmatpush1.msra.mxu0 0.0
  %301 = vmatprep.subr.mxu0 0.0
  %302 = vmatpush1.msra.mxu0 0.0
  %303 = vmatprep.mubr.f32.mxu0 0.0
  %304 = vmatmul.mubr.f32.gmra.mrb[0].mxu0 %v237
  %v305 = vpop.f32.mrb[0].mxu0
  %v306 = vadd.f32 0.0, %v305
  %v307 = vpop.f32.mrb[0].mxu0
  %308 = vdwg.mxu0
  %v309 = vmul.f32 %v306, 0.25
  %v310 = vpack.c.bf16 %v309, %v309
  %v311 = vld [vmem:[%s5] sm:$0xf]
  %v312 = vld [vmem:[%s5 + $0x4] sm:$0xf]
  %v313 = vld [vmem:[%s5 + $0x8] sm:$0xf]
  %v314 = vld [vmem:[%s5 + $0xc] sm:$0xf]
  %v315 = vld [vmem:[%s5 + $0x10] sm:$0xf]
  %v316 = vld [vmem:[%s5 + $0x14] sm:$0xf]
  %v317 = vld [vmem:[%s5 + $0x18] sm:$0xf]
  %v318 = vld [vmem:[%s5 + $0x1c] sm:$0xf]
  %v319 = vld [vmem:[%s6] sm:$0x1]
  %v321 = vlaneseq
  %v322 = vshrl.u32 %v321, 7
  %v323 = vsub.s32 0, %v322
  %v324 = vrot.slane %v319, %v323
  %v334 = vunpack.c.l.b16 %v311
  %v335 = vunpack.c.l.b16 %v312
  %v336 = vunpack.c.l.b16 %v313
  %v337 = vunpack.c.l.b16 %v314
  %v338 = vunpack.c.l.b16 %v315
  %v339 = vunpack.c.l.b16 %v316
  %v340 = vunpack.c.l.b16 %v317
  %v341 = vunpack.c.l.b16 %v318
  %v342 = vpack.c.b16 %v335, %v334
  %v343 = vpack.c.b16 %v337, %v336
  %v344 = vpack.c.b16 %v339, %v338
  %v345 = vpack.c.b16 %v341, %v340
  %vm350 = vcmask 523264
  %v352 = vsel %vm350, %v310, 0
  %354 = vmatprep.subr.bf16.mxu0 0
  %355 = vmatpush1.bf16.msra.mxu0 %v342
  %356 = vmatprep.subr.bf16.mxu0 0
  %357 = vmatpush1.bf16.msra.mxu0 %v343
  %358 = vmatprep.subr.bf16.mxu0 0
  %359 = vmatpush1.bf16.msra.mxu0 %v344
  %360 = vmatprep.subr.bf16.mxu0 0
  %361 = vmatpush1.bf16.msra.mxu0 %v345
  %362 = vmatprep.subr.bf16.mxu0 0
  %363 = vmatpush1.bf16.msra.mxu0 0
  %364 = vmatprep.subr.bf16.mxu0 0
  %365 = vmatpush1.bf16.msra.mxu0 0
  %366 = vmatprep.subr.bf16.mxu0 0
  %367 = vmatpush1.bf16.msra.mxu0 0
  %368 = vmatprep.subr.bf16.mxu0 0
  %369 = vmatpush1.bf16.msra.mxu0 0
  %370 = vmatprep.subr.bf16.mxu0 0
  %371 = vmatpush1.bf16.msra.mxu0 0
  %372 = vmatprep.subr.bf16.mxu0 0
  %373 = vmatpush1.bf16.msra.mxu0 0
  %374 = vmatprep.subr.bf16.mxu0 0
  %375 = vmatpush1.bf16.msra.mxu0 0
  %376 = vmatprep.subr.bf16.mxu0 0
  %377 = vmatpush1.bf16.msra.mxu0 0
  %378 = vmatprep.subr.bf16.mxu0 0
  %379 = vmatpush1.bf16.msra.mxu0 0
  %380 = vmatprep.subr.bf16.mxu0 0
  %381 = vmatpush1.bf16.msra.mxu0 0
  %382 = vmatprep.subr.bf16.mxu0 0
  %383 = vmatpush1.bf16.msra.mxu0 0
  %384 = vmatprep.subr.bf16.mxu0 0
  %385 = vmatpush1.bf16.msra.mxu0 0
  %386 = vmatprep.mubr.bf16.mxu0 0
  %387 = vmatmul.mubr.bf16.gmra.mrb[0].mxu0 %v352
  %v388 = vpop.f32.mrb[0].mxu0
  %v389 = vadd.f32 %v324, %v388
  %v390 = vpop.f32.mrb[0].mxu0
  %v391 = vpop.f32.mrb[0].mxu0
  %v392 = vpop.f32.mrb[0].mxu0
  %393 = vdwg.mxu0
  %v394 = vld [vmem:[%s7] sm:$0xff]
  %v395 = vld [vmem:[%s7 + $0x8] sm:$0xff]
  %v396 = vpack.c.bf16 %v395, %v394
  %v397 = vld [vmem:[%s8] sm:$0xf]
  %v398 = vld [vmem:[%s8 + $0x4] sm:$0xf]
  %v399 = vld [vmem:[%s8 + $0x8] sm:$0xf]
  %v400 = vld [vmem:[%s8 + $0xc] sm:$0xf]
  %v401 = vld [vmem:[%s13] sm:$0x1]
  %v403 = vlaneseq
  %v404 = vshrl.u32 %v403, 7
  %v405 = vsub.s32 0, %v404
  %v406 = vrot.slane %v401, %v405
  %v412 = vunpack.c.l.b16 %v397
  %v413 = vunpack.c.l.b16 %v398
  %v414 = vunpack.c.l.b16 %v399
  %v415 = vunpack.c.l.b16 %v400
  %v416 = vpack.c.b16 %v413, %v412
  %v417 = vpack.c.b16 %v415, %v414
  %vm420 = vcmask 261120
  %v422 = vsel %vm420, %v396, 0
  %424 = vmatprep.subr.bf16.mxu0 0
  %425 = vmatpush1.bf16.msra.mxu0 %v416
  %426 = vmatprep.subr.bf16.mxu0 0
  %427 = vmatpush1.bf16.msra.mxu0 %v417
  %428 = vmatprep.subr.bf16.mxu0 0
  %429 = vmatpush1.bf16.msra.mxu0 0
  %430 = vmatprep.subr.bf16.mxu0 0
  %431 = vmatpush1.bf16.msra.mxu0 0
  %432 = vmatprep.subr.bf16.mxu0 0
  %433 = vmatpush1.bf16.msra.mxu0 0
  %434 = vmatprep.subr.bf16.mxu0 0
  %435 = vmatpush1.bf16.msra.mxu0 0
  %436 = vmatprep.subr.bf16.mxu0 0
  %437 = vmatpush1.bf16.msra.mxu0 0
  %438 = vmatprep.subr.bf16.mxu0 0
  %439 = vmatpush1.bf16.msra.mxu0 0
  %440 = vmatprep.subr.bf16.mxu0 0
  %441 = vmatpush1.bf16.msra.mxu0 0
  %442 = vmatprep.subr.bf16.mxu0 0
  %443 = vmatpush1.bf16.msra.mxu0 0
  %444 = vmatprep.subr.bf16.mxu0 0
  %445 = vmatpush1.bf16.msra.mxu0 0
  %446 = vmatprep.subr.bf16.mxu0 0
  %447 = vmatpush1.bf16.msra.mxu0 0
  %448 = vmatprep.subr.bf16.mxu0 0
  %449 = vmatpush1.bf16.msra.mxu0 0
  %450 = vmatprep.subr.bf16.mxu0 0
  %451 = vmatpush1.bf16.msra.mxu0 0
  %452 = vmatprep.subr.bf16.mxu0 0
  %453 = vmatpush1.bf16.msra.mxu0 0
  %454 = vmatprep.subr.bf16.mxu0 0
  %455 = vmatpush1.bf16.msra.mxu0 0
  %456 = vmatprep.mubr.bf16.mxu0 0
  %457 = vmatmul.mubr.bf16.gmra.mrb[0].mxu0 %v422
  %v458 = vpop.f32.mrb[0].mxu0
  %v459 = vadd.f32 %v406, %v458
  %v460 = vpop.f32.mrb[0].mxu0
  %v461 = vpop.f32.mrb[0].mxu0
  %v462 = vadd.f32 %v406, %v461
  %v463 = vpop.f32.mrb[0].mxu0
  %464 = vdwg.mxu0
  %v465 = vld [vmem:[%s9] sm:$0xff]
  %v466 = vld [vmem:[%s9 + $0x8] sm:$0xff]
  %v467 = vld [vmem:[%s9 + $0x10] sm:$0xff]
  %v468 = vld [vmem:[%s9 + $0x18] sm:$0xff]
  %v469 = vld [vmem:[%s10] sm:$0x1]
  %v470 = vld [vmem:[%s11] sm:$0xf]
  %v471 = vld [vmem:[%s11 + $0x4] sm:$0xf]
  %v472 = vld [vmem:[%s11 + $0x8] sm:$0xf]
  %v473 = vld [vmem:[%s11 + $0xc] sm:$0xf]
  %v474 = vld [vmem:[%s11 + $0x10] sm:$0xf]
  %v475 = vld [vmem:[%s11 + $0x14] sm:$0xf]
  %v476 = vld [vmem:[%s11 + $0x18] sm:$0xf]
  %v477 = vld [vmem:[%s11 + $0x1c] sm:$0xf]
  %v478 = vld [vmem:[%s12] sm:$0xf]
  %v479 = vld [vmem:[%s12 + $0x4] sm:$0xf]
  %v480 = vld [vmem:[%s12 + $0x8] sm:$0xf]
  %v481 = vld [vmem:[%s12 + $0xc] sm:$0xf]
  %v483 = vsel %vm420, %v389, 0
  %485 = vmatprep.subr.mxu0 0.0
  %486 = vmatpush1.msra.mxu0 %v465
  %487 = vmatprep.subr.mxu0 0.0
  %488 = vmatpush1.msra.mxu0 %v466
  %489 = vmatprep.subr.mxu0 0.0
  %490 = vmatpush1.msra.mxu0 %v467
  %491 = vmatprep.subr.mxu0 0.0
  %492 = vmatpush1.msra.mxu0 %v468
  %493 = vmatprep.subr.mxu0 0.0
  %494 = vmatpush1.msra.mxu0 0.0
  %495 = vmatprep.subr.mxu0 0.0
  %496 = vmatpush1.msra.mxu0 0.0
  %497 = vmatprep.subr.mxu0 0.0
  %498 = vmatpush1.msra.mxu0 0.0
  %499 = vmatprep.subr.mxu0 0.0
  %500 = vmatpush1.msra.mxu0 0.0
  %501 = vmatprep.subr.mxu0 0.0
  %502 = vmatpush1.msra.mxu0 0.0
  %503 = vmatprep.subr.mxu0 0.0
  %504 = vmatpush1.msra.mxu0 0.0
  %505 = vmatprep.subr.mxu0 0.0
  %506 = vmatpush1.msra.mxu0 0.0
  %507 = vmatprep.subr.mxu0 0.0
  %508 = vmatpush1.msra.mxu0 0.0
  %509 = vmatprep.subr.mxu0 0.0
  %510 = vmatpush1.msra.mxu0 0.0
  %511 = vmatprep.subr.mxu0 0.0
  %512 = vmatpush1.msra.mxu0 0.0
  %513 = vmatprep.subr.mxu0 0.0
  %514 = vmatpush1.msra.mxu0 0.0
  %515 = vmatprep.subr.mxu0 0.0
  %516 = vmatpush1.msra.mxu0 0.0
  %517 = vmatprep.subr.mxu0 0.0
  %518 = vmatpush1.msra.mxu0 0.0
  %519 = vmatprep.subr.mxu0 0.0
  %520 = vmatpush1.msra.mxu0 0.0
  %521 = vmatprep.subr.mxu0 0.0
  %522 = vmatpush1.msra.mxu0 0.0
  %523 = vmatprep.subr.mxu0 0.0
  %524 = vmatpush1.msra.mxu0 0.0
  %525 = vmatprep.subr.mxu0 0.0
  %526 = vmatpush1.msra.mxu0 0.0
  %527 = vmatprep.subr.mxu0 0.0
  %528 = vmatpush1.msra.mxu0 0.0
  %529 = vmatprep.subr.mxu0 0.0
  %530 = vmatpush1.msra.mxu0 0.0
  %531 = vmatprep.subr.mxu0 0.0
  %532 = vmatpush1.msra.mxu0 0.0
  %533 = vmatprep.subr.mxu0 0.0
  %534 = vmatpush1.msra.mxu0 0.0
  %535 = vmatprep.subr.mxu0 0.0
  %536 = vmatpush1.msra.mxu0 0.0
  %537 = vmatprep.subr.mxu0 0.0
  %538 = vmatpush1.msra.mxu0 0.0
  %539 = vmatprep.subr.mxu0 0.0
  %540 = vmatpush1.msra.mxu0 0.0
  %541 = vmatprep.subr.mxu0 0.0
  %542 = vmatpush1.msra.mxu0 0.0
  %543 = vmatprep.subr.mxu0 0.0
  %544 = vmatpush1.msra.mxu0 0.0
  %545 = vmatprep.subr.mxu0 0.0
  %546 = vmatpush1.msra.mxu0 0.0
  %547 = vmatprep.subr.mxu0 0.0
  %548 = vmatpush1.msra.mxu0 0.0
  %549 = vmatprep.mubr.f32.mxu0 0.0
  %550 = vmatmul.mubr.f32.gmra.mrb[0].mxu0 %v483
  %v551 = vpop.f32.mrb[0].mxu0
  %v552 = vadd.f32 0.0, %v551
  %v553 = vpop.f32.mrb[0].mxu0
  %554 = vdwg.mxu0
  %vm555 = vcmask 15360
  %v557 = vsel %vm555, %v55, 0
  %vm559 = vcmask 1041408
  %v561 = vsel %vm559, %v552, 0
  %563 = vmatprep.subr.mxu0 0.0
  %564 = vmatpush1.msra.mxu0 %v561
  %565 = vmatprep.subr.mxu0 0.0
  %566 = vmatpush1.msra.mxu0 0.0
  %567 = vmatprep.subr.mxu0 0.0
  %568 = vmatpush1.msra.mxu0 0.0
  %569 = vmatprep.subr.mxu0 0.0
  %570 = vmatpush1.msra.mxu0 0.0
  %571 = vmatprep.subr.mxu0 0.0
  %572 = vmatpush1.msra.mxu0 0.0
  %573 = vmatprep.subr.mxu0 0.0
  %574 = vmatpush1.msra.mxu0 0.0
  %575 = vmatprep.subr.mxu0 0.0
  %576 = vmatpush1.msra.mxu0 0.0
  %577 = vmatprep.subr.mxu0 0.0
  %578 = vmatpush1.msra.mxu0 0.0
  %579 = vmatprep.subr.mxu0 0.0
  %580 = vmatpush1.msra.mxu0 0.0
  %581 = vmatprep.subr.mxu0 0.0
  %582 = vmatpush1.msra.mxu0 0.0
  %583 = vmatprep.subr.mxu0 0.0
  %584 = vmatpush1.msra.mxu0 0.0
  %585 = vmatprep.subr.mxu0 0.0
  %586 = vmatpush1.msra.mxu0 0.0
  %587 = vmatprep.subr.mxu0 0.0
  %588 = vmatpush1.msra.mxu0 0.0
  %589 = vmatprep.subr.mxu0 0.0
  %590 = vmatpush1.msra.mxu0 0.0
  %591 = vmatprep.subr.mxu0 0.0
  %592 = vmatpush1.msra.mxu0 0.0
  %593 = vmatprep.subr.mxu0 0.0
  %594 = vmatpush1.msra.mxu0 0.0
  %595 = vmatprep.subr.mxu0 0.0
  %596 = vmatpush1.msra.mxu0 0.0
  %597 = vmatprep.subr.mxu0 0.0
  %598 = vmatpush1.msra.mxu0 0.0
  %599 = vmatprep.subr.mxu0 0.0
  %600 = vmatpush1.msra.mxu0 0.0
  %601 = vmatprep.subr.mxu0 0.0
  %602 = vmatpush1.msra.mxu0 0.0
  %603 = vmatprep.subr.mxu0 0.0
  %604 = vmatpush1.msra.mxu0 0.0
  %605 = vmatprep.subr.mxu0 0.0
  %606 = vmatpush1.msra.mxu0 0.0
  %607 = vmatprep.subr.mxu0 0.0
  %608 = vmatpush1.msra.mxu0 0.0
  %609 = vmatprep.subr.mxu0 0.0
  %610 = vmatpush1.msra.mxu0 0.0
  %611 = vmatprep.subr.mxu0 0.0
  %612 = vmatpush1.msra.mxu0 0.0
  %613 = vmatprep.subr.mxu0 0.0
  %614 = vmatpush1.msra.mxu0 0.0
  %615 = vmatprep.subr.mxu0 0.0
  %616 = vmatpush1.msra.mxu0 0.0
  %617 = vmatprep.subr.mxu0 0.0
  %618 = vmatpush1.msra.mxu0 0.0
  %619 = vmatprep.subr.mxu0 0.0
  %620 = vmatpush1.msra.mxu0 0.0
  %621 = vmatprep.subr.mxu0 0.0
  %622 = vmatpush1.msra.mxu0 0.0
  %623 = vmatprep.subr.mxu0 0.0
  %624 = vmatpush1.msra.mxu0 0.0
  %625 = vmatprep.subr.mxu0 0.0
  %626 = vmatpush1.msra.mxu0 0.0
  %627 = vmatprep.mubr.f32.mxu0 0.0
  %628 = vmatmul.mubr.f32.gmra.mrb[0].mxu0 %v557
  %v629 = vpop.f32.mrb[0].mxu0
  %v630 = vadd.f32 0.0, %v629
  %v631 = vpop.f32.mrb[0].mxu0
  %632 = vdwg.mxu0
  %634 = vrot.lane.b32.xlu0 %v630, 64
  %v635 = vpop.permute.xlu0 %634
  %v637 = vadd.f32 %v230, %v635
  %v638 = vtanh.pop %v637
  %v640 = vlaneseq
  %v641 = vshrl.u32 %v640, 7
  %v642 = vsub.s32 0, %v641
  %v643 = vrot.slane %v469, %v642
  %644 = vrot.lane.b32.xlu0 %v643, 64
  %v645 = vpop.permute.xlu0 %644
  %v647 = vmul.f32 %v638, %v645
  %649 = vrot.lane.b32.xlu0 %v647, 64
  %v650 = vpop.permute.xlu0 %649
  %v652 = vsel %vm420, %v650, 0.0
  %653 = vadd.xlane.f32.xlu0 %v652
  %v654 = vpop.xlane.xlu0 %653
  %v655 = vmul.f32 %v654, 1.442695
  %v656 = vpow.pop %v655
  %v657 = vmul.f32 %v656, %v230
  %658 = vmatprep.subr.mxu0 0.0
  %659 = vmatpush1.msra.mxu0 %v657
  %660 = vmatprep.subr.mxu0 0.0
  %661 = vmatpush1.msra.mxu0 0.0
  %662 = vmatprep.subr.mxu0 0.0
  %663 = vmatpush1.msra.mxu0 0.0
  %664 = vmatprep.subr.mxu0 0.0
  %665 = vmatpush1.msra.mxu0 0.0
  %666 = vmatprep.subr.mxu0 0.0
  %667 = vmatpush1.msra.mxu0 0.0
  %668 = vmatprep.subr.mxu0 0.0
  %669 = vmatpush1.msra.mxu0 0.0
  %670 = vmatprep.subr.mxu0 0.0
  %671 = vmatpush1.msra.mxu0 0.0
  %672 = vmatprep.subr.mxu0 0.0
  %673 = vmatpush1.msra.mxu0 0.0
  %674 = vmatprep.subr.mxu0 0.0
  %675 = vmatpush1.msra.mxu0 0.0
  %676 = vmatprep.subr.mxu0 0.0
  %677 = vmatpush1.msra.mxu0 0.0
  %678 = vmatprep.subr.mxu0 0.0
  %679 = vmatpush1.msra.mxu0 0.0
  %680 = vmatprep.subr.mxu0 0.0
  %681 = vmatpush1.msra.mxu0 0.0
  %682 = vmatprep.subr.mxu0 0.0
  %683 = vmatpush1.msra.mxu0 0.0
  %684 = vmatprep.subr.mxu0 0.0
  %685 = vmatpush1.msra.mxu0 0.0
  %686 = vmatprep.subr.mxu0 0.0
  %687 = vmatpush1.msra.mxu0 0.0
  %688 = vmatprep.subr.mxu0 0.0
  %689 = vmatpush1.msra.mxu0 0.0
  %690 = vmatprep.subr.mxu0 0.0
  %691 = vmatpush1.msra.mxu0 0.0
  %692 = vmatprep.subr.mxu0 0.0
  %693 = vmatpush1.msra.mxu0 0.0
  %694 = vmatprep.subr.mxu0 0.0
  %695 = vmatpush1.msra.mxu0 0.0
  %696 = vmatprep.subr.mxu0 0.0
  %697 = vmatpush1.msra.mxu0 0.0
  %698 = vmatprep.subr.mxu0 0.0
  %699 = vmatpush1.msra.mxu0 0.0
  %700 = vmatprep.subr.mxu0 0.0
  %701 = vmatpush1.msra.mxu0 0.0
  %702 = vmatprep.subr.mxu0 0.0
  %703 = vmatpush1.msra.mxu0 0.0
  %704 = vmatprep.subr.mxu0 0.0
  %705 = vmatpush1.msra.mxu0 0.0
  %706 = vmatprep.subr.mxu0 0.0
  %707 = vmatpush1.msra.mxu0 0.0
  %708 = vmatprep.subr.mxu0 0.0
  %709 = vmatpush1.msra.mxu0 0.0
  %710 = vmatprep.subr.mxu0 0.0
  %711 = vmatpush1.msra.mxu0 0.0
  %712 = vmatprep.subr.mxu0 0.0
  %713 = vmatpush1.msra.mxu0 0.0
  %714 = vmatprep.subr.mxu0 0.0
  %715 = vmatpush1.msra.mxu0 0.0
  %716 = vmatprep.subr.mxu0 0.0
  %717 = vmatpush1.msra.mxu0 0.0
  %718 = vmatprep.subr.mxu0 0.0
  %719 = vmatpush1.msra.mxu0 0.0
  %720 = vmatprep.subr.mxu0 0.0
  %721 = vmatpush1.msra.mxu0 0.0
  %722 = vmatprep.mubr.f32.mxu0 0.0
  %723 = vmatmul.mubr.f32.gmra.mrb[0].mxu0 %v237
  %v724 = vpop.f32.mrb[0].mxu0
  %v725 = vadd.f32 0.0, %v724
  %v726 = vpop.f32.mrb[0].mxu0
  %727 = vdwg.mxu0
  %v728 = vrcp.pop %v725
  %730 = vset.pattern.permute.xlu0 96
  %731 = vperm.xlu0 %730, %v728
  %v732 = vpop.permute.xlu0 %731
  %v734 = vmul.f32 %v725, %v732
  %v735 = vpack.c.bf16 %v734, %v734
  %v744 = vunpack.c.l.b16 %v470
  %v745 = vunpack.c.l.b16 %v471
  %v746 = vunpack.c.l.b16 %v472
  %v747 = vunpack.c.l.b16 %v473
  %v748 = vunpack.c.l.b16 %v474
  %v749 = vunpack.c.l.b16 %v475
  %v750 = vunpack.c.l.b16 %v476
  %v751 = vunpack.c.l.b16 %v477
  %v752 = vpack.c.b16 %v745, %v744
  %v753 = vpack.c.b16 %v747, %v746
  %v754 = vpack.c.b16 %v749, %v748
  %v755 = vpack.c.b16 %v751, %v750
  %v761 = vsel %vm350, %v735, 0
  %763 = vmatprep.subr.bf16.mxu0 0
  %764 = vmatpush1.bf16.msra.mxu0 %v752
  %765 = vmatprep.subr.bf16.mxu0 0
  %766 = vmatpush1.bf16.msra.mxu0 %v753
  %767 = vmatprep.subr.bf16.mxu0 0
  %768 = vmatpush1.bf16.msra.mxu0 %v754
  %769 = vmatprep.subr.bf16.mxu0 0
  %770 = vmatpush1.bf16.msra.mxu0 %v755
  %771 = vmatprep.subr.bf16.mxu0 0
  %772 = vmatpush1.bf16.msra.mxu0 0
  %773 = vmatprep.subr.bf16.mxu0 0
  %774 = vmatpush1.bf16.msra.mxu0 0
  %775 = vmatprep.subr.bf16.mxu0 0
  %776 = vmatpush1.bf16.msra.mxu0 0
  %777 = vmatprep.subr.bf16.mxu0 0
  %778 = vmatpush1.bf16.msra.mxu0 0
  %779 = vmatprep.subr.bf16.mxu0 0
  %780 = vmatpush1.bf16.msra.mxu0 0
  %781 = vmatprep.subr.bf16.mxu0 0
  %782 = vmatpush1.bf16.msra.mxu0 0
  %783 = vmatprep.subr.bf16.mxu0 0
  %784 = vmatpush1.bf16.msra.mxu0 0
  %785 = vmatprep.subr.bf16.mxu0 0
  %786 = vmatpush1.bf16.msra.mxu0 0
  %787 = vmatprep.subr.bf16.mxu0 0
  %788 = vmatpush1.bf16.msra.mxu0 0
  %789 = vmatprep.subr.bf16.mxu0 0
  %790 = vmatpush1.bf16.msra.mxu0 0
  %791 = vmatprep.subr.bf16.mxu0 0
  %792 = vmatpush1.bf16.msra.mxu0 0
  %793 = vmatprep.subr.bf16.mxu0 0
  %794 = vmatpush1.bf16.msra.mxu0 0
  %795 = vmatprep.mubr.bf16.mxu0 0
  %796 = vmatmul.mubr.bf16.gmra.mrb[0].mxu0 %v761
  %v797 = vpop.f32.mrb[0].mxu0
  %v798 = vadd.f32 0.0, %v797
  %v799 = vpop.f32.mrb[0].mxu0
  %v800 = vpop.f32.mrb[0].mxu0
  %v801 = vpop.f32.mrb[0].mxu0
  %802 = vdwg.mxu0
  %v803 = vadd.f32 %v459, %v798
  %v804 = vpack.c.bf16 %v389, %v389
  %v809 = vunpack.c.l.b16 %v478
  %v810 = vunpack.c.l.b16 %v479
  %v811 = vunpack.c.l.b16 %v480
  %v812 = vunpack.c.l.b16 %v481
  %v813 = vpack.c.b16 %v810, %v809
  %v814 = vpack.c.b16 %v812, %v811
  %v818 = vsel %vm420, %v804, 0
  %820 = vmatprep.subr.bf16.mxu0 0
  %821 = vmatpush1.bf16.msra.mxu0 %v813
  %822 = vmatprep.subr.bf16.mxu0 0
  %823 = vmatpush1.bf16.msra.mxu0 %v814
  %824 = vmatprep.subr.bf16.mxu0 0
  %825 = vmatpush1.bf16.msra.mxu0 0
  %826 = vmatprep.subr.bf16.mxu0 0
  %827 = vmatpush1.bf16.msra.mxu0 0
  %828 = vmatprep.subr.bf16.mxu0 0
  %829 = vmatpush1.bf16.msra.mxu0 0
  %830 = vmatprep.subr.bf16.mxu0 0
  %831 = vmatpush1.bf16.msra.mxu0 0
  %832 = vmatprep.subr.bf16.mxu0 0
  %833 = vmatpush1.bf16.msra.mxu0 0
  %834 = vmatprep.subr.bf16.mxu0 0
  %835 = vmatpush1.bf16.msra.mxu0 0
  %836 = vmatprep.subr.bf16.mxu0 0
  %837 = vmatpush1.bf16.msra.mxu0 0
  %838 = vmatprep.subr.bf16.mxu0 0
  %839 = vmatpush1.bf16.msra.mxu0 0
  %840 = vmatprep.subr.bf16.mxu0 0
  %841 = vmatpush1.bf16.msra.mxu0 0
  %842 = vmatprep.subr.bf16.mxu0 0
  %843 = vmatpush1.bf16.msra.mxu0 0
  %844 = vmatprep.subr.bf16.mxu0 0
  %845 = vmatpush1.bf16.msra.mxu0 0
  %846 = vmatprep.subr.bf16.mxu0 0
  %847 = vmatpush1.bf16.msra.mxu0 0
  %848 = vmatprep.subr.bf16.mxu0 0
  %849 = vmatpush1.bf16.msra.mxu0 0
  %850 = vmatprep.subr.bf16.mxu0 0
  %851 = vmatpush1.bf16.msra.mxu0 0
  %852 = vmatprep.mubr.bf16.mxu0 0
  %853 = vmatmul.mubr.bf16.gmra.mrb[0].mxu0 %v818
  %v854 = vpop.f32.mrb[0].mxu0
  %v855 = vadd.f32 0.0, %v854
  %v856 = vpop.f32.mrb[0].mxu0
  %v857 = vpop.f32.mrb[0].mxu0
  %v858 = vpop.f32.mrb[0].mxu0
  %859 = vdwg.mxu0
  %v860 = vadd.f32 %v803, %v855
  %v861 = vxor.u32 %v860, 2147483648
  %v862 = vmul.f32 %v861, 1.442695
  %v863 = vpow.pop %v862
  %v864 = vadd.f32 %v863, 1.0
  %v865 = vrcp.pop %v864
  %v866 = vmul.f32 1.0, %v865
  %v867 = vtanh.pop %v860
  %v868 = vmul.f32 %v866, %v389
  %870 = vrot.lane.b32.xlu0 %v867, 32
  %v871 = vpop.permute.xlu0 %870
  %v873 = vmul.f32 %v866, %v871
  %875 = vrot.lane.b32.xlu0 %v873, 32
  %v876 = vpop.permute.xlu0 %875
  %v878 = vadd.f32 %v868, %v876
  %v879 = vtanh.pop %v878
  %881 = vrot.lane.b32.xlu0 %v879, 32
  %v882 = vpop.permute.xlu0 %881
  %v884 = vmul.f32 %v866, %v882
  %886 = vrot.lane.b32.xlu0 %v884, 64
  %v887 = vpop.permute.xlu0 %886
  %v888 = vsel %vm420, %v887, 0
  %890 = vmatprep.subr.mxu0 0.0
  %891 = vmatpush1.msra.mxu0 %v465
  %892 = vmatprep.subr.mxu0 0.0
  %893 = vmatpush1.msra.mxu0 %v466
  %894 = vmatprep.subr.mxu0 0.0
  %895 = vmatpush1.msra.mxu0 %v467
  %896 = vmatprep.subr.mxu0 0.0
  %897 = vmatpush1.msra.mxu0 %v468
  %898 = vmatprep.subr.mxu0 0.0
  %899 = vmatpush1.msra.mxu0 0.0
  %900 = vmatprep.subr.mxu0 0.0
  %901 = vmatpush1.msra.mxu0 0.0
  %902 = vmatprep.subr.mxu0 0.0
  %903 = vmatpush1.msra.mxu0 0.0
  %904 = vmatprep.subr.mxu0 0.0
  %905 = vmatpush1.msra.mxu0 0.0
  %906 = vmatprep.subr.mxu0 0.0
  %907 = vmatpush1.msra.mxu0 0.0
  %908 = vmatprep.subr.mxu0 0.0
  %909 = vmatpush1.msra.mxu0 0.0
  %910 = vmatprep.subr.mxu0 0.0
  %911 = vmatpush1.msra.mxu0 0.0
  %912 = vmatprep.subr.mxu0 0.0
  %913 = vmatpush1.msra.mxu0 0.0
  %914 = vmatprep.subr.mxu0 0.0
  %915 = vmatpush1.msra.mxu0 0.0
  %916 = vmatprep.subr.mxu0 0.0
  %917 = vmatpush1.msra.mxu0 0.0
  %918 = vmatprep.subr.mxu0 0.0
  %919 = vmatpush1.msra.mxu0 0.0
  %920 = vmatprep.subr.mxu0 0.0
  %921 = vmatpush1.msra.mxu0 0.0
  %922 = vmatprep.subr.mxu0 0.0
  %923 = vmatpush1.msra.mxu0 0.0
  %924 = vmatprep.subr.mxu0 0.0
  %925 = vmatpush1.msra.mxu0 0.0
  %926 = vmatprep.subr.mxu0 0.0
  %927 = vmatpush1.msra.mxu0 0.0
  %928 = vmatprep.subr.mxu0 0.0
  %929 = vmatpush1.msra.mxu0 0.0
  %930 = vmatprep.subr.mxu0 0.0
  %931 = vmatpush1.msra.mxu0 0.0
  %932 = vmatprep.subr.mxu0 0.0
  %933 = vmatpush1.msra.mxu0 0.0
  %934 = vmatprep.subr.mxu0 0.0
  %935 = vmatpush1.msra.mxu0 0.0
  %936 = vmatprep.subr.mxu0 0.0
  %937 = vmatpush1.msra.mxu0 0.0
  %938 = vmatprep.subr.mxu0 0.0
  %939 = vmatpush1.msra.mxu0 0.0
  %940 = vmatprep.subr.mxu0 0.0
  %941 = vmatpush1.msra.mxu0 0.0
  %942 = vmatprep.subr.mxu0 0.0
  %943 = vmatpush1.msra.mxu0 0.0
  %944 = vmatprep.subr.mxu0 0.0
  %945 = vmatpush1.msra.mxu0 0.0
  %946 = vmatprep.subr.mxu0 0.0
  %947 = vmatpush1.msra.mxu0 0.0
  %948 = vmatprep.subr.mxu0 0.0
  %949 = vmatpush1.msra.mxu0 0.0
  %950 = vmatprep.subr.mxu0 0.0
  %951 = vmatpush1.msra.mxu0 0.0
  %952 = vmatprep.subr.mxu0 0.0
  %953 = vmatpush1.msra.mxu0 0.0
  %954 = vmatprep.mubr.f32.mxu0 0.0
  %955 = vmatmul.mubr.f32.gmra.mrb[0].mxu0 %v888
  %v956 = vpop.f32.mrb[0].mxu0
  %v957 = vadd.f32 0.0, %v956
  %v958 = vpop.f32.mrb[0].mxu0
  %959 = vdwg.mxu0
  %v961 = vsel %vm559, %v957, 0
  %963 = vmatprep.subr.mxu0 0.0
  %964 = vmatpush1.msra.mxu0 %v961
  %965 = vmatprep.subr.mxu0 0.0
  %966 = vmatpush1.msra.mxu0 0.0
  %967 = vmatprep.subr.mxu0 0.0
  %968 = vmatpush1.msra.mxu0 0.0
  %969 = vmatprep.subr.mxu0 0.0
  %970 = vmatpush1.msra.mxu0 0.0
  %971 = vmatprep.subr.mxu0 0.0
  %972 = vmatpush1.msra.mxu0 0.0
  %973 = vmatprep.subr.mxu0 0.0
  %974 = vmatpush1.msra.mxu0 0.0
  %975 = vmatprep.subr.mxu0 0.0
  %976 = vmatpush1.msra.mxu0 0.0
  %977 = vmatprep.subr.mxu0 0.0
  %978 = vmatpush1.msra.mxu0 0.0
  %979 = vmatprep.subr.mxu0 0.0
  %980 = vmatpush1.msra.mxu0 0.0
  %981 = vmatprep.subr.mxu0 0.0
  %982 = vmatpush1.msra.mxu0 0.0
  %983 = vmatprep.subr.mxu0 0.0
  %984 = vmatpush1.msra.mxu0 0.0
  %985 = vmatprep.subr.mxu0 0.0
  %986 = vmatpush1.msra.mxu0 0.0
  %987 = vmatprep.subr.mxu0 0.0
  %988 = vmatpush1.msra.mxu0 0.0
  %989 = vmatprep.subr.mxu0 0.0
  %990 = vmatpush1.msra.mxu0 0.0
  %991 = vmatprep.subr.mxu0 0.0
  %992 = vmatpush1.msra.mxu0 0.0
  %993 = vmatprep.subr.mxu0 0.0
  %994 = vmatpush1.msra.mxu0 0.0
  %995 = vmatprep.subr.mxu0 0.0
  %996 = vmatpush1.msra.mxu0 0.0
  %997 = vmatprep.subr.mxu0 0.0
  %998 = vmatpush1.msra.mxu0 0.0
  %999 = vmatprep.subr.mxu0 0.0
  %1000 = vmatpush1.msra.mxu0 0.0
  %1001 = vmatprep.subr.mxu0 0.0
  %1002 = vmatpush1.msra.mxu0 0.0
  %1003 = vmatprep.subr.mxu0 0.0
  %1004 = vmatpush1.msra.mxu0 0.0
  %1005 = vmatprep.subr.mxu0 0.0
  %1006 = vmatpush1.msra.mxu0 0.0
  %1007 = vmatprep.subr.mxu0 0.0
  %1008 = vmatpush1.msra.mxu0 0.0
  %1009 = vmatprep.subr.mxu0 0.0
  %1010 = vmatpush1.msra.mxu0 0.0
  %1011 = vmatprep.subr.mxu0 0.0
  %1012 = vmatpush1.msra.mxu0 0.0
  %1013 = vmatprep.subr.mxu0 0.0
  %1014 = vmatpush1.msra.mxu0 0.0
  %1015 = vmatprep.subr.mxu0 0.0
  %1016 = vmatpush1.msra.mxu0 0.0
  %1017 = vmatprep.subr.mxu0 0.0
  %1018 = vmatpush1.msra.mxu0 0.0
  %1019 = vmatprep.subr.mxu0 0.0
  %1020 = vmatpush1.msra.mxu0 0.0
  %1021 = vmatprep.subr.mxu0 0.0
  %1022 = vmatpush1.msra.mxu0 0.0
  %1023 = vmatprep.subr.mxu0 0.0
  %1024 = vmatpush1.msra.mxu0 0.0
  %1025 = vmatprep.subr.mxu0 0.0
  %1026 = vmatpush1.msra.mxu0 0.0
  %1027 = vmatprep.mubr.f32.mxu0 0.0
  %1028 = vmatmul.mubr.f32.gmra.mrb[0].mxu0 %v557
  %v1029 = vpop.f32.mrb[0].mxu0
  %v1030 = vadd.f32 0.0, %v1029
  %v1031 = vpop.f32.mrb[0].mxu0
  %1032 = vdwg.mxu0
  %1034 = vrot.lane.b32.xlu0 %v1030, 64
  %v1035 = vpop.permute.xlu0 %1034
  %v1037 = vadd.f32 %v230, %v1035
  %v1038 = vtanh.pop %v1037
  %v1039 = vmul.f32 %v1038, %v645
  %1041 = vrot.lane.b32.xlu0 %v1039, 64
  %v1042 = vpop.permute.xlu0 %1041
  %v1044 = vsel %vm420, %v1042, 0.0
  %1045 = vadd.xlane.f32.xlu0 %v1044
  %v1046 = vpop.xlane.xlu0 %1045
  %v1047 = vmul.f32 %v1046, 1.442695
  %v1048 = vpow.pop %v1047
  %v1049 = vmul.f32 %v1048, %v230
  %1050 = vmatprep.subr.mxu0 0.0
  %1051 = vmatpush1.msra.mxu0 %v1049
  %1052 = vmatprep.subr.mxu0 0.0
  %1053 = vmatpush1.msra.mxu0 0.0
  %1054 = vmatprep.subr.mxu0 0.0
  %1055 = vmatpush1.msra.mxu0 0.0
  %1056 = vmatprep.subr.mxu0 0.0
  %1057 = vmatpush1.msra.mxu0 0.0
  %1058 = vmatprep.subr.mxu0 0.0
  %1059 = vmatpush1.msra.mxu0 0.0
  %1060 = vmatprep.subr.mxu0 0.0
  %1061 = vmatpush1.msra.mxu0 0.0
  %1062 = vmatprep.subr.mxu0 0.0
  %1063 = vmatpush1.msra.mxu0 0.0
  %1064 = vmatprep.subr.mxu0 0.0
  %1065 = vmatpush1.msra.mxu0 0.0
  %1066 = vmatprep.subr.mxu0 0.0
  %1067 = vmatpush1.msra.mxu0 0.0
  %1068 = vmatprep.subr.mxu0 0.0
  %1069 = vmatpush1.msra.mxu0 0.0
  %1070 = vmatprep.subr.mxu0 0.0
  %1071 = vmatpush1.msra.mxu0 0.0
  %1072 = vmatprep.subr.mxu0 0.0
  %1073 = vmatpush1.msra.mxu0 0.0
  %1074 = vmatprep.subr.mxu0 0.0
  %1075 = vmatpush1.msra.mxu0 0.0
  %1076 = vmatprep.subr.mxu0 0.0
  %1077 = vmatpush1.msra.mxu0 0.0
  %1078 = vmatprep.subr.mxu0 0.0
  %1079 = vmatpush1.msra.mxu0 0.0
  %1080 = vmatprep.subr.mxu0 0.0
  %1081 = vmatpush1.msra.mxu0 0.0
  %1082 = vmatprep.subr.mxu0 0.0
  %1083 = vmatpush1.msra.mxu0 0.0
  %1084 = vmatprep.subr.mxu0 0.0
  %1085 = vmatpush1.msra.mxu0 0.0
  %1086 = vmatprep.subr.mxu0 0.0
  %1087 = vmatpush1.msra.mxu0 0.0
  %1088 = vmatprep.subr.mxu0 0.0
  %1089 = vmatpush1.msra.mxu0 0.0
  %1090 = vmatprep.subr.mxu0 0.0
  %1091 = vmatpush1.msra.mxu0 0.0
  %1092 = vmatprep.subr.mxu0 0.0
  %1093 = vmatpush1.msra.mxu0 0.0
  %1094 = vmatprep.subr.mxu0 0.0
  %1095 = vmatpush1.msra.mxu0 0.0
  %1096 = vmatprep.subr.mxu0 0.0
  %1097 = vmatpush1.msra.mxu0 0.0
  %1098 = vmatprep.subr.mxu0 0.0
  %1099 = vmatpush1.msra.mxu0 0.0
  %1100 = vmatprep.subr.mxu0 0.0
  %1101 = vmatpush1.msra.mxu0 0.0
  %1102 = vmatprep.subr.mxu0 0.0
  %1103 = vmatpush1.msra.mxu0 0.0
  %1104 = vmatprep.subr.mxu0 0.0
  %1105 = vmatpush1.msra.mxu0 0.0
  %1106 = vmatprep.subr.mxu0 0.0
  %1107 = vmatpush1.msra.mxu0 0.0
  %1108 = vmatprep.subr.mxu0 0.0
  %1109 = vmatpush1.msra.mxu0 0.0
  %1110 = vmatprep.subr.mxu0 0.0
  %1111 = vmatpush1.msra.mxu0 0.0
  %1112 = vmatprep.subr.mxu0 0.0
  %1113 = vmatpush1.msra.mxu0 0.0
  %1114 = vmatprep.mubr.f32.mxu0 0.0
  %1115 = vmatmul.mubr.f32.gmra.mrb[0].mxu0 %v237
  %v1116 = vpop.f32.mrb[0].mxu0
  %v1117 = vadd.f32 0.0, %v1116
  %v1118 = vpop.f32.mrb[0].mxu0
  %1119 = vdwg.mxu0
  %v1120 = vrcp.pop %v1117
  %1122 = vset.pattern.permute.xlu0 96
  %1123 = vperm.xlu0 %1122, %v1120
  %v1124 = vpop.permute.xlu0 %1123
  %v1126 = vmul.f32 %v1117, %v1124
  %v1127 = vpack.c.bf16 %v1126, %v1126
  %v1129 = vsel %vm350, %v1127, 0
  %1131 = vmatprep.subr.bf16.mxu0 0
  %1132 = vmatpush1.bf16.msra.mxu0 %v752
  %1133 = vmatprep.subr.bf16.mxu0 0
  %1134 = vmatpush1.bf16.msra.mxu0 %v753
  %1135 = vmatprep.subr.bf16.mxu0 0
  %1136 = vmatpush1.bf16.msra.mxu0 %v754
  %1137 = vmatprep.subr.bf16.mxu0 0
  %1138 = vmatpush1.bf16.msra.mxu0 %v755
  %1139 = vmatprep.subr.bf16.mxu0 0
  %1140 = vmatpush1.bf16.msra.mxu0 0
  %1141 = vmatprep.subr.bf16.mxu0 0
  %1142 = vmatpush1.bf16.msra.mxu0 0
  %1143 = vmatprep.subr.bf16.mxu0 0
  %1144 = vmatpush1.bf16.msra.mxu0 0
  %1145 = vmatprep.subr.bf16.mxu0 0
  %1146 = vmatpush1.bf16.msra.mxu0 0
  %1147 = vmatprep.subr.bf16.mxu0 0
  %1148 = vmatpush1.bf16.msra.mxu0 0
  %1149 = vmatprep.subr.bf16.mxu0 0
  %1150 = vmatpush1.bf16.msra.mxu0 0
  %1151 = vmatprep.subr.bf16.mxu0 0
  %1152 = vmatpush1.bf16.msra.mxu0 0
  %1153 = vmatprep.subr.bf16.mxu0 0
  %1154 = vmatpush1.bf16.msra.mxu0 0
  %1155 = vmatprep.subr.bf16.mxu0 0
  %1156 = vmatpush1.bf16.msra.mxu0 0
  %1157 = vmatprep.subr.bf16.mxu0 0
  %1158 = vmatpush1.bf16.msra.mxu0 0
  %1159 = vmatprep.subr.bf16.mxu0 0
  %1160 = vmatpush1.bf16.msra.mxu0 0
  %1161 = vmatprep.subr.bf16.mxu0 0
  %1162 = vmatpush1.bf16.msra.mxu0 0
  %1163 = vmatprep.mubr.bf16.mxu0 0
  %1164 = vmatmul.mubr.bf16.gmra.mrb[0].mxu0 %v1129
  %v1165 = vpop.f32.mrb[0].mxu0
  %v1166 = vadd.f32 0.0, %v1165
  %v1167 = vpop.f32.mrb[0].mxu0
  %v1168 = vpop.f32.mrb[0].mxu0
  %v1169 = vpop.f32.mrb[0].mxu0
  %1170 = vdwg.mxu0
  %v1172 = vrot.slane %v1166, 6
  %v1174 = vadd.f32 %v459, %v1172
  %v1175 = vpack.c.bf16 %v884, %v884
  %1177 = vrot.lane.b32.xlu0 %v1175, 64
  %v1178 = vpop.permute.xlu0 %1177
  %v1180 = vsel %vm420, %v1178, 0
  %1182 = vmatprep.subr.bf16.mxu0 0
  %1183 = vmatpush1.bf16.msra.mxu0 %v813
  %1184 = vmatprep.subr.bf16.mxu0 0
  %1185 = vmatpush1.bf16.msra.mxu0 %v814
  %1186 = vmatprep.subr.bf16.mxu0 0
  %1187 = vmatpush1.bf16.msra.mxu0 0
  %1188 = vmatprep.subr.bf16.mxu0 0
  %1189 = vmatpush1.bf16.msra.mxu0 0
  %1190 = vmatprep.subr.bf16.mxu0 0
  %1191 = vmatpush1.bf16.msra.mxu0 0
  %1192 = vmatprep.subr.bf16.mxu0 0
  %1193 = vmatpush1.bf16.msra.mxu0 0
  %1194 = vmatprep.subr.bf16.mxu0 0
  %1195 = vmatpush1.bf16.msra.mxu0 0
  %1196 = vmatprep.subr.bf16.mxu0 0
  %1197 = vmatpush1.bf16.msra.mxu0 0
  %1198 = vmatprep.subr.bf16.mxu0 0
  %1199 = vmatpush1.bf16.msra.mxu0 0
  %1200 = vmatprep.subr.bf16.mxu0 0
  %1201 = vmatpush1.bf16.msra.mxu0 0
  %1202 = vmatprep.subr.bf16.mxu0 0
  %1203 = vmatpush1.bf16.msra.mxu0 0
  %1204 = vmatprep.subr.bf16.mxu0 0
  %1205 = vmatpush1.bf16.msra.mxu0 0
  %1206 = vmatprep.subr.bf16.mxu0 0
  %1207 = vmatpush1.bf16.msra.mxu0 0
  %1208 = vmatprep.subr.bf16.mxu0 0
  %1209 = vmatpush1.bf16.msra.mxu0 0
  %1210 = vmatprep.subr.bf16.mxu0 0
  %1211 = vmatpush1.bf16.msra.mxu0 0
  %1212 = vmatprep.subr.bf16.mxu0 0
  %1213 = vmatpush1.bf16.msra.mxu0 0
  %1214 = vmatprep.mubr.bf16.mxu0 0
  %1215 = vmatmul.mubr.bf16.gmra.mrb[0].mxu0 %v1180
  %v1216 = vpop.f32.mrb[0].mxu0
  %v1217 = vadd.f32 0.0, %v1216
  %v1218 = vpop.f32.mrb[0].mxu0
  %v1219 = vpop.f32.mrb[0].mxu0
  %v1220 = vpop.f32.mrb[0].mxu0
  %1221 = vdwg.mxu0
  %v1223 = vrot.slane %v1217, 6
  %v1225 = vadd.f32 %v1174, %v1223
  %v1226 = vxor.u32 %v1225, 2147483648
  %v1227 = vmul.f32 %v1226, 1.442695
  %v1228 = vpow.pop %v1227
  %v1229 = vadd.f32 %v1228, 1.0
  %v1230 = vrcp.pop %v1229
  %v1231 = vmul.f32 1.0, %v1230
  %v1232 = vtanh.pop %v1225
  %v1234 = vrot.slane %v878, 6
  %v1236 = vmul.f32 %v1231, %v1234
  %1238 = vrot.lane.b32.xlu0 %v1232, 32
  %v1239 = vpop.permute.xlu0 %1238
  %v1241 = vmul.f32 %v1231, %v1239
  %1243 = vrot.lane.b32.xlu0 %v1241, 32
  %v1244 = vpop.permute.xlu0 %1243
  %v1246 = vadd.f32 %v1236, %v1244
  %v1247 = vtanh.pop %v1246
  %1249 = vrot.lane.b32.xlu0 %v1247, 32
  %v1250 = vpop.permute.xlu0 %1249
  %v1252 = vmul.f32 %v1231, %v1250
  %v1254 = vrot.slane %v1252, 2
  %1255 = vrot.lane.b32.xlu0 %v1254, 64
  %v1256 = vpop.permute.xlu0 %1255
  %v1257 = vsel %vm420, %v1256, 0
  %1259 = vmatprep.subr.mxu0 0.0
  %1260 = vmatpush1.msra.mxu0 %v465
  %1261 = vmatprep.subr.mxu0 0.0
  %1262 = vmatpush1.msra.mxu0 %v466
  %1263 = vmatprep.subr.mxu0 0.0
  %1264 = vmatpush1.msra.mxu0 %v467
  %1265 = vmatprep.subr.mxu0 0.0
  %1266 = vmatpush1.msra.mxu0 %v468
  %1267 = vmatprep.subr.mxu0 0.0
  %1268 = vmatpush1.msra.mxu0 0.0
  %1269 = vmatprep.subr.mxu0 0.0
  %1270 = vmatpush1.msra.mxu0 0.0
  %1271 = vmatprep.subr.mxu0 0.0
  %1272 = vmatpush1.msra.mxu0 0.0
  %1273 = vmatprep.subr.mxu0 0.0
  %1274 = vmatpush1.msra.mxu0 0.0
  %1275 = vmatprep.subr.mxu0 0.0
  %1276 = vmatpush1.msra.mxu0 0.0
  %1277 = vmatprep.subr.mxu0 0.0
  %1278 = vmatpush1.msra.mxu0 0.0
  %1279 = vmatprep.subr.mxu0 0.0
  %1280 = vmatpush1.msra.mxu0 0.0
  %1281 = vmatprep.subr.mxu0 0.0
  %1282 = vmatpush1.msra.mxu0 0.0
  %1283 = vmatprep.subr.mxu0 0.0
  %1284 = vmatpush1.msra.mxu0 0.0
  %1285 = vmatprep.subr.mxu0 0.0
  %1286 = vmatpush1.msra.mxu0 0.0
  %1287 = vmatprep.subr.mxu0 0.0
  %1288 = vmatpush1.msra.mxu0 0.0
  %1289 = vmatprep.subr.mxu0 0.0
  %1290 = vmatpush1.msra.mxu0 0.0
  %1291 = vmatprep.subr.mxu0 0.0
  %1292 = vmatpush1.msra.mxu0 0.0
  %1293 = vmatprep.subr.mxu0 0.0
  %1294 = vmatpush1.msra.mxu0 0.0
  %1295 = vmatprep.subr.mxu0 0.0
  %1296 = vmatpush1.msra.mxu0 0.0
  %1297 = vmatprep.subr.mxu0 0.0
  %1298 = vmatpush1.msra.mxu0 0.0
  %1299 = vmatprep.subr.mxu0 0.0
  %1300 = vmatpush1.msra.mxu0 0.0
  %1301 = vmatprep.subr.mxu0 0.0
  %1302 = vmatpush1.msra.mxu0 0.0
  %1303 = vmatprep.subr.mxu0 0.0
  %1304 = vmatpush1.msra.mxu0 0.0
  %1305 = vmatprep.subr.mxu0 0.0
  %1306 = vmatpush1.msra.mxu0 0.0
  %1307 = vmatprep.subr.mxu0 0.0
  %1308 = vmatpush1.msra.mxu0 0.0
  %1309 = vmatprep.subr.mxu0 0.0
  %1310 = vmatpush1.msra.mxu0 0.0
  %1311 = vmatprep.subr.mxu0 0.0
  %1312 = vmatpush1.msra.mxu0 0.0
  %1313 = vmatprep.subr.mxu0 0.0
  %1314 = vmatpush1.msra.mxu0 0.0
  %1315 = vmatprep.subr.mxu0 0.0
  %1316 = vmatpush1.msra.mxu0 0.0
  %1317 = vmatprep.subr.mxu0 0.0
  %1318 = vmatpush1.msra.mxu0 0.0
  %1319 = vmatprep.subr.mxu0 0.0
  %1320 = vmatpush1.msra.mxu0 0.0
  %1321 = vmatprep.subr.mxu0 0.0
  %1322 = vmatpush1.msra.mxu0 0.0
  %1323 = vmatprep.mubr.f32.mxu0 0.0
  %1324 = vmatmul.mubr.f32.gmra.mrb[0].mxu0 %v1257
  %v1325 = vpop.f32.mrb[0].mxu0
  %v1326 = vadd.f32 0.0, %v1325
  %v1327 = vpop.f32.mrb[0].mxu0
  %1328 = vdwg.mxu0
  %v1330 = vsel %vm559, %v1326, 0
  %1332 = vmatprep.subr.mxu0 0.0
  %1333 = vmatpush1.msra.mxu0 %v1330
  %1334 = vmatprep.subr.mxu0 0.0
  %1335 = vmatpush1.msra.mxu0 0.0
  %1336 = vmatprep.subr.mxu0 0.0
  %1337 = vmatpush1.msra.mxu0 0.0
  %1338 = vmatprep.subr.mxu0 0.0
  %1339 = vmatpush1.msra.mxu0 0.0
  %1340 = vmatprep.subr.mxu0 0.0
  %1341 = vmatpush1.msra.mxu0 0.0
  %1342 = vmatprep.subr.mxu0 0.0
  %1343 = vmatpush1.msra.mxu0 0.0
  %1344 = vmatprep.subr.mxu0 0.0
  %1345 = vmatpush1.msra.mxu0 0.0
  %1346 = vmatprep.subr.mxu0 0.0
  %1347 = vmatpush1.msra.mxu0 0.0
  %1348 = vmatprep.subr.mxu0 0.0
  %1349 = vmatpush1.msra.mxu0 0.0
  %1350 = vmatprep.subr.mxu0 0.0
  %1351 = vmatpush1.msra.mxu0 0.0
  %1352 = vmatprep.subr.mxu0 0.0
  %1353 = vmatpush1.msra.mxu0 0.0
  %1354 = vmatprep.subr.mxu0 0.0
  %1355 = vmatpush1.msra.mxu0 0.0
  %1356 = vmatprep.subr.mxu0 0.0
  %1357 = vmatpush1.msra.mxu0 0.0
  %1358 = vmatprep.subr.mxu0 0.0
  %1359 = vmatpush1.msra.mxu0 0.0
  %1360 = vmatprep.subr.mxu0 0.0
  %1361 = vmatpush1.msra.mxu0 0.0
  %1362 = vmatprep.subr.mxu0 0.0
  %1363 = vmatpush1.msra.mxu0 0.0
  %1364 = vmatprep.subr.mxu0 0.0
  %1365 = vmatpush1.msra.mxu0 0.0
  %1366 = vmatprep.subr.mxu0 0.0
  %1367 = vmatpush1.msra.mxu0 0.0
  %1368 = vmatprep.subr.mxu0 0.0
  %1369 = vmatpush1.msra.mxu0 0.0
  %1370 = vmatprep.subr.mxu0 0.0
  %1371 = vmatpush1.msra.mxu0 0.0
  %1372 = vmatprep.subr.mxu0 0.0
  %1373 = vmatpush1.msra.mxu0 0.0
  %1374 = vmatprep.subr.mxu0 0.0
  %1375 = vmatpush1.msra.mxu0 0.0
  %1376 = vmatprep.subr.mxu0 0.0
  %1377 = vmatpush1.msra.mxu0 0.0
  %1378 = vmatprep.subr.mxu0 0.0
  %1379 = vmatpush1.msra.mxu0 0.0
  %1380 = vmatprep.subr.mxu0 0.0
  %1381 = vmatpush1.msra.mxu0 0.0
  %1382 = vmatprep.subr.mxu0 0.0
  %1383 = vmatpush1.msra.mxu0 0.0
  %1384 = vmatprep.subr.mxu0 0.0
  %1385 = vmatpush1.msra.mxu0 0.0
  %1386 = vmatprep.subr.mxu0 0.0
  %1387 = vmatpush1.msra.mxu0 0.0
  %1388 = vmatprep.subr.mxu0 0.0
  %1389 = vmatpush1.msra.mxu0 0.0
  %1390 = vmatprep.subr.mxu0 0.0
  %1391 = vmatpush1.msra.mxu0 0.0
  %1392 = vmatprep.subr.mxu0 0.0
  %1393 = vmatpush1.msra.mxu0 0.0
  %1394 = vmatprep.subr.mxu0 0.0
  %1395 = vmatpush1.msra.mxu0 0.0
  %1396 = vmatprep.mubr.f32.mxu0 0.0
  %1397 = vmatmul.mubr.f32.gmra.mrb[0].mxu0 %v557
  %v1398 = vpop.f32.mrb[0].mxu0
  %v1399 = vadd.f32 0.0, %v1398
  %v1400 = vpop.f32.mrb[0].mxu0
  %1401 = vdwg.mxu0
  %1403 = vrot.lane.b32.xlu0 %v1399, 64
  %v1404 = vpop.permute.xlu0 %1403
  %v1406 = vadd.f32 %v230, %v1404
  %v1407 = vtanh.pop %v1406
  %v1408 = vmul.f32 %v1407, %v645
  %1410 = vrot.lane.b32.xlu0 %v1408, 64
  %v1411 = vpop.permute.xlu0 %1410
  %v1413 = vsel %vm420, %v1411, 0.0
  %1414 = vadd.xlane.f32.xlu0 %v1413
  %v1415 = vpop.xlane.xlu0 %1414
  %v1416 = vmul.f32 %v1415, 1.442695
  %v1417 = vpow.pop %v1416
  %v1418 = vmul.f32 %v1417, %v230
  %1419 = vmatprep.subr.mxu0 0.0
  %1420 = vmatpush1.msra.mxu0 %v1418
  %1421 = vmatprep.subr.mxu0 0.0
  %1422 = vmatpush1.msra.mxu0 0.0
  %1423 = vmatprep.subr.mxu0 0.0
  %1424 = vmatpush1.msra.mxu0 0.0
  %1425 = vmatprep.subr.mxu0 0.0
  %1426 = vmatpush1.msra.mxu0 0.0
  %1427 = vmatprep.subr.mxu0 0.0
  %1428 = vmatpush1.msra.mxu0 0.0
  %1429 = vmatprep.subr.mxu0 0.0
  %1430 = vmatpush1.msra.mxu0 0.0
  %1431 = vmatprep.subr.mxu0 0.0
  %1432 = vmatpush1.msra.mxu0 0.0
  %1433 = vmatprep.subr.mxu0 0.0
  %1434 = vmatpush1.msra.mxu0 0.0
  %1435 = vmatprep.subr.mxu0 0.0
  %1436 = vmatpush1.msra.mxu0 0.0
  %1437 = vmatprep.subr.mxu0 0.0
  %1438 = vmatpush1.msra.mxu0 0.0
  %1439 = vmatprep.subr.mxu0 0.0
  %1440 = vmatpush1.msra.mxu0 0.0
  %1441 = vmatprep.subr.mxu0 0.0
  %1442 = vmatpush1.msra.mxu0 0.0
  %1443 = vmatprep.subr.mxu0 0.0
  %1444 = vmatpush1.msra.mxu0 0.0
  %1445 = vmatprep.subr.mxu0 0.0
  %1446 = vmatpush1.msra.mxu0 0.0
  %1447 = vmatprep.subr.mxu0 0.0
  %1448 = vmatpush1.msra.mxu0 0.0
  %1449 = vmatprep.subr.mxu0 0.0
  %1450 = vmatpush1.msra.mxu0 0.0
  %1451 = vmatprep.subr.mxu0 0.0
  %1452 = vmatpush1.msra.mxu0 0.0
  %1453 = vmatprep.subr.mxu0 0.0
  %1454 = vmatpush1.msra.mxu0 0.0
  %1455 = vmatprep.subr.mxu0 0.0
  %1456 = vmatpush1.msra.mxu0 0.0
  %1457 = vmatprep.subr.mxu0 0.0
  %1458 = vmatpush1.msra.mxu0 0.0
  %1459 = vmatprep.subr.mxu0 0.0
  %1460 = vmatpush1.msra.mxu0 0.0
  %1461 = vmatprep.subr.mxu0 0.0
  %1462 = vmatpush1.msra.mxu0 0.0
  %1463 = vmatprep.subr.mxu0 0.0
  %1464 = vmatpush1.msra.mxu0 0.0
  %1465 = vmatprep.subr.mxu0 0.0
  %1466 = vmatpush1.msra.mxu0 0.0
  %1467 = vmatprep.subr.mxu0 0.0
  %1468 = vmatpush1.msra.mxu0 0.0
  %1469 = vmatprep.subr.mxu0 0.0
  %1470 = vmatpush1.msra.mxu0 0.0
  %1471 = vmatprep.subr.mxu0 0.0
  %1472 = vmatpush1.msra.mxu0 0.0
  %1473 = vmatprep.subr.mxu0 0.0
  %1474 = vmatpush1.msra.mxu0 0.0
  %1475 = vmatprep.subr.mxu0 0.0
  %1476 = vmatpush1.msra.mxu0 0.0
  %1477 = vmatprep.subr.mxu0 0.0
  %1478 = vmatpush1.msra.mxu0 0.0
  %1479 = vmatprep.subr.mxu0 0.0
  %1480 = vmatpush1.msra.mxu0 0.0
  %1481 = vmatprep.subr.mxu0 0.0
  %1482 = vmatpush1.msra.mxu0 0.0
  %1483 = vmatprep.mubr.f32.mxu0 0.0
  %1484 = vmatmul.mubr.f32.gmra.mrb[0].mxu0 %v237
  %v1485 = vpop.f32.mrb[0].mxu0
  %v1486 = vadd.f32 0.0, %v1485
  %v1487 = vpop.f32.mrb[0].mxu0
  %1488 = vdwg.mxu0
  %v1489 = vrcp.pop %v1486
  %1491 = vset.pattern.permute.xlu0 96
  %1492 = vperm.xlu0 %1491, %v1489
  %v1493 = vpop.permute.xlu0 %1492
  %v1495 = vmul.f32 %v1486, %v1493
  %v1496 = vpack.c.bf16 %v1495, %v1495
  %v1498 = vsel %vm350, %v1496, 0
  %1500 = vmatprep.subr.bf16.mxu0 0
  %1501 = vmatpush1.bf16.msra.mxu0 %v752
  %1502 = vmatprep.subr.bf16.mxu0 0
  %1503 = vmatpush1.bf16.msra.mxu0 %v753
  %1504 = vmatprep.subr.bf16.mxu0 0
  %1505 = vmatpush1.bf16.msra.mxu0 %v754
  %1506 = vmatprep.subr.bf16.mxu0 0
  %1507 = vmatpush1.bf16.msra.mxu0 %v755
  %1508 = vmatprep.subr.bf16.mxu0 0
  %1509 = vmatpush1.bf16.msra.mxu0 0
  %1510 = vmatprep.subr.bf16.mxu0 0
  %1511 = vmatpush1.bf16.msra.mxu0 0
  %1512 = vmatprep.subr.bf16.mxu0 0
  %1513 = vmatpush1.bf16.msra.mxu0 0
  %1514 = vmatprep.subr.bf16.mxu0 0
  %1515 = vmatpush1.bf16.msra.mxu0 0
  %1516 = vmatprep.subr.bf16.mxu0 0
  %1517 = vmatpush1.bf16.msra.mxu0 0
  %1518 = vmatprep.subr.bf16.mxu0 0
  %1519 = vmatpush1.bf16.msra.mxu0 0
  %1520 = vmatprep.subr.bf16.mxu0 0
  %1521 = vmatpush1.bf16.msra.mxu0 0
  %1522 = vmatprep.subr.bf16.mxu0 0
  %1523 = vmatpush1.bf16.msra.mxu0 0
  %1524 = vmatprep.subr.bf16.mxu0 0
  %1525 = vmatpush1.bf16.msra.mxu0 0
  %1526 = vmatprep.subr.bf16.mxu0 0
  %1527 = vmatpush1.bf16.msra.mxu0 0
  %1528 = vmatprep.subr.bf16.mxu0 0
  %1529 = vmatpush1.bf16.msra.mxu0 0
  %1530 = vmatprep.subr.bf16.mxu0 0
  %1531 = vmatpush1.bf16.msra.mxu0 0
  %1532 = vmatprep.mubr.bf16.mxu0 0
  %1533 = vmatmul.mubr.bf16.gmra.mrb[0].mxu0 %v1498
  %v1534 = vpop.f32.mrb[0].mxu0
  %v1535 = vadd.f32 0.0, %v1534
  %v1536 = vpop.f32.mrb[0].mxu0
  %v1537 = vpop.f32.mrb[0].mxu0
  %v1538 = vpop.f32.mrb[0].mxu0
  %1539 = vdwg.mxu0
  %v1541 = vrot.slane %v1535, 4
  %v1543 = vadd.f32 %v459, %v1541
  %v1544 = vpack.c.bf16 %v1252, %v1252
  %v1546 = vrot.slane %v1544, 1
  %1547 = vrot.lane.b32.xlu0 %v1546, 64
  %v1548 = vpop.permute.xlu0 %1547
  %v1550 = vsel %vm420, %v1548, 0
  %1552 = vmatprep.subr.bf16.mxu0 0
  %1553 = vmatpush1.bf16.msra.mxu0 %v813
  %1554 = vmatprep.subr.bf16.mxu0 0
  %1555 = vmatpush1.bf16.msra.mxu0 %v814
  %1556 = vmatprep.subr.bf16.mxu0 0
  %1557 = vmatpush1.bf16.msra.mxu0 0
  %1558 = vmatprep.subr.bf16.mxu0 0
  %1559 = vmatpush1.bf16.msra.mxu0 0
  %1560 = vmatprep.subr.bf16.mxu0 0
  %1561 = vmatpush1.bf16.msra.mxu0 0
  %1562 = vmatprep.subr.bf16.mxu0 0
  %1563 = vmatpush1.bf16.msra.mxu0 0
  %1564 = vmatprep.subr.bf16.mxu0 0
  %1565 = vmatpush1.bf16.msra.mxu0 0
  %1566 = vmatprep.subr.bf16.mxu0 0
  %1567 = vmatpush1.bf16.msra.mxu0 0
  %1568 = vmatprep.subr.bf16.mxu0 0
  %1569 = vmatpush1.bf16.msra.mxu0 0
  %1570 = vmatprep.subr.bf16.mxu0 0
  %1571 = vmatpush1.bf16.msra.mxu0 0
  %1572 = vmatprep.subr.bf16.mxu0 0
  %1573 = vmatpush1.bf16.msra.mxu0 0
  %1574 = vmatprep.subr.bf16.mxu0 0
  %1575 = vmatpush1.bf16.msra.mxu0 0
  %1576 = vmatprep.subr.bf16.mxu0 0
  %1577 = vmatpush1.bf16.msra.mxu0 0
  %1578 = vmatprep.subr.bf16.mxu0 0
  %1579 = vmatpush1.bf16.msra.mxu0 0
  %1580 = vmatprep.subr.bf16.mxu0 0
  %1581 = vmatpush1.bf16.msra.mxu0 0
  %1582 = vmatprep.subr.bf16.mxu0 0
  %1583 = vmatpush1.bf16.msra.mxu0 0
  %1584 = vmatprep.mubr.bf16.mxu0 0
  %1585 = vmatmul.mubr.bf16.gmra.mrb[0].mxu0 %v1550
  %v1586 = vpop.f32.mrb[0].mxu0
  %v1587 = vadd.f32 0.0, %v1586
  %v1588 = vpop.f32.mrb[0].mxu0
  %v1589 = vpop.f32.mrb[0].mxu0
  %v1590 = vpop.f32.mrb[0].mxu0
  %1591 = vdwg.mxu0
  %v1593 = vrot.slane %v1587, 4
  %v1595 = vadd.f32 %v1543, %v1593
  %v1596 = vxor.u32 %v1595, 2147483648
  %v1597 = vmul.f32 %v1596, 1.442695
  %v1598 = vpow.pop %v1597
  %v1599 = vadd.f32 %v1598, 1.0
  %v1600 = vrcp.pop %v1599
  %v1601 = vmul.f32 1.0, %v1600
  %v1602 = vtanh.pop %v1595
  %v1604 = vrot.slane %v1246, 6
  %v1606 = vmul.f32 %v1601, %v1604
  %1608 = vrot.lane.b32.xlu0 %v1602, 32
  %v1609 = vpop.permute.xlu0 %1608
  %v1611 = vmul.f32 %v1601, %v1609
  %1613 = vrot.lane.b32.xlu0 %v1611, 32
  %v1614 = vpop.permute.xlu0 %1613
  %v1616 = vadd.f32 %v1606, %v1614
  %v1617 = vtanh.pop %v1616
  %1619 = vrot.lane.b32.xlu0 %v1617, 32
  %v1620 = vpop.permute.xlu0 %1619
  %v1622 = vmul.f32 %v1601, %v1620
  %v1624 = vrot.slane %v1622, 4
  %1625 = vrot.lane.b32.xlu0 %v1624, 64
  %v1626 = vpop.permute.xlu0 %1625
  %v1627 = vsel %vm420, %v1626, 0
  %1629 = vmatprep.subr.mxu0 0.0
  %1630 = vmatpush1.msra.mxu0 %v465
  %1631 = vmatprep.subr.mxu0 0.0
  %1632 = vmatpush1.msra.mxu0 %v466
  %1633 = vmatprep.subr.mxu0 0.0
  %1634 = vmatpush1.msra.mxu0 %v467
  %1635 = vmatprep.subr.mxu0 0.0
  %1636 = vmatpush1.msra.mxu0 %v468
  %1637 = vmatprep.subr.mxu0 0.0
  %1638 = vmatpush1.msra.mxu0 0.0
  %1639 = vmatprep.subr.mxu0 0.0
  %1640 = vmatpush1.msra.mxu0 0.0
  %1641 = vmatprep.subr.mxu0 0.0
  %1642 = vmatpush1.msra.mxu0 0.0
  %1643 = vmatprep.subr.mxu0 0.0
  %1644 = vmatpush1.msra.mxu0 0.0
  %1645 = vmatprep.subr.mxu0 0.0
  %1646 = vmatpush1.msra.mxu0 0.0
  %1647 = vmatprep.subr.mxu0 0.0
  %1648 = vmatpush1.msra.mxu0 0.0
  %1649 = vmatprep.subr.mxu0 0.0
  %1650 = vmatpush1.msra.mxu0 0.0
  %1651 = vmatprep.subr.mxu0 0.0
  %1652 = vmatpush1.msra.mxu0 0.0
  %1653 = vmatprep.subr.mxu0 0.0
  %1654 = vmatpush1.msra.mxu0 0.0
  %1655 = vmatprep.subr.mxu0 0.0
  %1656 = vmatpush1.msra.mxu0 0.0
  %1657 = vmatprep.subr.mxu0 0.0
  %1658 = vmatpush1.msra.mxu0 0.0
  %1659 = vmatprep.subr.mxu0 0.0
  %1660 = vmatpush1.msra.mxu0 0.0
  %1661 = vmatprep.subr.mxu0 0.0
  %1662 = vmatpush1.msra.mxu0 0.0
  %1663 = vmatprep.subr.mxu0 0.0
  %1664 = vmatpush1.msra.mxu0 0.0
  %1665 = vmatprep.subr.mxu0 0.0
  %1666 = vmatpush1.msra.mxu0 0.0
  %1667 = vmatprep.subr.mxu0 0.0
  %1668 = vmatpush1.msra.mxu0 0.0
  %1669 = vmatprep.subr.mxu0 0.0
  %1670 = vmatpush1.msra.mxu0 0.0
  %1671 = vmatprep.subr.mxu0 0.0
  %1672 = vmatpush1.msra.mxu0 0.0
  %1673 = vmatprep.subr.mxu0 0.0
  %1674 = vmatpush1.msra.mxu0 0.0
  %1675 = vmatprep.subr.mxu0 0.0
  %1676 = vmatpush1.msra.mxu0 0.0
  %1677 = vmatprep.subr.mxu0 0.0
  %1678 = vmatpush1.msra.mxu0 0.0
  %1679 = vmatprep.subr.mxu0 0.0
  %1680 = vmatpush1.msra.mxu0 0.0
  %1681 = vmatprep.subr.mxu0 0.0
  %1682 = vmatpush1.msra.mxu0 0.0
  %1683 = vmatprep.subr.mxu0 0.0
  %1684 = vmatpush1.msra.mxu0 0.0
  %1685 = vmatprep.subr.mxu0 0.0
  %1686 = vmatpush1.msra.mxu0 0.0
  %1687 = vmatprep.subr.mxu0 0.0
  %1688 = vmatpush1.msra.mxu0 0.0
  %1689 = vmatprep.subr.mxu0 0.0
  %1690 = vmatpush1.msra.mxu0 0.0
  %1691 = vmatprep.subr.mxu0 0.0
  %1692 = vmatpush1.msra.mxu0 0.0
  %1693 = vmatprep.mubr.f32.mxu0 0.0
  %1694 = vmatmul.mubr.f32.gmra.mrb[0].mxu0 %v1627
  %v1695 = vpop.f32.mrb[0].mxu0
  %v1696 = vadd.f32 0.0, %v1695
  %v1697 = vpop.f32.mrb[0].mxu0
  %1698 = vdwg.mxu0
  %v1700 = vsel %vm559, %v1696, 0
  %1702 = vmatprep.subr.mxu0 0.0
  %1703 = vmatpush1.msra.mxu0 %v1700
  %1704 = vmatprep.subr.mxu0 0.0
  %1705 = vmatpush1.msra.mxu0 0.0
  %1706 = vmatprep.subr.mxu0 0.0
  %1707 = vmatpush1.msra.mxu0 0.0
  %1708 = vmatprep.subr.mxu0 0.0
  %1709 = vmatpush1.msra.mxu0 0.0
  %1710 = vmatprep.subr.mxu0 0.0
  %1711 = vmatpush1.msra.mxu0 0.0
  %1712 = vmatprep.subr.mxu0 0.0
  %1713 = vmatpush1.msra.mxu0 0.0
  %1714 = vmatprep.subr.mxu0 0.0
  %1715 = vmatpush1.msra.mxu0 0.0
  %1716 = vmatprep.subr.mxu0 0.0
  %1717 = vmatpush1.msra.mxu0 0.0
  %1718 = vmatprep.subr.mxu0 0.0
  %1719 = vmatpush1.msra.mxu0 0.0
  %1720 = vmatprep.subr.mxu0 0.0
  %1721 = vmatpush1.msra.mxu0 0.0
  %1722 = vmatprep.subr.mxu0 0.0
  %1723 = vmatpush1.msra.mxu0 0.0
  %1724 = vmatprep.subr.mxu0 0.0
  %1725 = vmatpush1.msra.mxu0 0.0
  %1726 = vmatprep.subr.mxu0 0.0
  %1727 = vmatpush1.msra.mxu0 0.0
  %1728 = vmatprep.subr.mxu0 0.0
  %1729 = vmatpush1.msra.mxu0 0.0
  %1730 = vmatprep.subr.mxu0 0.0
  %1731 = vmatpush1.msra.mxu0 0.0
  %1732 = vmatprep.subr.mxu0 0.0
  %1733 = vmatpush1.msra.mxu0 0.0
  %1734 = vmatprep.subr.mxu0 0.0
  %1735 = vmatpush1.msra.mxu0 0.0
  %1736 = vmatprep.subr.mxu0 0.0
  %1737 = vmatpush1.msra.mxu0 0.0
  %1738 = vmatprep.subr.mxu0 0.0
  %1739 = vmatpush1.msra.mxu0 0.0
  %1740 = vmatprep.subr.mxu0 0.0
  %1741 = vmatpush1.msra.mxu0 0.0
  %1742 = vmatprep.subr.mxu0 0.0
  %1743 = vmatpush1.msra.mxu0 0.0
  %1744 = vmatprep.subr.mxu0 0.0
  %1745 = vmatpush1.msra.mxu0 0.0
  %1746 = vmatprep.subr.mxu0 0.0
  %1747 = vmatpush1.msra.mxu0 0.0
  %1748 = vmatprep.subr.mxu0 0.0
  %1749 = vmatpush1.msra.mxu0 0.0
  %1750 = vmatprep.subr.mxu0 0.0
  %1751 = vmatpush1.msra.mxu0 0.0
  %1752 = vmatprep.subr.mxu0 0.0
  %1753 = vmatpush1.msra.mxu0 0.0
  %1754 = vmatprep.subr.mxu0 0.0
  %1755 = vmatpush1.msra.mxu0 0.0
  %1756 = vmatprep.subr.mxu0 0.0
  %1757 = vmatpush1.msra.mxu0 0.0
  %1758 = vmatprep.subr.mxu0 0.0
  %1759 = vmatpush1.msra.mxu0 0.0
  %1760 = vmatprep.subr.mxu0 0.0
  %1761 = vmatpush1.msra.mxu0 0.0
  %1762 = vmatprep.subr.mxu0 0.0
  %1763 = vmatpush1.msra.mxu0 0.0
  %1764 = vmatprep.subr.mxu0 0.0
  %1765 = vmatpush1.msra.mxu0 0.0
  %1766 = vmatprep.mubr.f32.mxu0 0.0
  %1767 = vmatmul.mubr.f32.gmra.mrb[0].mxu0 %v557
  %v1768 = vpop.f32.mrb[0].mxu0
  %v1769 = vadd.f32 0.0, %v1768
  %v1770 = vpop.f32.mrb[0].mxu0
  %1771 = vdwg.mxu0
  %1773 = vrot.lane.b32.xlu0 %v1769, 64
  %v1774 = vpop.permute.xlu0 %1773
  %v1776 = vadd.f32 %v230, %v1774
  %v1777 = vtanh.pop %v1776
  %v1778 = vmul.f32 %v1777, %v645
  %1780 = vrot.lane.b32.xlu0 %v1778, 64
  %v1781 = vpop.permute.xlu0 %1780
  %v1783 = vsel %vm420, %v1781, 0.0
  %1784 = vadd.xlane.f32.xlu0 %v1783
  %v1785 = vpop.xlane.xlu0 %1784
  %v1786 = vmul.f32 %v1785, 1.442695
  %v1787 = vpow.pop %v1786
  %v1788 = vmul.f32 %v1787, %v230
  %1789 = vmatprep.subr.mxu0 0.0
  %1790 = vmatpush1.msra.mxu0 %v1788
  %1791 = vmatprep.subr.mxu0 0.0
  %1792 = vmatpush1.msra.mxu0 0.0
  %1793 = vmatprep.subr.mxu0 0.0
  %1794 = vmatpush1.msra.mxu0 0.0
  %1795 = vmatprep.subr.mxu0 0.0
  %1796 = vmatpush1.msra.mxu0 0.0
  %1797 = vmatprep.subr.mxu0 0.0
  %1798 = vmatpush1.msra.mxu0 0.0
  %1799 = vmatprep.subr.mxu0 0.0
  %1800 = vmatpush1.msra.mxu0 0.0
  %1801 = vmatprep.subr.mxu0 0.0
  %1802 = vmatpush1.msra.mxu0 0.0
  %1803 = vmatprep.subr.mxu0 0.0
  %1804 = vmatpush1.msra.mxu0 0.0
  %1805 = vmatprep.subr.mxu0 0.0
  %1806 = vmatpush1.msra.mxu0 0.0
  %1807 = vmatprep.subr.mxu0 0.0
  %1808 = vmatpush1.msra.mxu0 0.0
  %1809 = vmatprep.subr.mxu0 0.0
  %1810 = vmatpush1.msra.mxu0 0.0
  %1811 = vmatprep.subr.mxu0 0.0
  %1812 = vmatpush1.msra.mxu0 0.0
  %1813 = vmatprep.subr.mxu0 0.0
  %1814 = vmatpush1.msra.mxu0 0.0
  %1815 = vmatprep.subr.mxu0 0.0
  %1816 = vmatpush1.msra.mxu0 0.0
  %1817 = vmatprep.subr.mxu0 0.0
  %1818 = vmatpush1.msra.mxu0 0.0
  %1819 = vmatprep.subr.mxu0 0.0
  %1820 = vmatpush1.msra.mxu0 0.0
  %1821 = vmatprep.subr.mxu0 0.0
  %1822 = vmatpush1.msra.mxu0 0.0
  %1823 = vmatprep.subr.mxu0 0.0
  %1824 = vmatpush1.msra.mxu0 0.0
  %1825 = vmatprep.subr.mxu0 0.0
  %1826 = vmatpush1.msra.mxu0 0.0
  %1827 = vmatprep.subr.mxu0 0.0
  %1828 = vmatpush1.msra.mxu0 0.0
  %1829 = vmatprep.subr.mxu0 0.0
  %1830 = vmatpush1.msra.mxu0 0.0
  %1831 = vmatprep.subr.mxu0 0.0
  %1832 = vmatpush1.msra.mxu0 0.0
  %1833 = vmatprep.subr.mxu0 0.0
  %1834 = vmatpush1.msra.mxu0 0.0
  %1835 = vmatprep.subr.mxu0 0.0
  %1836 = vmatpush1.msra.mxu0 0.0
  %1837 = vmatprep.subr.mxu0 0.0
  %1838 = vmatpush1.msra.mxu0 0.0
  %1839 = vmatprep.subr.mxu0 0.0
  %1840 = vmatpush1.msra.mxu0 0.0
  %1841 = vmatprep.subr.mxu0 0.0
  %1842 = vmatpush1.msra.mxu0 0.0
  %1843 = vmatprep.subr.mxu0 0.0
  %1844 = vmatpush1.msra.mxu0 0.0
  %1845 = vmatprep.subr.mxu0 0.0
  %1846 = vmatpush1.msra.mxu0 0.0
  %1847 = vmatprep.subr.mxu0 0.0
  %1848 = vmatpush1.msra.mxu0 0.0
  %1849 = vmatprep.subr.mxu0 0.0
  %1850 = vmatpush1.msra.mxu0 0.0
  %1851 = vmatprep.subr.mxu0 0.0
  %1852 = vmatpush1.msra.mxu0 0.0
  %1853 = vmatprep.mubr.f32.mxu0 0.0
  %1854 = vmatmul.mubr.f32.gmra.mrb[0].mxu0 %v237
  %v1855 = vpop.f32.mrb[0].mxu0
  %v1856 = vadd.f32 0.0, %v1855
  %v1857 = vpop.f32.mrb[0].mxu0
  %1858 = vdwg.mxu0
  %v1859 = vrcp.pop %v1856
  %1861 = vset.pattern.permute.xlu0 96
  %1862 = vperm.xlu0 %1861, %v1859
  %v1863 = vpop.permute.xlu0 %1862
  %v1865 = vmul.f32 %v1856, %v1863
  %v1866 = vpack.c.bf16 %v1865, %v1865
  %v1868 = vsel %vm350, %v1866, 0
  %1870 = vmatprep.subr.bf16.mxu0 0
  %1871 = vmatpush1.bf16.msra.mxu0 %v752
  %1872 = vmatprep.subr.bf16.mxu0 0
  %1873 = vmatpush1.bf16.msra.mxu0 %v753
  %1874 = vmatprep.subr.bf16.mxu0 0
  %1875 = vmatpush1.bf16.msra.mxu0 %v754
  %1876 = vmatprep.subr.bf16.mxu0 0
  %1877 = vmatpush1.bf16.msra.mxu0 %v755
  %1878 = vmatprep.subr.bf16.mxu0 0
  %1879 = vmatpush1.bf16.msra.mxu0 0
  %1880 = vmatprep.subr.bf16.mxu0 0
  %1881 = vmatpush1.bf16.msra.mxu0 0
  %1882 = vmatprep.subr.bf16.mxu0 0
  %1883 = vmatpush1.bf16.msra.mxu0 0
  %1884 = vmatprep.subr.bf16.mxu0 0
  %1885 = vmatpush1.bf16.msra.mxu0 0
  %1886 = vmatprep.subr.bf16.mxu0 0
  %1887 = vmatpush1.bf16.msra.mxu0 0
  %1888 = vmatprep.subr.bf16.mxu0 0
  %1889 = vmatpush1.bf16.msra.mxu0 0
  %1890 = vmatprep.subr.bf16.mxu0 0
  %1891 = vmatpush1.bf16.msra.mxu0 0
  %1892 = vmatprep.subr.bf16.mxu0 0
  %1893 = vmatpush1.bf16.msra.mxu0 0
  %1894 = vmatprep.subr.bf16.mxu0 0
  %1895 = vmatpush1.bf16.msra.mxu0 0
  %1896 = vmatprep.subr.bf16.mxu0 0
  %1897 = vmatpush1.bf16.msra.mxu0 0
  %1898 = vmatprep.subr.bf16.mxu0 0
  %1899 = vmatpush1.bf16.msra.mxu0 0
  %1900 = vmatprep.subr.bf16.mxu0 0
  %1901 = vmatpush1.bf16.msra.mxu0 0
  %1902 = vmatprep.mubr.bf16.mxu0 0
  %1903 = vmatmul.mubr.bf16.gmra.mrb[0].mxu0 %v1868
  %v1904 = vpop.f32.mrb[0].mxu0
  %v1905 = vadd.f32 0.0, %v1904
  %v1906 = vpop.f32.mrb[0].mxu0
  %v1907 = vpop.f32.mrb[0].mxu0
  %v1908 = vpop.f32.mrb[0].mxu0
  %1909 = vdwg.mxu0
  %v1911 = vrot.slane %v1905, 2
  %v1913 = vadd.f32 %v459, %v1911
  %v1914 = vpack.c.bf16 %v1622, %v1622
  %v1916 = vrot.slane %v1914, 2
  %1917 = vrot.lane.b32.xlu0 %v1916, 64
  %v1918 = vpop.permute.xlu0 %1917
  %v1920 = vsel %vm420, %v1918, 0
  %1922 = vmatprep.subr.bf16.mxu0 0
  %1923 = vmatpush1.bf16.msra.mxu0 %v813
  %1924 = vmatprep.subr.bf16.mxu0 0
  %1925 = vmatpush1.bf16.msra.mxu0 %v814
  %1926 = vmatprep.subr.bf16.mxu0 0
  %1927 = vmatpush1.bf16.msra.mxu0 0
  %1928 = vmatprep.subr.bf16.mxu0 0
  %1929 = vmatpush1.bf16.msra.mxu0 0
  %1930 = vmatprep.subr.bf16.mxu0 0
  %1931 = vmatpush1.bf16.msra.mxu0 0
  %1932 = vmatprep.subr.bf16.mxu0 0
  %1933 = vmatpush1.bf16.msra.mxu0 0
  %1934 = vmatprep.subr.bf16.mxu0 0
  %1935 = vmatpush1.bf16.msra.mxu0 0
  %1936 = vmatprep.subr.bf16.mxu0 0
  %1937 = vmatpush1.bf16.msra.mxu0 0
  %1938 = vmatprep.subr.bf16.mxu0 0
  %1939 = vmatpush1.bf16.msra.mxu0 0
  %1940 = vmatprep.subr.bf16.mxu0 0
  %1941 = vmatpush1.bf16.msra.mxu0 0
  %1942 = vmatprep.subr.bf16.mxu0 0
  %1943 = vmatpush1.bf16.msra.mxu0 0
  %1944 = vmatprep.subr.bf16.mxu0 0
  %1945 = vmatpush1.bf16.msra.mxu0 0
  %1946 = vmatprep.subr.bf16.mxu0 0
  %1947 = vmatpush1.bf16.msra.mxu0 0
  %1948 = vmatprep.subr.bf16.mxu0 0
  %1949 = vmatpush1.bf16.msra.mxu0 0
  %1950 = vmatprep.subr.bf16.mxu0 0
  %1951 = vmatpush1.bf16.msra.mxu0 0
  %1952 = vmatprep.subr.bf16.mxu0 0
  %1953 = vmatpush1.bf16.msra.mxu0 0
  %1954 = vmatprep.mubr.bf16.mxu0 0
  %1955 = vmatmul.mubr.bf16.gmra.mrb[0].mxu0 %v1920
  %v1956 = vpop.f32.mrb[0].mxu0
  %v1957 = vadd.f32 0.0, %v1956
  %v1958 = vpop.f32.mrb[0].mxu0
  %v1959 = vpop.f32.mrb[0].mxu0
  %v1960 = vpop.f32.mrb[0].mxu0
  %1961 = vdwg.mxu0
  %v1963 = vrot.slane %v1957, 2
  %v1965 = vadd.f32 %v1913, %v1963
  %v1966 = vxor.u32 %v1965, 2147483648
  %v1967 = vmul.f32 %v1966, 1.442695
  %v1968 = vpow.pop %v1967
  %v1969 = vadd.f32 %v1968, 1.0
  %v1970 = vrcp.pop %v1969
  %v1971 = vmul.f32 1.0, %v1970
  %v1972 = vtanh.pop %v1965
  %v1974 = vrot.slane %v1616, 6
  %v1976 = vmul.f32 %v1971, %v1974
  %1978 = vrot.lane.b32.xlu0 %v1972, 32
  %v1979 = vpop.permute.xlu0 %1978
  %v1981 = vmul.f32 %v1971, %v1979
  %1983 = vrot.lane.b32.xlu0 %v1981, 32
  %v1984 = vpop.permute.xlu0 %1983
  %v1986 = vadd.f32 %v1976, %v1984
  %v1987 = vtanh.pop %v1986
  %1989 = vrot.lane.b32.xlu0 %v1987, 32
  %v1990 = vpop.permute.xlu0 %1989
  %v1992 = vmul.f32 %v1971, %v1990
  %v1994 = vrot.slane %v1992, 6
  %1995 = vrot.lane.b32.xlu0 %v1994, 64
  %v1996 = vpop.permute.xlu0 %1995
  %v1997 = vsel %vm420, %v1996, 0
  %1999 = vmatprep.subr.mxu0 0.0
  %2000 = vmatpush1.msra.mxu0 %v465
  %2001 = vmatprep.subr.mxu0 0.0
  %2002 = vmatpush1.msra.mxu0 %v466
  %2003 = vmatprep.subr.mxu0 0.0
  %2004 = vmatpush1.msra.mxu0 %v467
  %2005 = vmatprep.subr.mxu0 0.0
  %2006 = vmatpush1.msra.mxu0 %v468
  %2007 = vmatprep.subr.mxu0 0.0
  %2008 = vmatpush1.msra.mxu0 0.0
  %2009 = vmatprep.subr.mxu0 0.0
  %2010 = vmatpush1.msra.mxu0 0.0
  %2011 = vmatprep.subr.mxu0 0.0
  %2012 = vmatpush1.msra.mxu0 0.0
  %2013 = vmatprep.subr.mxu0 0.0
  %2014 = vmatpush1.msra.mxu0 0.0
  %2015 = vmatprep.subr.mxu0 0.0
  %2016 = vmatpush1.msra.mxu0 0.0
  %2017 = vmatprep.subr.mxu0 0.0
  %2018 = vmatpush1.msra.mxu0 0.0
  %2019 = vmatprep.subr.mxu0 0.0
  %2020 = vmatpush1.msra.mxu0 0.0
  %2021 = vmatprep.subr.mxu0 0.0
  %2022 = vmatpush1.msra.mxu0 0.0
  %2023 = vmatprep.subr.mxu0 0.0
  %2024 = vmatpush1.msra.mxu0 0.0
  %2025 = vmatprep.subr.mxu0 0.0
  %2026 = vmatpush1.msra.mxu0 0.0
  %2027 = vmatprep.subr.mxu0 0.0
  %2028 = vmatpush1.msra.mxu0 0.0
  %2029 = vmatprep.subr.mxu0 0.0
  %2030 = vmatpush1.msra.mxu0 0.0
  %2031 = vmatprep.subr.mxu0 0.0
  %2032 = vmatpush1.msra.mxu0 0.0
  %2033 = vmatprep.subr.mxu0 0.0
  %2034 = vmatpush1.msra.mxu0 0.0
  %2035 = vmatprep.subr.mxu0 0.0
  %2036 = vmatpush1.msra.mxu0 0.0
  %2037 = vmatprep.subr.mxu0 0.0
  %2038 = vmatpush1.msra.mxu0 0.0
  %2039 = vmatprep.subr.mxu0 0.0
  %2040 = vmatpush1.msra.mxu0 0.0
  %2041 = vmatprep.subr.mxu0 0.0
  %2042 = vmatpush1.msra.mxu0 0.0
  %2043 = vmatprep.subr.mxu0 0.0
  %2044 = vmatpush1.msra.mxu0 0.0
  %2045 = vmatprep.subr.mxu0 0.0
  %2046 = vmatpush1.msra.mxu0 0.0
  %2047 = vmatprep.subr.mxu0 0.0
  %2048 = vmatpush1.msra.mxu0 0.0
  %2049 = vmatprep.subr.mxu0 0.0
  %2050 = vmatpush1.msra.mxu0 0.0
  %2051 = vmatprep.subr.mxu0 0.0
  %2052 = vmatpush1.msra.mxu0 0.0
  %2053 = vmatprep.subr.mxu0 0.0
  %2054 = vmatpush1.msra.mxu0 0.0
  %2055 = vmatprep.subr.mxu0 0.0
  %2056 = vmatpush1.msra.mxu0 0.0
  %2057 = vmatprep.subr.mxu0 0.0
  %2058 = vmatpush1.msra.mxu0 0.0
  %2059 = vmatprep.subr.mxu0 0.0
  %2060 = vmatpush1.msra.mxu0 0.0
  %2061 = vmatprep.subr.mxu0 0.0
  %2062 = vmatpush1.msra.mxu0 0.0
  %2063 = vmatprep.mubr.f32.mxu0 0.0
  %2064 = vmatmul.mubr.f32.gmra.mrb[0].mxu0 %v1997
  %v2065 = vpop.f32.mrb[0].mxu0
  %v2066 = vadd.f32 0.0, %v2065
  %v2067 = vpop.f32.mrb[0].mxu0
  %2068 = vdwg.mxu0
  %v2070 = vsel %vm559, %v2066, 0
  %2072 = vmatprep.subr.mxu0 0.0
  %2073 = vmatpush1.msra.mxu0 %v2070
  %2074 = vmatprep.subr.mxu0 0.0
  %2075 = vmatpush1.msra.mxu0 0.0
  %2076 = vmatprep.subr.mxu0 0.0
  %2077 = vmatpush1.msra.mxu0 0.0
  %2078 = vmatprep.subr.mxu0 0.0
  %2079 = vmatpush1.msra.mxu0 0.0
  %2080 = vmatprep.subr.mxu0 0.0
  %2081 = vmatpush1.msra.mxu0 0.0
  %2082 = vmatprep.subr.mxu0 0.0
  %2083 = vmatpush1.msra.mxu0 0.0
  %2084 = vmatprep.subr.mxu0 0.0
  %2085 = vmatpush1.msra.mxu0 0.0
  %2086 = vmatprep.subr.mxu0 0.0
  %2087 = vmatpush1.msra.mxu0 0.0
  %2088 = vmatprep.subr.mxu0 0.0
  %2089 = vmatpush1.msra.mxu0 0.0
  %2090 = vmatprep.subr.mxu0 0.0
  %2091 = vmatpush1.msra.mxu0 0.0
  %2092 = vmatprep.subr.mxu0 0.0
  %2093 = vmatpush1.msra.mxu0 0.0
  %2094 = vmatprep.subr.mxu0 0.0
  %2095 = vmatpush1.msra.mxu0 0.0
  %2096 = vmatprep.subr.mxu0 0.0
  %2097 = vmatpush1.msra.mxu0 0.0
  %2098 = vmatprep.subr.mxu0 0.0
  %2099 = vmatpush1.msra.mxu0 0.0
  %2100 = vmatprep.subr.mxu0 0.0
  %2101 = vmatpush1.msra.mxu0 0.0
  %2102 = vmatprep.subr.mxu0 0.0
  %2103 = vmatpush1.msra.mxu0 0.0
  %2104 = vmatprep.subr.mxu0 0.0
  %2105 = vmatpush1.msra.mxu0 0.0
  %2106 = vmatprep.subr.mxu0 0.0
  %2107 = vmatpush1.msra.mxu0 0.0
  %2108 = vmatprep.subr.mxu0 0.0
  %2109 = vmatpush1.msra.mxu0 0.0
  %2110 = vmatprep.subr.mxu0 0.0
  %2111 = vmatpush1.msra.mxu0 0.0
  %2112 = vmatprep.subr.mxu0 0.0
  %2113 = vmatpush1.msra.mxu0 0.0
  %2114 = vmatprep.subr.mxu0 0.0
  %2115 = vmatpush1.msra.mxu0 0.0
  %2116 = vmatprep.subr.mxu0 0.0
  %2117 = vmatpush1.msra.mxu0 0.0
  %2118 = vmatprep.subr.mxu0 0.0
  %2119 = vmatpush1.msra.mxu0 0.0
  %2120 = vmatprep.subr.mxu0 0.0
  %2121 = vmatpush1.msra.mxu0 0.0
  %2122 = vmatprep.subr.mxu0 0.0
  %2123 = vmatpush1.msra.mxu0 0.0
  %2124 = vmatprep.subr.mxu0 0.0
  %2125 = vmatpush1.msra.mxu0 0.0
  %2126 = vmatprep.subr.mxu0 0.0
  %2127 = vmatpush1.msra.mxu0 0.0
  %2128 = vmatprep.subr.mxu0 0.0
  %2129 = vmatpush1.msra.mxu0 0.0
  %2130 = vmatprep.subr.mxu0 0.0
  %2131 = vmatpush1.msra.mxu0 0.0
  %2132 = vmatprep.subr.mxu0 0.0
  %2133 = vmatpush1.msra.mxu0 0.0
  %2134 = vmatprep.subr.mxu0 0.0
  %2135 = vmatpush1.msra.mxu0 0.0
  %2136 = vmatprep.mubr.f32.mxu0 0.0
  %2137 = vmatmul.mubr.f32.gmra.mrb[0].mxu0 %v557
  %v2138 = vpop.f32.mrb[0].mxu0
  %v2139 = vadd.f32 0.0, %v2138
  %v2140 = vpop.f32.mrb[0].mxu0
  %2141 = vdwg.mxu0
  %2143 = vrot.lane.b32.xlu0 %v2139, 64
  %v2144 = vpop.permute.xlu0 %2143
  %v2146 = vadd.f32 %v230, %v2144
  %v2147 = vtanh.pop %v2146
  %v2148 = vmul.f32 %v2147, %v645
  %2150 = vrot.lane.b32.xlu0 %v2148, 64
  %v2151 = vpop.permute.xlu0 %2150
  %v2153 = vsel %vm420, %v2151, 0.0
  %2154 = vadd.xlane.f32.xlu0 %v2153
  %v2155 = vpop.xlane.xlu0 %2154
  %v2156 = vmul.f32 %v2155, 1.442695
  %v2157 = vpow.pop %v2156
  %v2158 = vmul.f32 %v2157, %v230
  %2159 = vmatprep.subr.mxu0 0.0
  %2160 = vmatpush1.msra.mxu0 %v2158
  %2161 = vmatprep.subr.mxu0 0.0
  %2162 = vmatpush1.msra.mxu0 0.0
  %2163 = vmatprep.subr.mxu0 0.0
  %2164 = vmatpush1.msra.mxu0 0.0
  %2165 = vmatprep.subr.mxu0 0.0
  %2166 = vmatpush1.msra.mxu0 0.0
  %2167 = vmatprep.subr.mxu0 0.0
  %2168 = vmatpush1.msra.mxu0 0.0
  %2169 = vmatprep.subr.mxu0 0.0
  %2170 = vmatpush1.msra.mxu0 0.0
  %2171 = vmatprep.subr.mxu0 0.0
  %2172 = vmatpush1.msra.mxu0 0.0
  %2173 = vmatprep.subr.mxu0 0.0
  %2174 = vmatpush1.msra.mxu0 0.0
  %2175 = vmatprep.subr.mxu0 0.0
  %2176 = vmatpush1.msra.mxu0 0.0
  %2177 = vmatprep.subr.mxu0 0.0
  %2178 = vmatpush1.msra.mxu0 0.0
  %2179 = vmatprep.subr.mxu0 0.0
  %2180 = vmatpush1.msra.mxu0 0.0
  %2181 = vmatprep.subr.mxu0 0.0
  %2182 = vmatpush1.msra.mxu0 0.0
  %2183 = vmatprep.subr.mxu0 0.0
  %2184 = vmatpush1.msra.mxu0 0.0
  %2185 = vmatprep.subr.mxu0 0.0
  %2186 = vmatpush1.msra.mxu0 0.0
  %2187 = vmatprep.subr.mxu0 0.0
  %2188 = vmatpush1.msra.mxu0 0.0
  %2189 = vmatprep.subr.mxu0 0.0
  %2190 = vmatpush1.msra.mxu0 0.0
  %2191 = vmatprep.subr.mxu0 0.0
  %2192 = vmatpush1.msra.mxu0 0.0
  %2193 = vmatprep.subr.mxu0 0.0
  %2194 = vmatpush1.msra.mxu0 0.0
  %2195 = vmatprep.subr.mxu0 0.0
  %2196 = vmatpush1.msra.mxu0 0.0
  %2197 = vmatprep.subr.mxu0 0.0
  %2198 = vmatpush1.msra.mxu0 0.0
  %2199 = vmatprep.subr.mxu0 0.0
  %2200 = vmatpush1.msra.mxu0 0.0
  %2201 = vmatprep.subr.mxu0 0.0
  %2202 = vmatpush1.msra.mxu0 0.0
  %2203 = vmatprep.subr.mxu0 0.0
  %2204 = vmatpush1.msra.mxu0 0.0
  %2205 = vmatprep.subr.mxu0 0.0
  %2206 = vmatpush1.msra.mxu0 0.0
  %2207 = vmatprep.subr.mxu0 0.0
  %2208 = vmatpush1.msra.mxu0 0.0
  %2209 = vmatprep.subr.mxu0 0.0
  %2210 = vmatpush1.msra.mxu0 0.0
  %2211 = vmatprep.subr.mxu0 0.0
  %2212 = vmatpush1.msra.mxu0 0.0
  %2213 = vmatprep.subr.mxu0 0.0
  %2214 = vmatpush1.msra.mxu0 0.0
  %2215 = vmatprep.subr.mxu0 0.0
  %2216 = vmatpush1.msra.mxu0 0.0
  %2217 = vmatprep.subr.mxu0 0.0
  %2218 = vmatpush1.msra.mxu0 0.0
  %2219 = vmatprep.subr.mxu0 0.0
  %2220 = vmatpush1.msra.mxu0 0.0
  %2221 = vmatprep.subr.mxu0 0.0
  %2222 = vmatpush1.msra.mxu0 0.0
  %2223 = vmatprep.mubr.f32.mxu0 0.0
  %2224 = vmatmul.mubr.f32.gmra.mrb[0].mxu0 %v237
  %v2225 = vpop.f32.mrb[0].mxu0
  %v2226 = vadd.f32 0.0, %v2225
  %v2227 = vpop.f32.mrb[0].mxu0
  %2228 = vdwg.mxu0
  %v2229 = vrcp.pop %v2226
  %2231 = vset.pattern.permute.xlu0 96
  %2232 = vperm.xlu0 %2231, %v2229
  %v2233 = vpop.permute.xlu0 %2232
  %v2235 = vmul.f32 %v2226, %v2233
  %v2236 = vpack.c.bf16 %v2235, %v2235
  %v2238 = vsel %vm350, %v2236, 0
  %2240 = vmatprep.subr.bf16.mxu0 0
  %2241 = vmatpush1.bf16.msra.mxu0 %v752
  %2242 = vmatprep.subr.bf16.mxu0 0
  %2243 = vmatpush1.bf16.msra.mxu0 %v753
  %2244 = vmatprep.subr.bf16.mxu0 0
  %2245 = vmatpush1.bf16.msra.mxu0 %v754
  %2246 = vmatprep.subr.bf16.mxu0 0
  %2247 = vmatpush1.bf16.msra.mxu0 %v755
  %2248 = vmatprep.subr.bf16.mxu0 0
  %2249 = vmatpush1.bf16.msra.mxu0 0
  %2250 = vmatprep.subr.bf16.mxu0 0
  %2251 = vmatpush1.bf16.msra.mxu0 0
  %2252 = vmatprep.subr.bf16.mxu0 0
  %2253 = vmatpush1.bf16.msra.mxu0 0
  %2254 = vmatprep.subr.bf16.mxu0 0
  %2255 = vmatpush1.bf16.msra.mxu0 0
  %2256 = vmatprep.subr.bf16.mxu0 0
  %2257 = vmatpush1.bf16.msra.mxu0 0
  %2258 = vmatprep.subr.bf16.mxu0 0
  %2259 = vmatpush1.bf16.msra.mxu0 0
  %2260 = vmatprep.subr.bf16.mxu0 0
  %2261 = vmatpush1.bf16.msra.mxu0 0
  %2262 = vmatprep.subr.bf16.mxu0 0
  %2263 = vmatpush1.bf16.msra.mxu0 0
  %2264 = vmatprep.subr.bf16.mxu0 0
  %2265 = vmatpush1.bf16.msra.mxu0 0
  %2266 = vmatprep.subr.bf16.mxu0 0
  %2267 = vmatpush1.bf16.msra.mxu0 0
  %2268 = vmatprep.subr.bf16.mxu0 0
  %2269 = vmatpush1.bf16.msra.mxu0 0
  %2270 = vmatprep.subr.bf16.mxu0 0
  %2271 = vmatpush1.bf16.msra.mxu0 0
  %2272 = vmatprep.mubr.bf16.mxu0 0
  %2273 = vmatmul.mubr.bf16.gmra.mrb[0].mxu0 %v2238
  %v2274 = vpop.f32.mrb[0].mxu0
  %v2275 = vadd.f32 0.0, %v2274
  %v2276 = vpop.f32.mrb[0].mxu0
  %v2277 = vpop.f32.mrb[0].mxu0
  %v2278 = vpop.f32.mrb[0].mxu0
  %2279 = vdwg.mxu0
  %v2280 = vadd.f32 %v462, %v2275
  %v2281 = vpack.c.bf16 %v1992, %v1992
  %v2283 = vrot.slane %v2281, 3
  %2284 = vrot.lane.b32.xlu0 %v2283, 64
  %v2285 = vpop.permute.xlu0 %2284
  %v2287 = vsel %vm420, %v2285, 0
  %2289 = vmatprep.subr.bf16.mxu0 0
  %2290 = vmatpush1.bf16.msra.mxu0 %v813
  %2291 = vmatprep.subr.bf16.mxu0 0
  %2292 = vmatpush1.bf16.msra.mxu0 %v814
  %2293 = vmatprep.subr.bf16.mxu0 0
  %2294 = vmatpush1.bf16.msra.mxu0 0
  %2295 = vmatprep.subr.bf16.mxu0 0
  %2296 = vmatpush1.bf16.msra.mxu0 0
  %2297 = vmatprep.subr.bf16.mxu0 0
  %2298 = vmatpush1.bf16.msra.mxu0 0
  %2299 = vmatprep.subr.bf16.mxu0 0
  %2300 = vmatpush1.bf16.msra.mxu0 0
  %2301 = vmatprep.subr.bf16.mxu0 0
  %2302 = vmatpush1.bf16.msra.mxu0 0
  %2303 = vmatprep.subr.bf16.mxu0 0
  %2304 = vmatpush1.bf16.msra.mxu0 0
  %2305 = vmatprep.subr.bf16.mxu0 0
  %2306 = vmatpush1.bf16.msra.mxu0 0
  %2307 = vmatprep.subr.bf16.mxu0 0
  %2308 = vmatpush1.bf16.msra.mxu0 0
  %2309 = vmatprep.subr.bf16.mxu0 0
  %2310 = vmatpush1.bf16.msra.mxu0 0
  %2311 = vmatprep.subr.bf16.mxu0 0
  %2312 = vmatpush1.bf16.msra.mxu0 0
  %2313 = vmatprep.subr.bf16.mxu0 0
  %2314 = vmatpush1.bf16.msra.mxu0 0
  %2315 = vmatprep.subr.bf16.mxu0 0
  %2316 = vmatpush1.bf16.msra.mxu0 0
  %2317 = vmatprep.subr.bf16.mxu0 0
  %2318 = vmatpush1.bf16.msra.mxu0 0
  %2319 = vmatprep.subr.bf16.mxu0 0
  %2320 = vmatpush1.bf16.msra.mxu0 0
  %2321 = vmatprep.mubr.bf16.mxu0 0
  %2322 = vmatmul.mubr.bf16.gmra.mrb[0].mxu0 %v2287
  %v2323 = vpop.f32.mrb[0].mxu0
  %v2324 = vadd.f32 0.0, %v2323
  %v2325 = vpop.f32.mrb[0].mxu0
  %v2326 = vpop.f32.mrb[0].mxu0
  %v2327 = vpop.f32.mrb[0].mxu0
  %2328 = vdwg.mxu0
  %v2329 = vadd.f32 %v2280, %v2324
  %v2330 = vxor.u32 %v2329, 2147483648
  %v2331 = vmul.f32 %v2330, 1.442695
  %v2332 = vpow.pop %v2331
  %v2333 = vadd.f32 %v2332, 1.0
  %v2334 = vrcp.pop %v2333
  %v2335 = vmul.f32 1.0, %v2334
  %v2336 = vtanh.pop %v2329
  %v2338 = vrot.slane %v1986, 6
  %v2340 = vmul.f32 %v2335, %v2338
  %2342 = vrot.lane.b32.xlu0 %v2336, 32
  %v2343 = vpop.permute.xlu0 %2342
  %v2345 = vmul.f32 %v2335, %v2343
  %2347 = vrot.lane.b32.xlu0 %v2345, 32
  %v2348 = vpop.permute.xlu0 %2347
  %v2350 = vadd.f32 %v2340, %v2348
  %v2351 = vtanh.pop %v2350
  %2353 = vrot.lane.b32.xlu0 %v2351, 32
  %v2354 = vpop.permute.xlu0 %2353
  %v2356 = vmul.f32 %v2335, %v2354
  %2358 = vrot.lane.b32.xlu0 %v2356, 64
  %v2359 = vpop.permute.xlu0 %2358
  %v2360 = vsel %vm420, %v2359, 0
  %2362 = vmatprep.subr.mxu0 0.0
  %2363 = vmatpush1.msra.mxu0 %v465
  %2364 = vmatprep.subr.mxu0 0.0
  %2365 = vmatpush1.msra.mxu0 %v466
  %2366 = vmatprep.subr.mxu0 0.0
  %2367 = vmatpush1.msra.mxu0 %v467
  %2368 = vmatprep.subr.mxu0 0.0
  %2369 = vmatpush1.msra.mxu0 %v468
  %2370 = vmatprep.subr.mxu0 0.0
  %2371 = vmatpush1.msra.mxu0 0.0
  %2372 = vmatprep.subr.mxu0 0.0
  %2373 = vmatpush1.msra.mxu0 0.0
  %2374 = vmatprep.subr.mxu0 0.0
  %2375 = vmatpush1.msra.mxu0 0.0
  %2376 = vmatprep.subr.mxu0 0.0
  %2377 = vmatpush1.msra.mxu0 0.0
  %2378 = vmatprep.subr.mxu0 0.0
  %2379 = vmatpush1.msra.mxu0 0.0
  %2380 = vmatprep.subr.mxu0 0.0
  %2381 = vmatpush1.msra.mxu0 0.0
  %2382 = vmatprep.subr.mxu0 0.0
  %2383 = vmatpush1.msra.mxu0 0.0
  %2384 = vmatprep.subr.mxu0 0.0
  %2385 = vmatpush1.msra.mxu0 0.0
  %2386 = vmatprep.subr.mxu0 0.0
  %2387 = vmatpush1.msra.mxu0 0.0
  %2388 = vmatprep.subr.mxu0 0.0
  %2389 = vmatpush1.msra.mxu0 0.0
  %2390 = vmatprep.subr.mxu0 0.0
  %2391 = vmatpush1.msra.mxu0 0.0
  %2392 = vmatprep.subr.mxu0 0.0
  %2393 = vmatpush1.msra.mxu0 0.0
  %2394 = vmatprep.subr.mxu0 0.0
  %2395 = vmatpush1.msra.mxu0 0.0
  %2396 = vmatprep.subr.mxu0 0.0
  %2397 = vmatpush1.msra.mxu0 0.0
  %2398 = vmatprep.subr.mxu0 0.0
  %2399 = vmatpush1.msra.mxu0 0.0
  %2400 = vmatprep.subr.mxu0 0.0
  %2401 = vmatpush1.msra.mxu0 0.0
  %2402 = vmatprep.subr.mxu0 0.0
  %2403 = vmatpush1.msra.mxu0 0.0
  %2404 = vmatprep.subr.mxu0 0.0
  %2405 = vmatpush1.msra.mxu0 0.0
  %2406 = vmatprep.subr.mxu0 0.0
  %2407 = vmatpush1.msra.mxu0 0.0
  %2408 = vmatprep.subr.mxu0 0.0
  %2409 = vmatpush1.msra.mxu0 0.0
  %2410 = vmatprep.subr.mxu0 0.0
  %2411 = vmatpush1.msra.mxu0 0.0
  %2412 = vmatprep.subr.mxu0 0.0
  %2413 = vmatpush1.msra.mxu0 0.0
  %2414 = vmatprep.subr.mxu0 0.0
  %2415 = vmatpush1.msra.mxu0 0.0
  %2416 = vmatprep.subr.mxu0 0.0
  %2417 = vmatpush1.msra.mxu0 0.0
  %2418 = vmatprep.subr.mxu0 0.0
  %2419 = vmatpush1.msra.mxu0 0.0
  %2420 = vmatprep.subr.mxu0 0.0
  %2421 = vmatpush1.msra.mxu0 0.0
  %2422 = vmatprep.subr.mxu0 0.0
  %2423 = vmatpush1.msra.mxu0 0.0
  %2424 = vmatprep.subr.mxu0 0.0
  %2425 = vmatpush1.msra.mxu0 0.0
  %2426 = vmatprep.mubr.f32.mxu0 0.0
  %2427 = vmatmul.mubr.f32.gmra.mrb[0].mxu0 %v2360
  %v2428 = vpop.f32.mrb[0].mxu0
  %v2429 = vadd.f32 0.0, %v2428
  %v2430 = vpop.f32.mrb[0].mxu0
  %2431 = vdwg.mxu0
  %v2433 = vsel %vm559, %v2429, 0
  %2435 = vmatprep.subr.mxu0 0.0
  %2436 = vmatpush1.msra.mxu0 %v2433
  %2437 = vmatprep.subr.mxu0 0.0
  %2438 = vmatpush1.msra.mxu0 0.0
  %2439 = vmatprep.subr.mxu0 0.0
  %2440 = vmatpush1.msra.mxu0 0.0
  %2441 = vmatprep.subr.mxu0 0.0
  %2442 = vmatpush1.msra.mxu0 0.0
  %2443 = vmatprep.subr.mxu0 0.0
  %2444 = vmatpush1.msra.mxu0 0.0
  %2445 = vmatprep.subr.mxu0 0.0
  %2446 = vmatpush1.msra.mxu0 0.0
  %2447 = vmatprep.subr.mxu0 0.0
  %2448 = vmatpush1.msra.mxu0 0.0
  %2449 = vmatprep.subr.mxu0 0.0
  %2450 = vmatpush1.msra.mxu0 0.0
  %2451 = vmatprep.subr.mxu0 0.0
  %2452 = vmatpush1.msra.mxu0 0.0
  %2453 = vmatprep.subr.mxu0 0.0
  %2454 = vmatpush1.msra.mxu0 0.0
  %2455 = vmatprep.subr.mxu0 0.0
  %2456 = vmatpush1.msra.mxu0 0.0
  %2457 = vmatprep.subr.mxu0 0.0
  %2458 = vmatpush1.msra.mxu0 0.0
  %2459 = vmatprep.subr.mxu0 0.0
  %2460 = vmatpush1.msra.mxu0 0.0
  %2461 = vmatprep.subr.mxu0 0.0
  %2462 = vmatpush1.msra.mxu0 0.0
  %2463 = vmatprep.subr.mxu0 0.0
  %2464 = vmatpush1.msra.mxu0 0.0
  %2465 = vmatprep.subr.mxu0 0.0
  %2466 = vmatpush1.msra.mxu0 0.0
  %2467 = vmatprep.subr.mxu0 0.0
  %2468 = vmatpush1.msra.mxu0 0.0
  %2469 = vmatprep.subr.mxu0 0.0
  %2470 = vmatpush1.msra.mxu0 0.0
  %2471 = vmatprep.subr.mxu0 0.0
  %2472 = vmatpush1.msra.mxu0 0.0
  %2473 = vmatprep.subr.mxu0 0.0
  %2474 = vmatpush1.msra.mxu0 0.0
  %2475 = vmatprep.subr.mxu0 0.0
  %2476 = vmatpush1.msra.mxu0 0.0
  %2477 = vmatprep.subr.mxu0 0.0
  %2478 = vmatpush1.msra.mxu0 0.0
  %2479 = vmatprep.subr.mxu0 0.0
  %2480 = vmatpush1.msra.mxu0 0.0
  %2481 = vmatprep.subr.mxu0 0.0
  %2482 = vmatpush1.msra.mxu0 0.0
  %2483 = vmatprep.subr.mxu0 0.0
  %2484 = vmatpush1.msra.mxu0 0.0
  %2485 = vmatprep.subr.mxu0 0.0
  %2486 = vmatpush1.msra.mxu0 0.0
  %2487 = vmatprep.subr.mxu0 0.0
  %2488 = vmatpush1.msra.mxu0 0.0
  %2489 = vmatprep.subr.mxu0 0.0
  %2490 = vmatpush1.msra.mxu0 0.0
  %2491 = vmatprep.subr.mxu0 0.0
  %2492 = vmatpush1.msra.mxu0 0.0
  %2493 = vmatprep.subr.mxu0 0.0
  %2494 = vmatpush1.msra.mxu0 0.0
  %2495 = vmatprep.subr.mxu0 0.0
  %2496 = vmatpush1.msra.mxu0 0.0
  %2497 = vmatprep.subr.mxu0 0.0
  %2498 = vmatpush1.msra.mxu0 0.0
  %2499 = vmatprep.mubr.f32.mxu0 0.0
  %2500 = vmatmul.mubr.f32.gmra.mrb[0].mxu0 %v557
  %v2501 = vpop.f32.mrb[0].mxu0
  %v2502 = vadd.f32 0.0, %v2501
  %v2503 = vpop.f32.mrb[0].mxu0
  %2504 = vdwg.mxu0
  %2506 = vrot.lane.b32.xlu0 %v2502, 64
  %v2507 = vpop.permute.xlu0 %2506
  %v2509 = vadd.f32 %v230, %v2507
  %v2510 = vtanh.pop %v2509
  %v2511 = vmul.f32 %v2510, %v645
  %2513 = vrot.lane.b32.xlu0 %v2511, 64
  %v2514 = vpop.permute.xlu0 %2513
  %v2516 = vsel %vm420, %v2514, 0.0
  %2517 = vadd.xlane.f32.xlu0 %v2516
  %v2518 = vpop.xlane.xlu0 %2517
  %v2519 = vmul.f32 %v2518, 1.442695
  %v2520 = vpow.pop %v2519
  %v2521 = vmul.f32 %v2520, %v230
  %2522 = vmatprep.subr.mxu0 0.0
  %2523 = vmatpush1.msra.mxu0 %v2521
  %2524 = vmatprep.subr.mxu0 0.0
  %2525 = vmatpush1.msra.mxu0 0.0
  %2526 = vmatprep.subr.mxu0 0.0
  %2527 = vmatpush1.msra.mxu0 0.0
  %2528 = vmatprep.subr.mxu0 0.0
  %2529 = vmatpush1.msra.mxu0 0.0
  %2530 = vmatprep.subr.mxu0 0.0
  %2531 = vmatpush1.msra.mxu0 0.0
  %2532 = vmatprep.subr.mxu0 0.0
  %2533 = vmatpush1.msra.mxu0 0.0
  %2534 = vmatprep.subr.mxu0 0.0
  %2535 = vmatpush1.msra.mxu0 0.0
  %2536 = vmatprep.subr.mxu0 0.0
  %2537 = vmatpush1.msra.mxu0 0.0
  %2538 = vmatprep.subr.mxu0 0.0
  %2539 = vmatpush1.msra.mxu0 0.0
  %2540 = vmatprep.subr.mxu0 0.0
  %2541 = vmatpush1.msra.mxu0 0.0
  %2542 = vmatprep.subr.mxu0 0.0
  %2543 = vmatpush1.msra.mxu0 0.0
  %2544 = vmatprep.subr.mxu0 0.0
  %2545 = vmatpush1.msra.mxu0 0.0
  %2546 = vmatprep.subr.mxu0 0.0
  %2547 = vmatpush1.msra.mxu0 0.0
  %2548 = vmatprep.subr.mxu0 0.0
  %2549 = vmatpush1.msra.mxu0 0.0
  %2550 = vmatprep.subr.mxu0 0.0
  %2551 = vmatpush1.msra.mxu0 0.0
  %2552 = vmatprep.subr.mxu0 0.0
  %2553 = vmatpush1.msra.mxu0 0.0
  %2554 = vmatprep.subr.mxu0 0.0
  %2555 = vmatpush1.msra.mxu0 0.0
  %2556 = vmatprep.subr.mxu0 0.0
  %2557 = vmatpush1.msra.mxu0 0.0
  %2558 = vmatprep.subr.mxu0 0.0
  %2559 = vmatpush1.msra.mxu0 0.0
  %2560 = vmatprep.subr.mxu0 0.0
  %2561 = vmatpush1.msra.mxu0 0.0
  %2562 = vmatprep.subr.mxu0 0.0
  %2563 = vmatpush1.msra.mxu0 0.0
  %2564 = vmatprep.subr.mxu0 0.0
  %2565 = vmatpush1.msra.mxu0 0.0
  %2566 = vmatprep.subr.mxu0 0.0
  %2567 = vmatpush1.msra.mxu0 0.0
  %2568 = vmatprep.subr.mxu0 0.0
  %2569 = vmatpush1.msra.mxu0 0.0
  %2570 = vmatprep.subr.mxu0 0.0
  %2571 = vmatpush1.msra.mxu0 0.0
  %2572 = vmatprep.subr.mxu0 0.0
  %2573 = vmatpush1.msra.mxu0 0.0
  %2574 = vmatprep.subr.mxu0 0.0
  %2575 = vmatpush1.msra.mxu0 0.0
  %2576 = vmatprep.subr.mxu0 0.0
  %2577 = vmatpush1.msra.mxu0 0.0
  %2578 = vmatprep.subr.mxu0 0.0
  %2579 = vmatpush1.msra.mxu0 0.0
  %2580 = vmatprep.subr.mxu0 0.0
  %2581 = vmatpush1.msra.mxu0 0.0
  %2582 = vmatprep.subr.mxu0 0.0
  %2583 = vmatpush1.msra.mxu0 0.0
  %2584 = vmatprep.subr.mxu0 0.0
  %2585 = vmatpush1.msra.mxu0 0.0
  %2586 = vmatprep.mubr.f32.mxu0 0.0
  %2587 = vmatmul.mubr.f32.gmra.mrb[0].mxu0 %v237
  %v2588 = vpop.f32.mrb[0].mxu0
  %v2589 = vadd.f32 0.0, %v2588
  %v2590 = vpop.f32.mrb[0].mxu0
  %2591 = vdwg.mxu0
  %v2592 = vrcp.pop %v2589
  %2594 = vset.pattern.permute.xlu0 96
  %2595 = vperm.xlu0 %2594, %v2592
  %v2596 = vpop.permute.xlu0 %2595
  %v2598 = vmul.f32 %v2589, %v2596
  %v2599 = vpack.c.bf16 %v2598, %v2598
  %v2601 = vsel %vm350, %v2599, 0
  %2603 = vmatprep.subr.bf16.mxu0 0
  %2604 = vmatpush1.bf16.msra.mxu0 %v752
  %2605 = vmatprep.subr.bf16.mxu0 0
  %2606 = vmatpush1.bf16.msra.mxu0 %v753
  %2607 = vmatprep.subr.bf16.mxu0 0
  %2608 = vmatpush1.bf16.msra.mxu0 %v754
  %2609 = vmatprep.subr.bf16.mxu0 0
  %2610 = vmatpush1.bf16.msra.mxu0 %v755
  %2611 = vmatprep.subr.bf16.mxu0 0
  %2612 = vmatpush1.bf16.msra.mxu0 0
  %2613 = vmatprep.subr.bf16.mxu0 0
  %2614 = vmatpush1.bf16.msra.mxu0 0
  %2615 = vmatprep.subr.bf16.mxu0 0
  %2616 = vmatpush1.bf16.msra.mxu0 0
  %2617 = vmatprep.subr.bf16.mxu0 0
  %2618 = vmatpush1.bf16.msra.mxu0 0
  %2619 = vmatprep.subr.bf16.mxu0 0
  %2620 = vmatpush1.bf16.msra.mxu0 0
  %2621 = vmatprep.subr.bf16.mxu0 0
  %2622 = vmatpush1.bf16.msra.mxu0 0
  %2623 = vmatprep.subr.bf16.mxu0 0
  %2624 = vmatpush1.bf16.msra.mxu0 0
  %2625 = vmatprep.subr.bf16.mxu0 0
  %2626 = vmatpush1.bf16.msra.mxu0 0
  %2627 = vmatprep.subr.bf16.mxu0 0
  %2628 = vmatpush1.bf16.msra.mxu0 0
  %2629 = vmatprep.subr.bf16.mxu0 0
  %2630 = vmatpush1.bf16.msra.mxu0 0
  %2631 = vmatprep.subr.bf16.mxu0 0
  %2632 = vmatpush1.bf16.msra.mxu0 0
  %2633 = vmatprep.subr.bf16.mxu0 0
  %2634 = vmatpush1.bf16.msra.mxu0 0
  %2635 = vmatprep.mubr.bf16.mxu0 0
  %2636 = vmatmul.mubr.bf16.gmra.mrb[0].mxu0 %v2601
  %v2637 = vpop.f32.mrb[0].mxu0
  %v2638 = vadd.f32 0.0, %v2637
  %v2639 = vpop.f32.mrb[0].mxu0
  %v2640 = vpop.f32.mrb[0].mxu0
  %v2641 = vpop.f32.mrb[0].mxu0
  %2642 = vdwg.mxu0
  %v2644 = vrot.slane %v2638, 6
  %v2646 = vadd.f32 %v462, %v2644
  %v2647 = vpack.c.bf16 %v2356, %v2356
  %2649 = vrot.lane.b32.xlu0 %v2647, 64
  %v2650 = vpop.permute.xlu0 %2649
  %v2652 = vsel %vm420, %v2650, 0
  %2654 = vmatprep.subr.bf16.mxu0 0
  %2655 = vmatpush1.bf16.msra.mxu0 %v813
  %2656 = vmatprep.subr.bf16.mxu0 0
  %2657 = vmatpush1.bf16.msra.mxu0 %v814
  %2658 = vmatprep.subr.bf16.mxu0 0
  %2659 = vmatpush1.bf16.msra.mxu0 0
  %2660 = vmatprep.subr.bf16.mxu0 0
  %2661 = vmatpush1.bf16.msra.mxu0 0
  %2662 = vmatprep.subr.bf16.mxu0 0
  %2663 = vmatpush1.bf16.msra.mxu0 0
  %2664 = vmatprep.subr.bf16.mxu0 0
  %2665 = vmatpush1.bf16.msra.mxu0 0
  %2666 = vmatprep.subr.bf16.mxu0 0
  %2667 = vmatpush1.bf16.msra.mxu0 0
  %2668 = vmatprep.subr.bf16.mxu0 0
  %2669 = vmatpush1.bf16.msra.mxu0 0
  %2670 = vmatprep.subr.bf16.mxu0 0
  %2671 = vmatpush1.bf16.msra.mxu0 0
  %2672 = vmatprep.subr.bf16.mxu0 0
  %2673 = vmatpush1.bf16.msra.mxu0 0
  %2674 = vmatprep.subr.bf16.mxu0 0
  %2675 = vmatpush1.bf16.msra.mxu0 0
  %2676 = vmatprep.subr.bf16.mxu0 0
  %2677 = vmatpush1.bf16.msra.mxu0 0
  %2678 = vmatprep.subr.bf16.mxu0 0
  %2679 = vmatpush1.bf16.msra.mxu0 0
  %2680 = vmatprep.subr.bf16.mxu0 0
  %2681 = vmatpush1.bf16.msra.mxu0 0
  %2682 = vmatprep.subr.bf16.mxu0 0
  %2683 = vmatpush1.bf16.msra.mxu0 0
  %2684 = vmatprep.subr.bf16.mxu0 0
  %2685 = vmatpush1.bf16.msra.mxu0 0
  %2686 = vmatprep.mubr.bf16.mxu0 0
  %2687 = vmatmul.mubr.bf16.gmra.mrb[0].mxu0 %v2652
  %v2688 = vpop.f32.mrb[0].mxu0
  %v2689 = vadd.f32 0.0, %v2688
  %v2690 = vpop.f32.mrb[0].mxu0
  %v2691 = vpop.f32.mrb[0].mxu0
  %v2692 = vpop.f32.mrb[0].mxu0
  %2693 = vdwg.mxu0
  %v2695 = vrot.slane %v2689, 6
  %v2697 = vadd.f32 %v2646, %v2695
  %v2698 = vxor.u32 %v2697, 2147483648
  %v2699 = vmul.f32 %v2698, 1.442695
  %v2700 = vpow.pop %v2699
  %v2701 = vadd.f32 %v2700, 1.0
  %v2702 = vrcp.pop %v2701
  %v2703 = vmul.f32 1.0, %v2702
  %v2704 = vtanh.pop %v2697
  %v2706 = vrot.slane %v2350, 6
  %v2708 = vmul.f32 %v2703, %v2706
  %2710 = vrot.lane.b32.xlu0 %v2704, 32
  %v2711 = vpop.permute.xlu0 %2710
  %v2713 = vmul.f32 %v2703, %v2711
  %2715 = vrot.lane.b32.xlu0 %v2713, 32
  %v2716 = vpop.permute.xlu0 %2715
  %v2718 = vadd.f32 %v2708, %v2716
  %v2719 = vtanh.pop %v2718
  %2721 = vrot.lane.b32.xlu0 %v2719, 32
  %v2722 = vpop.permute.xlu0 %2721
  %v2724 = vmul.f32 %v2703, %v2722
  %v2726 = vrot.slane %v2724, 2
  %2727 = vrot.lane.b32.xlu0 %v2726, 64
  %v2728 = vpop.permute.xlu0 %2727
  %v2729 = vsel %vm420, %v2728, 0
  %2731 = vmatprep.subr.mxu0 0.0
  %2732 = vmatpush1.msra.mxu0 %v465
  %2733 = vmatprep.subr.mxu0 0.0
  %2734 = vmatpush1.msra.mxu0 %v466
  %2735 = vmatprep.subr.mxu0 0.0
  %2736 = vmatpush1.msra.mxu0 %v467
  %2737 = vmatprep.subr.mxu0 0.0
  %2738 = vmatpush1.msra.mxu0 %v468
  %2739 = vmatprep.subr.mxu0 0.0
  %2740 = vmatpush1.msra.mxu0 0.0
  %2741 = vmatprep.subr.mxu0 0.0
  %2742 = vmatpush1.msra.mxu0 0.0
  %2743 = vmatprep.subr.mxu0 0.0
  %2744 = vmatpush1.msra.mxu0 0.0
  %2745 = vmatprep.subr.mxu0 0.0
  %2746 = vmatpush1.msra.mxu0 0.0
  %2747 = vmatprep.subr.mxu0 0.0
  %2748 = vmatpush1.msra.mxu0 0.0
  %2749 = vmatprep.subr.mxu0 0.0
  %2750 = vmatpush1.msra.mxu0 0.0
  %2751 = vmatprep.subr.mxu0 0.0
  %2752 = vmatpush1.msra.mxu0 0.0
  %2753 = vmatprep.subr.mxu0 0.0
  %2754 = vmatpush1.msra.mxu0 0.0
  %2755 = vmatprep.subr.mxu0 0.0
  %2756 = vmatpush1.msra.mxu0 0.0
  %2757 = vmatprep.subr.mxu0 0.0
  %2758 = vmatpush1.msra.mxu0 0.0
  %2759 = vmatprep.subr.mxu0 0.0
  %2760 = vmatpush1.msra.mxu0 0.0
  %2761 = vmatprep.subr.mxu0 0.0
  %2762 = vmatpush1.msra.mxu0 0.0
  %2763 = vmatprep.subr.mxu0 0.0
  %2764 = vmatpush1.msra.mxu0 0.0
  %2765 = vmatprep.subr.mxu0 0.0
  %2766 = vmatpush1.msra.mxu0 0.0
  %2767 = vmatprep.subr.mxu0 0.0
  %2768 = vmatpush1.msra.mxu0 0.0
  %2769 = vmatprep.subr.mxu0 0.0
  %2770 = vmatpush1.msra.mxu0 0.0
  %2771 = vmatprep.subr.mxu0 0.0
  %2772 = vmatpush1.msra.mxu0 0.0
  %2773 = vmatprep.subr.mxu0 0.0
  %2774 = vmatpush1.msra.mxu0 0.0
  %2775 = vmatprep.subr.mxu0 0.0
  %2776 = vmatpush1.msra.mxu0 0.0
  %2777 = vmatprep.subr.mxu0 0.0
  %2778 = vmatpush1.msra.mxu0 0.0
  %2779 = vmatprep.subr.mxu0 0.0
  %2780 = vmatpush1.msra.mxu0 0.0
  %2781 = vmatprep.subr.mxu0 0.0
  %2782 = vmatpush1.msra.mxu0 0.0
  %2783 = vmatprep.subr.mxu0 0.0
  %2784 = vmatpush1.msra.mxu0 0.0
  %2785 = vmatprep.subr.mxu0 0.0
  %2786 = vmatpush1.msra.mxu0 0.0
  %2787 = vmatprep.subr.mxu0 0.0
  %2788 = vmatpush1.msra.mxu0 0.0
  %2789 = vmatprep.subr.mxu0 0.0
  %2790 = vmatpush1.msra.mxu0 0.0
  %2791 = vmatprep.subr.mxu0 0.0
  %2792 = vmatpush1.msra.mxu0 0.0
  %2793 = vmatprep.subr.mxu0 0.0
  %2794 = vmatpush1.msra.mxu0 0.0
  %2795 = vmatprep.mubr.f32.mxu0 0.0
  %2796 = vmatmul.mubr.f32.gmra.mrb[0].mxu0 %v2729
  %v2797 = vpop.f32.mrb[0].mxu0
  %v2798 = vadd.f32 0.0, %v2797
  %v2799 = vpop.f32.mrb[0].mxu0
  %2800 = vdwg.mxu0
  %v2802 = vsel %vm559, %v2798, 0
  %2804 = vmatprep.subr.mxu0 0.0
  %2805 = vmatpush1.msra.mxu0 %v2802
  %2806 = vmatprep.subr.mxu0 0.0
  %2807 = vmatpush1.msra.mxu0 0.0
  %2808 = vmatprep.subr.mxu0 0.0
  %2809 = vmatpush1.msra.mxu0 0.0
  %2810 = vmatprep.subr.mxu0 0.0
  %2811 = vmatpush1.msra.mxu0 0.0
  %2812 = vmatprep.subr.mxu0 0.0
  %2813 = vmatpush1.msra.mxu0 0.0
  %2814 = vmatprep.subr.mxu0 0.0
  %2815 = vmatpush1.msra.mxu0 0.0
  %2816 = vmatprep.subr.mxu0 0.0
  %2817 = vmatpush1.msra.mxu0 0.0
  %2818 = vmatprep.subr.mxu0 0.0
  %2819 = vmatpush1.msra.mxu0 0.0
  %2820 = vmatprep.subr.mxu0 0.0
  %2821 = vmatpush1.msra.mxu0 0.0
  %2822 = vmatprep.subr.mxu0 0.0
  %2823 = vmatpush1.msra.mxu0 0.0
  %2824 = vmatprep.subr.mxu0 0.0
  %2825 = vmatpush1.msra.mxu0 0.0
  %2826 = vmatprep.subr.mxu0 0.0
  %2827 = vmatpush1.msra.mxu0 0.0
  %2828 = vmatprep.subr.mxu0 0.0
  %2829 = vmatpush1.msra.mxu0 0.0
  %2830 = vmatprep.subr.mxu0 0.0
  %2831 = vmatpush1.msra.mxu0 0.0
  %2832 = vmatprep.subr.mxu0 0.0
  %2833 = vmatpush1.msra.mxu0 0.0
  %2834 = vmatprep.subr.mxu0 0.0
  %2835 = vmatpush1.msra.mxu0 0.0
  %2836 = vmatprep.subr.mxu0 0.0
  %2837 = vmatpush1.msra.mxu0 0.0
  %2838 = vmatprep.subr.mxu0 0.0
  %2839 = vmatpush1.msra.mxu0 0.0
  %2840 = vmatprep.subr.mxu0 0.0
  %2841 = vmatpush1.msra.mxu0 0.0
  %2842 = vmatprep.subr.mxu0 0.0
  %2843 = vmatpush1.msra.mxu0 0.0
  %2844 = vmatprep.subr.mxu0 0.0
  %2845 = vmatpush1.msra.mxu0 0.0
  %2846 = vmatprep.subr.mxu0 0.0
  %2847 = vmatpush1.msra.mxu0 0.0
  %2848 = vmatprep.subr.mxu0 0.0
  %2849 = vmatpush1.msra.mxu0 0.0
  %2850 = vmatprep.subr.mxu0 0.0
  %2851 = vmatpush1.msra.mxu0 0.0
  %2852 = vmatprep.subr.mxu0 0.0
  %2853 = vmatpush1.msra.mxu0 0.0
  %2854 = vmatprep.subr.mxu0 0.0
  %2855 = vmatpush1.msra.mxu0 0.0
  %2856 = vmatprep.subr.mxu0 0.0
  %2857 = vmatpush1.msra.mxu0 0.0
  %2858 = vmatprep.subr.mxu0 0.0
  %2859 = vmatpush1.msra.mxu0 0.0
  %2860 = vmatprep.subr.mxu0 0.0
  %2861 = vmatpush1.msra.mxu0 0.0
  %2862 = vmatprep.subr.mxu0 0.0
  %2863 = vmatpush1.msra.mxu0 0.0
  %2864 = vmatprep.subr.mxu0 0.0
  %2865 = vmatpush1.msra.mxu0 0.0
  %2866 = vmatprep.subr.mxu0 0.0
  %2867 = vmatpush1.msra.mxu0 0.0
  %2868 = vmatprep.mubr.f32.mxu0 0.0
  %2869 = vmatmul.mubr.f32.gmra.mrb[0].mxu0 %v557
  %v2870 = vpop.f32.mrb[0].mxu0
  %v2871 = vadd.f32 0.0, %v2870
  %v2872 = vpop.f32.mrb[0].mxu0
  %2873 = vdwg.mxu0
  %2875 = vrot.lane.b32.xlu0 %v2871, 64
  %v2876 = vpop.permute.xlu0 %2875
  %v2878 = vadd.f32 %v230, %v2876
  %v2879 = vtanh.pop %v2878
  %v2880 = vmul.f32 %v2879, %v645
  %2882 = vrot.lane.b32.xlu0 %v2880, 64
  %v2883 = vpop.permute.xlu0 %2882
  %v2885 = vsel %vm420, %v2883, 0.0
  %2886 = vadd.xlane.f32.xlu0 %v2885
  %v2887 = vpop.xlane.xlu0 %2886
  %v2888 = vmul.f32 %v2887, 1.442695
  %v2889 = vpow.pop %v2888
  %v2890 = vmul.f32 %v2889, %v230
  %2891 = vmatprep.subr.mxu0 0.0
  %2892 = vmatpush1.msra.mxu0 %v2890
  %2893 = vmatprep.subr.mxu0 0.0
  %2894 = vmatpush1.msra.mxu0 0.0
  %2895 = vmatprep.subr.mxu0 0.0
  %2896 = vmatpush1.msra.mxu0 0.0
  %2897 = vmatprep.subr.mxu0 0.0
  %2898 = vmatpush1.msra.mxu0 0.0
  %2899 = vmatprep.subr.mxu0 0.0
  %2900 = vmatpush1.msra.mxu0 0.0
  %2901 = vmatprep.subr.mxu0 0.0
  %2902 = vmatpush1.msra.mxu0 0.0
  %2903 = vmatprep.subr.mxu0 0.0
  %2904 = vmatpush1.msra.mxu0 0.0
  %2905 = vmatprep.subr.mxu0 0.0
  %2906 = vmatpush1.msra.mxu0 0.0
  %2907 = vmatprep.subr.mxu0 0.0
  %2908 = vmatpush1.msra.mxu0 0.0
  %2909 = vmatprep.subr.mxu0 0.0
  %2910 = vmatpush1.msra.mxu0 0.0
  %2911 = vmatprep.subr.mxu0 0.0
  %2912 = vmatpush1.msra.mxu0 0.0
  %2913 = vmatprep.subr.mxu0 0.0
  %2914 = vmatpush1.msra.mxu0 0.0
  %2915 = vmatprep.subr.mxu0 0.0
  %2916 = vmatpush1.msra.mxu0 0.0
  %2917 = vmatprep.subr.mxu0 0.0
  %2918 = vmatpush1.msra.mxu0 0.0
  %2919 = vmatprep.subr.mxu0 0.0
  %2920 = vmatpush1.msra.mxu0 0.0
  %2921 = vmatprep.subr.mxu0 0.0
  %2922 = vmatpush1.msra.mxu0 0.0
  %2923 = vmatprep.subr.mxu0 0.0
  %2924 = vmatpush1.msra.mxu0 0.0
  %2925 = vmatprep.subr.mxu0 0.0
  %2926 = vmatpush1.msra.mxu0 0.0
  %2927 = vmatprep.subr.mxu0 0.0
  %2928 = vmatpush1.msra.mxu0 0.0
  %2929 = vmatprep.subr.mxu0 0.0
  %2930 = vmatpush1.msra.mxu0 0.0
  %2931 = vmatprep.subr.mxu0 0.0
  %2932 = vmatpush1.msra.mxu0 0.0
  %2933 = vmatprep.subr.mxu0 0.0
  %2934 = vmatpush1.msra.mxu0 0.0
  %2935 = vmatprep.subr.mxu0 0.0
  %2936 = vmatpush1.msra.mxu0 0.0
  %2937 = vmatprep.subr.mxu0 0.0
  %2938 = vmatpush1.msra.mxu0 0.0
  %2939 = vmatprep.subr.mxu0 0.0
  %2940 = vmatpush1.msra.mxu0 0.0
  %2941 = vmatprep.subr.mxu0 0.0
  %2942 = vmatpush1.msra.mxu0 0.0
  %2943 = vmatprep.subr.mxu0 0.0
  %2944 = vmatpush1.msra.mxu0 0.0
  %2945 = vmatprep.subr.mxu0 0.0
  %2946 = vmatpush1.msra.mxu0 0.0
  %2947 = vmatprep.subr.mxu0 0.0
  %2948 = vmatpush1.msra.mxu0 0.0
  %2949 = vmatprep.subr.mxu0 0.0
  %2950 = vmatpush1.msra.mxu0 0.0
  %2951 = vmatprep.subr.mxu0 0.0
  %2952 = vmatpush1.msra.mxu0 0.0
  %2953 = vmatprep.subr.mxu0 0.0
  %2954 = vmatpush1.msra.mxu0 0.0
  %2955 = vmatprep.mubr.f32.mxu0 0.0
  %2956 = vmatmul.mubr.f32.gmra.mrb[0].mxu0 %v237
  %v2957 = vpop.f32.mrb[0].mxu0
  %v2958 = vadd.f32 0.0, %v2957
  %v2959 = vpop.f32.mrb[0].mxu0
  %2960 = vdwg.mxu0
  %v2961 = vrcp.pop %v2958
  %2963 = vset.pattern.permute.xlu0 96
  %2964 = vperm.xlu0 %2963, %v2961
  %v2965 = vpop.permute.xlu0 %2964
  %v2967 = vmul.f32 %v2958, %v2965
  %v2968 = vpack.c.bf16 %v2967, %v2967
  %v2970 = vsel %vm350, %v2968, 0
  %2972 = vmatprep.subr.bf16.mxu0 0
  %2973 = vmatpush1.bf16.msra.mxu0 %v752
  %2974 = vmatprep.subr.bf16.mxu0 0
  %2975 = vmatpush1.bf16.msra.mxu0 %v753
  %2976 = vmatprep.subr.bf16.mxu0 0
  %2977 = vmatpush1.bf16.msra.mxu0 %v754
  %2978 = vmatprep.subr.bf16.mxu0 0
  %2979 = vmatpush1.bf16.msra.mxu0 %v755
  %2980 = vmatprep.subr.bf16.mxu0 0
  %2981 = vmatpush1.bf16.msra.mxu0 0
  %2982 = vmatprep.subr.bf16.mxu0 0
  %2983 = vmatpush1.bf16.msra.mxu0 0
  %2984 = vmatprep.subr.bf16.mxu0 0
  %2985 = vmatpush1.bf16.msra.mxu0 0
  %2986 = vmatprep.subr.bf16.mxu0 0
  %2987 = vmatpush1.bf16.msra.mxu0 0
  %2988 = vmatprep.subr.bf16.mxu0 0
  %2989 = vmatpush1.bf16.msra.mxu0 0
  %2990 = vmatprep.subr.bf16.mxu0 0
  %2991 = vmatpush1.bf16.msra.mxu0 0
  %2992 = vmatprep.subr.bf16.mxu0 0
  %2993 = vmatpush1.bf16.msra.mxu0 0
  %2994 = vmatprep.subr.bf16.mxu0 0
  %2995 = vmatpush1.bf16.msra.mxu0 0
  %2996 = vmatprep.subr.bf16.mxu0 0
  %2997 = vmatpush1.bf16.msra.mxu0 0
  %2998 = vmatprep.subr.bf16.mxu0 0
  %2999 = vmatpush1.bf16.msra.mxu0 0
  %3000 = vmatprep.subr.bf16.mxu0 0
  %3001 = vmatpush1.bf16.msra.mxu0 0
  %3002 = vmatprep.subr.bf16.mxu0 0
  %3003 = vmatpush1.bf16.msra.mxu0 0
  %3004 = vmatprep.mubr.bf16.mxu0 0
  %3005 = vmatmul.mubr.bf16.gmra.mrb[0].mxu0 %v2970
  %v3006 = vpop.f32.mrb[0].mxu0
  %v3007 = vadd.f32 0.0, %v3006
  %v3008 = vpop.f32.mrb[0].mxu0
  %v3009 = vpop.f32.mrb[0].mxu0
  %v3010 = vpop.f32.mrb[0].mxu0
  %3011 = vdwg.mxu0
  %v3013 = vrot.slane %v3007, 4
  %v3015 = vadd.f32 %v462, %v3013
  %v3016 = vpack.c.bf16 %v2724, %v2724
  %v3018 = vrot.slane %v3016, 1
  %3019 = vrot.lane.b32.xlu0 %v3018, 64
  %v3020 = vpop.permute.xlu0 %3019
  %v3022 = vsel %vm420, %v3020, 0
  %3024 = vmatprep.subr.bf16.mxu0 0
  %3025 = vmatpush1.bf16.msra.mxu0 %v813
  %3026 = vmatprep.subr.bf16.mxu0 0
  %3027 = vmatpush1.bf16.msra.mxu0 %v814
  %3028 = vmatprep.subr.bf16.mxu0 0
  %3029 = vmatpush1.bf16.msra.mxu0 0
  %3030 = vmatprep.subr.bf16.mxu0 0
  %3031 = vmatpush1.bf16.msra.mxu0 0
  %3032 = vmatprep.subr.bf16.mxu0 0
  %3033 = vmatpush1.bf16.msra.mxu0 0
  %3034 = vmatprep.subr.bf16.mxu0 0
  %3035 = vmatpush1.bf16.msra.mxu0 0
  %3036 = vmatprep.subr.bf16.mxu0 0
  %3037 = vmatpush1.bf16.msra.mxu0 0
  %3038 = vmatprep.subr.bf16.mxu0 0
  %3039 = vmatpush1.bf16.msra.mxu0 0
  %3040 = vmatprep.subr.bf16.mxu0 0
  %3041 = vmatpush1.bf16.msra.mxu0 0
  %3042 = vmatprep.subr.bf16.mxu0 0
  %3043 = vmatpush1.bf16.msra.mxu0 0
  %3044 = vmatprep.subr.bf16.mxu0 0
  %3045 = vmatpush1.bf16.msra.mxu0 0
  %3046 = vmatprep.subr.bf16.mxu0 0
  %3047 = vmatpush1.bf16.msra.mxu0 0
  %3048 = vmatprep.subr.bf16.mxu0 0
  %3049 = vmatpush1.bf16.msra.mxu0 0
  %3050 = vmatprep.subr.bf16.mxu0 0
  %3051 = vmatpush1.bf16.msra.mxu0 0
  %3052 = vmatprep.subr.bf16.mxu0 0
  %3053 = vmatpush1.bf16.msra.mxu0 0
  %3054 = vmatprep.subr.bf16.mxu0 0
  %3055 = vmatpush1.bf16.msra.mxu0 0
  %3056 = vmatprep.mubr.bf16.mxu0 0
  %3057 = vmatmul.mubr.bf16.gmra.mrb[0].mxu0 %v3022
  %v3058 = vpop.f32.mrb[0].mxu0
  %v3059 = vadd.f32 0.0, %v3058
  %v3060 = vpop.f32.mrb[0].mxu0
  %v3061 = vpop.f32.mrb[0].mxu0
  %v3062 = vpop.f32.mrb[0].mxu0
  %3063 = vdwg.mxu0
  %v3065 = vrot.slane %v3059, 4
  %v3067 = vadd.f32 %v3015, %v3065
  %v3068 = vxor.u32 %v3067, 2147483648
  %v3069 = vmul.f32 %v3068, 1.442695
  %v3070 = vpow.pop %v3069
  %v3071 = vadd.f32 %v3070, 1.0
  %v3072 = vrcp.pop %v3071
  %v3073 = vmul.f32 1.0, %v3072
  %v3074 = vtanh.pop %v3067
  %v3076 = vrot.slane %v2718, 6
  %v3078 = vmul.f32 %v3073, %v3076
  %3080 = vrot.lane.b32.xlu0 %v3074, 32
  %v3081 = vpop.permute.xlu0 %3080
  %v3083 = vmul.f32 %v3073, %v3081
  %3085 = vrot.lane.b32.xlu0 %v3083, 32
  %v3086 = vpop.permute.xlu0 %3085
  %v3088 = vadd.f32 %v3078, %v3086
  %v3089 = vtanh.pop %v3088
  %3091 = vrot.lane.b32.xlu0 %v3089, 32
  %v3092 = vpop.permute.xlu0 %3091
  %v3094 = vmul.f32 %v3073, %v3092
  %v3096 = vrot.slane %v3094, 4
  %3097 = vrot.lane.b32.xlu0 %v3096, 64
  %v3098 = vpop.permute.xlu0 %3097
  %v3099 = vsel %vm420, %v3098, 0
  %3101 = vmatprep.subr.mxu0 0.0
  %3102 = vmatpush1.msra.mxu0 %v465
  %3103 = vmatprep.subr.mxu0 0.0
  %3104 = vmatpush1.msra.mxu0 %v466
  %3105 = vmatprep.subr.mxu0 0.0
  %3106 = vmatpush1.msra.mxu0 %v467
  %3107 = vmatprep.subr.mxu0 0.0
  %3108 = vmatpush1.msra.mxu0 %v468
  %3109 = vmatprep.subr.mxu0 0.0
  %3110 = vmatpush1.msra.mxu0 0.0
  %3111 = vmatprep.subr.mxu0 0.0
  %3112 = vmatpush1.msra.mxu0 0.0
  %3113 = vmatprep.subr.mxu0 0.0
  %3114 = vmatpush1.msra.mxu0 0.0
  %3115 = vmatprep.subr.mxu0 0.0
  %3116 = vmatpush1.msra.mxu0 0.0
  %3117 = vmatprep.subr.mxu0 0.0
  %3118 = vmatpush1.msra.mxu0 0.0
  %3119 = vmatprep.subr.mxu0 0.0
  %3120 = vmatpush1.msra.mxu0 0.0
  %3121 = vmatprep.subr.mxu0 0.0
  %3122 = vmatpush1.msra.mxu0 0.0
  %3123 = vmatprep.subr.mxu0 0.0
  %3124 = vmatpush1.msra.mxu0 0.0
  %3125 = vmatprep.subr.mxu0 0.0
  %3126 = vmatpush1.msra.mxu0 0.0
  %3127 = vmatprep.subr.mxu0 0.0
  %3128 = vmatpush1.msra.mxu0 0.0
  %3129 = vmatprep.subr.mxu0 0.0
  %3130 = vmatpush1.msra.mxu0 0.0
  %3131 = vmatprep.subr.mxu0 0.0
  %3132 = vmatpush1.msra.mxu0 0.0
  %3133 = vmatprep.subr.mxu0 0.0
  %3134 = vmatpush1.msra.mxu0 0.0
  %3135 = vmatprep.subr.mxu0 0.0
  %3136 = vmatpush1.msra.mxu0 0.0
  %3137 = vmatprep.subr.mxu0 0.0
  %3138 = vmatpush1.msra.mxu0 0.0
  %3139 = vmatprep.subr.mxu0 0.0
  %3140 = vmatpush1.msra.mxu0 0.0
  %3141 = vmatprep.subr.mxu0 0.0
  %3142 = vmatpush1.msra.mxu0 0.0
  %3143 = vmatprep.subr.mxu0 0.0
  %3144 = vmatpush1.msra.mxu0 0.0
  %3145 = vmatprep.subr.mxu0 0.0
  %3146 = vmatpush1.msra.mxu0 0.0
  %3147 = vmatprep.subr.mxu0 0.0
  %3148 = vmatpush1.msra.mxu0 0.0
  %3149 = vmatprep.subr.mxu0 0.0
  %3150 = vmatpush1.msra.mxu0 0.0
  %3151 = vmatprep.subr.mxu0 0.0
  %3152 = vmatpush1.msra.mxu0 0.0
  %3153 = vmatprep.subr.mxu0 0.0
  %3154 = vmatpush1.msra.mxu0 0.0
  %3155 = vmatprep.subr.mxu0 0.0
  %3156 = vmatpush1.msra.mxu0 0.0
  %3157 = vmatprep.subr.mxu0 0.0
  %3158 = vmatpush1.msra.mxu0 0.0
  %3159 = vmatprep.subr.mxu0 0.0
  %3160 = vmatpush1.msra.mxu0 0.0
  %3161 = vmatprep.subr.mxu0 0.0
  %3162 = vmatpush1.msra.mxu0 0.0
  %3163 = vmatprep.subr.mxu0 0.0
  %3164 = vmatpush1.msra.mxu0 0.0
  %3165 = vmatprep.mubr.f32.mxu0 0.0
  %3166 = vmatmul.mubr.f32.gmra.mrb[0].mxu0 %v3099
  %v3167 = vpop.f32.mrb[0].mxu0
  %v3168 = vadd.f32 0.0, %v3167
  %v3169 = vpop.f32.mrb[0].mxu0
  %3170 = vdwg.mxu0
  %v3172 = vsel %vm559, %v3168, 0
  %3174 = vmatprep.subr.mxu0 0.0
  %3175 = vmatpush1.msra.mxu0 %v3172
  %3176 = vmatprep.subr.mxu0 0.0
  %3177 = vmatpush1.msra.mxu0 0.0
  %3178 = vmatprep.subr.mxu0 0.0
  %3179 = vmatpush1.msra.mxu0 0.0
  %3180 = vmatprep.subr.mxu0 0.0
  %3181 = vmatpush1.msra.mxu0 0.0
  %3182 = vmatprep.subr.mxu0 0.0
  %3183 = vmatpush1.msra.mxu0 0.0
  %3184 = vmatprep.subr.mxu0 0.0
  %3185 = vmatpush1.msra.mxu0 0.0
  %3186 = vmatprep.subr.mxu0 0.0
  %3187 = vmatpush1.msra.mxu0 0.0
  %3188 = vmatprep.subr.mxu0 0.0
  %3189 = vmatpush1.msra.mxu0 0.0
  %3190 = vmatprep.subr.mxu0 0.0
  %3191 = vmatpush1.msra.mxu0 0.0
  %3192 = vmatprep.subr.mxu0 0.0
  %3193 = vmatpush1.msra.mxu0 0.0
  %3194 = vmatprep.subr.mxu0 0.0
  %3195 = vmatpush1.msra.mxu0 0.0
  %3196 = vmatprep.subr.mxu0 0.0
  %3197 = vmatpush1.msra.mxu0 0.0
  %3198 = vmatprep.subr.mxu0 0.0
  %3199 = vmatpush1.msra.mxu0 0.0
  %3200 = vmatprep.subr.mxu0 0.0
  %3201 = vmatpush1.msra.mxu0 0.0
  %3202 = vmatprep.subr.mxu0 0.0
  %3203 = vmatpush1.msra.mxu0 0.0
  %3204 = vmatprep.subr.mxu0 0.0
  %3205 = vmatpush1.msra.mxu0 0.0
  %3206 = vmatprep.subr.mxu0 0.0
  %3207 = vmatpush1.msra.mxu0 0.0
  %3208 = vmatprep.subr.mxu0 0.0
  %3209 = vmatpush1.msra.mxu0 0.0
  %3210 = vmatprep.subr.mxu0 0.0
  %3211 = vmatpush1.msra.mxu0 0.0
  %3212 = vmatprep.subr.mxu0 0.0
  %3213 = vmatpush1.msra.mxu0 0.0
  %3214 = vmatprep.subr.mxu0 0.0
  %3215 = vmatpush1.msra.mxu0 0.0
  %3216 = vmatprep.subr.mxu0 0.0
  %3217 = vmatpush1.msra.mxu0 0.0
  %3218 = vmatprep.subr.mxu0 0.0
  %3219 = vmatpush1.msra.mxu0 0.0
  %3220 = vmatprep.subr.mxu0 0.0
  %3221 = vmatpush1.msra.mxu0 0.0
  %3222 = vmatprep.subr.mxu0 0.0
  %3223 = vmatpush1.msra.mxu0 0.0
  %3224 = vmatprep.subr.mxu0 0.0
  %3225 = vmatpush1.msra.mxu0 0.0
  %3226 = vmatprep.subr.mxu0 0.0
  %3227 = vmatpush1.msra.mxu0 0.0
  %3228 = vmatprep.subr.mxu0 0.0
  %3229 = vmatpush1.msra.mxu0 0.0
  %3230 = vmatprep.subr.mxu0 0.0
  %3231 = vmatpush1.msra.mxu0 0.0
  %3232 = vmatprep.subr.mxu0 0.0
  %3233 = vmatpush1.msra.mxu0 0.0
  %3234 = vmatprep.subr.mxu0 0.0
  %3235 = vmatpush1.msra.mxu0 0.0
  %3236 = vmatprep.subr.mxu0 0.0
  %3237 = vmatpush1.msra.mxu0 0.0
  %3238 = vmatprep.mubr.f32.mxu0 0.0
  %3239 = vmatmul.mubr.f32.gmra.mrb[0].mxu0 %v557
  %v3240 = vpop.f32.mrb[0].mxu0
  %v3241 = vadd.f32 0.0, %v3240
  %v3242 = vpop.f32.mrb[0].mxu0
  %3243 = vdwg.mxu0
  %3245 = vrot.lane.b32.xlu0 %v3241, 64
  %v3246 = vpop.permute.xlu0 %3245
  %v3248 = vadd.f32 %v230, %v3246
  %v3249 = vtanh.pop %v3248
  %v3250 = vmul.f32 %v3249, %v645
  %3252 = vrot.lane.b32.xlu0 %v3250, 64
  %v3253 = vpop.permute.xlu0 %3252
  %v3255 = vsel %vm420, %v3253, 0.0
  %3256 = vadd.xlane.f32.xlu0 %v3255
  %v3257 = vpop.xlane.xlu0 %3256
  %v3258 = vmul.f32 %v3257, 1.442695
  %v3259 = vpow.pop %v3258
  %v3260 = vmul.f32 %v3259, %v230
  %3261 = vmatprep.subr.mxu0 0.0
  %3262 = vmatpush1.msra.mxu0 %v3260
  %3263 = vmatprep.subr.mxu0 0.0
  %3264 = vmatpush1.msra.mxu0 0.0
  %3265 = vmatprep.subr.mxu0 0.0
  %3266 = vmatpush1.msra.mxu0 0.0
  %3267 = vmatprep.subr.mxu0 0.0
  %3268 = vmatpush1.msra.mxu0 0.0
  %3269 = vmatprep.subr.mxu0 0.0
  %3270 = vmatpush1.msra.mxu0 0.0
  %3271 = vmatprep.subr.mxu0 0.0
  %3272 = vmatpush1.msra.mxu0 0.0
  %3273 = vmatprep.subr.mxu0 0.0
  %3274 = vmatpush1.msra.mxu0 0.0
  %3275 = vmatprep.subr.mxu0 0.0
  %3276 = vmatpush1.msra.mxu0 0.0
  %3277 = vmatprep.subr.mxu0 0.0
  %3278 = vmatpush1.msra.mxu0 0.0
  %3279 = vmatprep.subr.mxu0 0.0
  %3280 = vmatpush1.msra.mxu0 0.0
  %3281 = vmatprep.subr.mxu0 0.0
  %3282 = vmatpush1.msra.mxu0 0.0
  %3283 = vmatprep.subr.mxu0 0.0
  %3284 = vmatpush1.msra.mxu0 0.0
  %3285 = vmatprep.subr.mxu0 0.0
  %3286 = vmatpush1.msra.mxu0 0.0
  %3287 = vmatprep.subr.mxu0 0.0
  %3288 = vmatpush1.msra.mxu0 0.0
  %3289 = vmatprep.subr.mxu0 0.0
  %3290 = vmatpush1.msra.mxu0 0.0
  %3291 = vmatprep.subr.mxu0 0.0
  %3292 = vmatpush1.msra.mxu0 0.0
  %3293 = vmatprep.subr.mxu0 0.0
  %3294 = vmatpush1.msra.mxu0 0.0
  %3295 = vmatprep.subr.mxu0 0.0
  %3296 = vmatpush1.msra.mxu0 0.0
  %3297 = vmatprep.subr.mxu0 0.0
  %3298 = vmatpush1.msra.mxu0 0.0
  %3299 = vmatprep.subr.mxu0 0.0
  %3300 = vmatpush1.msra.mxu0 0.0
  %3301 = vmatprep.subr.mxu0 0.0
  %3302 = vmatpush1.msra.mxu0 0.0
  %3303 = vmatprep.subr.mxu0 0.0
  %3304 = vmatpush1.msra.mxu0 0.0
  %3305 = vmatprep.subr.mxu0 0.0
  %3306 = vmatpush1.msra.mxu0 0.0
  %3307 = vmatprep.subr.mxu0 0.0
  %3308 = vmatpush1.msra.mxu0 0.0
  %3309 = vmatprep.subr.mxu0 0.0
  %3310 = vmatpush1.msra.mxu0 0.0
  %3311 = vmatprep.subr.mxu0 0.0
  %3312 = vmatpush1.msra.mxu0 0.0
  %3313 = vmatprep.subr.mxu0 0.0
  %3314 = vmatpush1.msra.mxu0 0.0
  %3315 = vmatprep.subr.mxu0 0.0
  %3316 = vmatpush1.msra.mxu0 0.0
  %3317 = vmatprep.subr.mxu0 0.0
  %3318 = vmatpush1.msra.mxu0 0.0
  %3319 = vmatprep.subr.mxu0 0.0
  %3320 = vmatpush1.msra.mxu0 0.0
  %3321 = vmatprep.subr.mxu0 0.0
  %3322 = vmatpush1.msra.mxu0 0.0
  %3323 = vmatprep.subr.mxu0 0.0
  %3324 = vmatpush1.msra.mxu0 0.0
  %3325 = vmatprep.mubr.f32.mxu0 0.0
  %3326 = vmatmul.mubr.f32.gmra.mrb[0].mxu0 %v237
  %v3327 = vpop.f32.mrb[0].mxu0
  %v3328 = vadd.f32 0.0, %v3327
  %v3329 = vpop.f32.mrb[0].mxu0
  %3330 = vdwg.mxu0
  %v3331 = vrcp.pop %v3328
  %3333 = vset.pattern.permute.xlu0 96
  %3334 = vperm.xlu0 %3333, %v3331
  %v3335 = vpop.permute.xlu0 %3334
  %v3337 = vmul.f32 %v3328, %v3335
  %v3338 = vpack.c.bf16 %v3337, %v3337
  %v3340 = vsel %vm350, %v3338, 0
  %3342 = vmatprep.subr.bf16.mxu0 0
  %3343 = vmatpush1.bf16.msra.mxu0 %v752
  %3344 = vmatprep.subr.bf16.mxu0 0
  %3345 = vmatpush1.bf16.msra.mxu0 %v753
  %3346 = vmatprep.subr.bf16.mxu0 0
  %3347 = vmatpush1.bf16.msra.mxu0 %v754
  %3348 = vmatprep.subr.bf16.mxu0 0
  %3349 = vmatpush1.bf16.msra.mxu0 %v755
  %3350 = vmatprep.subr.bf16.mxu0 0
  %3351 = vmatpush1.bf16.msra.mxu0 0
  %3352 = vmatprep.subr.bf16.mxu0 0
  %3353 = vmatpush1.bf16.msra.mxu0 0
  %3354 = vmatprep.subr.bf16.mxu0 0
  %3355 = vmatpush1.bf16.msra.mxu0 0
  %3356 = vmatprep.subr.bf16.mxu0 0
  %3357 = vmatpush1.bf16.msra.mxu0 0
  %3358 = vmatprep.subr.bf16.mxu0 0
  %3359 = vmatpush1.bf16.msra.mxu0 0
  %3360 = vmatprep.subr.bf16.mxu0 0
  %3361 = vmatpush1.bf16.msra.mxu0 0
  %3362 = vmatprep.subr.bf16.mxu0 0
  %3363 = vmatpush1.bf16.msra.mxu0 0
  %3364 = vmatprep.subr.bf16.mxu0 0
  %3365 = vmatpush1.bf16.msra.mxu0 0
  %3366 = vmatprep.subr.bf16.mxu0 0
  %3367 = vmatpush1.bf16.msra.mxu0 0
  %3368 = vmatprep.subr.bf16.mxu0 0
  %3369 = vmatpush1.bf16.msra.mxu0 0
  %3370 = vmatprep.subr.bf16.mxu0 0
  %3371 = vmatpush1.bf16.msra.mxu0 0
  %3372 = vmatprep.subr.bf16.mxu0 0
  %3373 = vmatpush1.bf16.msra.mxu0 0
  %3374 = vmatprep.mubr.bf16.mxu0 0
  %3375 = vmatmul.mubr.bf16.gmra.mrb[0].mxu0 %v3340
  %v3376 = vpop.f32.mrb[0].mxu0
  %v3377 = vadd.f32 0.0, %v3376
  %v3378 = vpop.f32.mrb[0].mxu0
  %v3379 = vpop.f32.mrb[0].mxu0
  %v3380 = vpop.f32.mrb[0].mxu0
  %3381 = vdwg.mxu0
  %v3383 = vrot.slane %v3377, 2
  %v3385 = vadd.f32 %v462, %v3383
  %v3386 = vpack.c.bf16 %v3094, %v3094
  %v3388 = vrot.slane %v3386, 2
  %3389 = vrot.lane.b32.xlu0 %v3388, 64
  %v3390 = vpop.permute.xlu0 %3389
  %v3392 = vsel %vm420, %v3390, 0
  %3394 = vmatprep.subr.bf16.mxu0 0
  %3395 = vmatpush1.bf16.msra.mxu0 %v813
  %3396 = vmatprep.subr.bf16.mxu0 0
  %3397 = vmatpush1.bf16.msra.mxu0 %v814
  %3398 = vmatprep.subr.bf16.mxu0 0
  %3399 = vmatpush1.bf16.msra.mxu0 0
  %3400 = vmatprep.subr.bf16.mxu0 0
  %3401 = vmatpush1.bf16.msra.mxu0 0
  %3402 = vmatprep.subr.bf16.mxu0 0
  %3403 = vmatpush1.bf16.msra.mxu0 0
  %3404 = vmatprep.subr.bf16.mxu0 0
  %3405 = vmatpush1.bf16.msra.mxu0 0
  %3406 = vmatprep.subr.bf16.mxu0 0
  %3407 = vmatpush1.bf16.msra.mxu0 0
  %3408 = vmatprep.subr.bf16.mxu0 0
  %3409 = vmatpush1.bf16.msra.mxu0 0
  %3410 = vmatprep.subr.bf16.mxu0 0
  %3411 = vmatpush1.bf16.msra.mxu0 0
  %3412 = vmatprep.subr.bf16.mxu0 0
  %3413 = vmatpush1.bf16.msra.mxu0 0
  %3414 = vmatprep.subr.bf16.mxu0 0
  %3415 = vmatpush1.bf16.msra.mxu0 0
  %3416 = vmatprep.subr.bf16.mxu0 0
  %3417 = vmatpush1.bf16.msra.mxu0 0
  %3418 = vmatprep.subr.bf16.mxu0 0
  %3419 = vmatpush1.bf16.msra.mxu0 0
  %3420 = vmatprep.subr.bf16.mxu0 0
  %3421 = vmatpush1.bf16.msra.mxu0 0
  %3422 = vmatprep.subr.bf16.mxu0 0
  %3423 = vmatpush1.bf16.msra.mxu0 0
  %3424 = vmatprep.subr.bf16.mxu0 0
  %3425 = vmatpush1.bf16.msra.mxu0 0
  %3426 = vmatprep.mubr.bf16.mxu0 0
  %3427 = vmatmul.mubr.bf16.gmra.mrb[0].mxu0 %v3392
  %v3428 = vpop.f32.mrb[0].mxu0
  %v3429 = vadd.f32 0.0, %v3428
  %v3430 = vpop.f32.mrb[0].mxu0
  %v3431 = vpop.f32.mrb[0].mxu0
  %v3432 = vpop.f32.mrb[0].mxu0
  %3433 = vdwg.mxu0
  %v3435 = vrot.slane %v3429, 2
  %v3437 = vadd.f32 %v3385, %v3435
  %v3438 = vxor.u32 %v3437, 2147483648
  %v3439 = vmul.f32 %v3438, 1.442695
  %v3440 = vpow.pop %v3439
  %v3441 = vadd.f32 %v3440, 1.0
  %v3442 = vrcp.pop %v3441
  %v3443 = vmul.f32 1.0, %v3442
  %v3444 = vtanh.pop %v3437
  %v3446 = vrot.slane %v3088, 6
  %v3448 = vmul.f32 %v3443, %v3446
  %3450 = vrot.lane.b32.xlu0 %v3444, 32
  %v3451 = vpop.permute.xlu0 %3450
  %v3453 = vmul.f32 %v3443, %v3451
  %3455 = vrot.lane.b32.xlu0 %v3453, 32
  %v3456 = vpop.permute.xlu0 %3455
  %v3458 = vadd.f32 %v3448, %v3456
  %v3459 = vtanh.pop %v3458
  %3461 = vrot.lane.b32.xlu0 %v3459, 32
  %v3462 = vpop.permute.xlu0 %3461
  %v3464 = vmul.f32 %v3443, %v3462
  %v3465 = vsel %vm559, %v884, %v1252
  %vm3466 = vcmask 1043456
  %v3467 = vsel %vm3466, %v3465, %v1622
  %vm3468 = vcmask 1045504
  %v3469 = vsel %vm3468, %v3467, %v1992
  %v3470 = vsel %vm559, %v2356, %v2724
  %v3471 = vsel %vm3466, %v3470, %v3094
  %v3472 = vsel %vm3468, %v3471, %v3464
  %v3473 = vpack.c.bf16 %v3472, %v3469
  %v3474 = vld [vmem:[%s14] sm:$0xf]
  %v3475 = vld [vmem:[%s14 + $0x4] sm:$0xf]
  %v3476 = vld [vmem:[%s14 + $0x8] sm:$0xf]
  %v3477 = vld [vmem:[%s14 + $0xc] sm:$0xf]
  %v3478 = vld [vmem:[%s15] sm:$0x1]
  %v3480 = vlaneseq
  %v3481 = vshrl.u32 %v3480, 7
  %v3482 = vsub.s32 0, %v3481
  %v3483 = vrot.slane %v3478, %v3482
  %3486 = vrot.lane.b32.xlu0 %v3473, 64
  %v3487 = vpop.permute.xlu0 %3486
  %v3492 = vunpack.c.l.b16 %v3474
  %v3493 = vunpack.c.l.b16 %v3475
  %v3494 = vunpack.c.l.b16 %v3476
  %v3495 = vunpack.c.l.b16 %v3477
  %v3496 = vpack.c.b16 %v3493, %v3492
  %v3497 = vpack.c.b16 %v3495, %v3494
  %v3501 = vsel %vm420, %v3487, 0
  %3503 = vmatprep.subr.bf16.mxu0 0
  %3504 = vmatpush1.bf16.msra.mxu0 %v3496
  %3505 = vmatprep.subr.bf16.mxu0 0
  %3506 = vmatpush1.bf16.msra.mxu0 %v3497
  %3507 = vmatprep.subr.bf16.mxu0 0
  %3508 = vmatpush1.bf16.msra.mxu0 0
  %3509 = vmatprep.subr.bf16.mxu0 0
  %3510 = vmatpush1.bf16.msra.mxu0 0
  %3511 = vmatprep.subr.bf16.mxu0 0
  %3512 = vmatpush1.bf16.msra.mxu0 0
  %3513 = vmatprep.subr.bf16.mxu0 0
  %3514 = vmatpush1.bf16.msra.mxu0 0
  %3515 = vmatprep.subr.bf16.mxu0 0
  %3516 = vmatpush1.bf16.msra.mxu0 0
  %3517 = vmatprep.subr.bf16.mxu0 0
  %3518 = vmatpush1.bf16.msra.mxu0 0
  %3519 = vmatprep.subr.bf16.mxu0 0
  %3520 = vmatpush1.bf16.msra.mxu0 0
  %3521 = vmatprep.subr.bf16.mxu0 0
  %3522 = vmatpush1.bf16.msra.mxu0 0
  %3523 = vmatprep.subr.bf16.mxu0 0
  %3524 = vmatpush1.bf16.msra.mxu0 0
  %3525 = vmatprep.subr.bf16.mxu0 0
  %3526 = vmatpush1.bf16.msra.mxu0 0
  %3527 = vmatprep.subr.bf16.mxu0 0
  %3528 = vmatpush1.bf16.msra.mxu0 0
  %3529 = vmatprep.subr.bf16.mxu0 0
  %3530 = vmatpush1.bf16.msra.mxu0 0
  %3531 = vmatprep.subr.bf16.mxu0 0
  %3532 = vmatpush1.bf16.msra.mxu0 0
  %3533 = vmatprep.subr.bf16.mxu0 0
  %3534 = vmatpush1.bf16.msra.mxu0 0
  %3535 = vmatprep.mubr.bf16.mxu0 0
  %3536 = vmatmul.mubr.bf16.gmra.mrb[0].mxu0 %v3501
  %v3537 = vpop.f32.mrb[0].mxu0
  %v3538 = vadd.f32 %v3483, %v3537
  %v3539 = vpop.f32.mrb[0].mxu0
  %v3540 = vpop.f32.mrb[0].mxu0
  %v3541 = vadd.f32 %v3483, %v3540
  %v3542 = vpop.f32.mrb[0].mxu0
  %3543 = vdwg.mxu0
  %3544 = vst [vmem:[%s16] sm:$0xff] %v3538
  %3545 = vst [vmem:[%s16 + $0x8] sm:$0xff] %v3541
  // Predicated region
  $region66: #{img2poem_forward.1} parent=0 // pred_check
    _
  $region67: #{img2poem_forward.1} parent=0 // pred_check_branch
    %3547 = sbr.rel (0) target = $region69
  $region68: #{img2poem_forward.1} parent=0 // pred_region
    _
  $region69: #{img2poem_forward.1} parent=0 // pred_fallthru
    _
  // Predicated region
  $region70: #{img2poem_forward.1} parent=0 // pred_check
    _
  $region71: #{img2poem_forward.1} parent=0 // pred_check_branch
    %3549 = sbr.rel (0) target = $region73
  $region72: #{img2poem_forward.1} parent=0 // pred_region
    _
  $region73: #{img2poem_forward.1} parent=0 // pred_fallthru
    _

</llo_original>
